<compile_context>
chip_gen: v6e
topology: v6e:2x2x1
jax: 0.10.0
libtpu: 0.0.40
codegen_flags: <defaults>
</compile_context>

<pallas_src>
import functools
import math

import jax
import jax.numpy as jnp
from jax.experimental import pallas as pl
from jax.experimental.pallas import tpu as pltpu


def _round_up(x, m):
    return ((x + m - 1) // m) * m


def vae_lane_layout(state_dim, action_dim, z_dim):
    """Shared lane layout for the weight packer, the wrapper and the kernel.

    Slabs are `width` lanes wide (width = round_up(S+A+3Z, 128)):
      [0, S)              state
      [S, S+A)            action                      (zoff = S + A)
      [zoff, zoff+Z)      mean  (z lands here for the decoder)
      [zoff+Z, zoff+2Z)   log_std -> std  (noise is positioned here)
      [zoff+2Z, zoff+3Z)  dead lanes used by the rotate trick (zero weight rows)
    """
    zoff = state_dim + action_dim
    width = _round_up(zoff + 3 * z_dim, 128)
    return zoff, width


# ---------------------------------------------------------------------------
# Kernel: one [TM, W] batch tile per grid step.  Six MXU dots, no lane slices.
# ---------------------------------------------------------------------------
def vae_kernel(xin_ref, noise_ref,
               ew1_ref, eb1_ref, ew2_ref, eb2_ref,
               whead_ref, bhead_ref,
               dw1_ref, db1_ref, dw2_ref, db2_ref,
               dw3_ref, db3_ref,
               out_ref, *, z_dim, zoff):
    f32 = jnp.float32
    bf16 = jnp.bfloat16

    xin = xin_ref[...]                       # bf16 [TM, W]  = [state | action | 0...]
    width = xin.shape[1]

    # --- encoder: Linear -> ReLU -> Linear -> ReLU (layer 1 fused to one dot) ---
    h1 = jnp.dot(xin, ew1_ref[...], preferred_element_type=f32) + eb1_ref[...]
    h1 = jnp.maximum(h1, 0.0)
    h2 = jnp.dot(h1.astype(bf16), ew2_ref[...], preferred_element_type=f32) + eb2_ref[...]
    h2 = jnp.maximum(h2, 0.0)

    # --- fused latent heads: mean @ [zoff, zoff+Z), log_std @ [zoff+Z, zoff+2Z) ---
    head = jnp.dot(h2.astype(bf16), whead_ref[...], preferred_element_type=f32) + bhead_ref[...]
    exp_head = jnp.exp(jnp.clip(head, -4.0, 15.0))   # std on its lanes; finite everywhere

    # --- reparameterization, fully lane-dense (no sub-128 slices) ---
    # noise_ref carries N(0,1) only on the log_std lanes -> p = std * noise there, 0 elsewhere.
    p = exp_head * noise_ref[...]
    # Rotate std*noise onto the mean lanes.  Using both +Z and W-Z makes this independent
    # of the rotate sign convention: one copy lands on the mean lanes, the other on dead
    # lanes whose dw1 rows are zero, so the decoder matmul sees exactly z = mean + std*noise.
    sn = pltpu.roll(p, width - z_dim, axis=1) + pltpu.roll(p, z_dim, axis=1)
    z_slab = head + sn                        # mean lanes hold z; state/action lanes stay 0

    # --- decoder: one K=W dot (state rows + z rows of dw1), then Linear/ReLU/Linear/Tanh ---
    dec_in = xin + z_slab.astype(bf16)        # [state | action | z | junk]; junk rows are zero in dw1
    d1 = jnp.dot(dec_in, dw1_ref[...], preferred_element_type=f32) + db1_ref[...]
    d1 = jnp.maximum(d1, 0.0)
    d2 = jnp.dot(d1.astype(bf16), dw2_ref[...], preferred_element_type=f32) + db2_ref[...]
    d2 = jnp.maximum(d2, 0.0)
    dec = jnp.tanh(jnp.dot(d2.astype(bf16), dw3_ref[...], preferred_element_type=f32)
                   + db3_ref[...])            # nonzero only on lanes [0, A)

    # Pack [dec | 0 | mean | std | 0] with a single VPU select, one unmasked full-width store.
    col = jax.lax.broadcasted_iota(jnp.int32, head.shape, 1)
    in_std = (col >= zoff + z_dim) & (col < zoff + 2 * z_dim)
    out_ref[...] = dec + jnp.where(in_std, exp_head, head)


# ---------------------------------------------------------------------------
# Wrapper: batch grid, weights pinned (single-buffered) via constant index_map.
# ---------------------------------------------------------------------------
def vae_forward(params, state, action, noise, *, tm=128, vmem_limit_bytes=None):
    """Run the VAE forward pass.  Returns (decoder_output, mean, std).

    Tile-size / VMEM guidance for the full-size model (hidden 700 -> pad to 768):
      * v7x : tm = 256-512, vmem_limit_bytes ~ 40-48 MiB (only 64 MiB physical VMEM).
      * v6e : tm = 512-1024, vmem_limit_bytes ~ 64 MiB (128 MiB physical VMEM).
      * v5e : always pass vmem_limit_bytes (32-64 MiB); the default scoped limit is 16 MiB.
      * Small B: shrink tm so each TensorCore still gets >= 2 grid steps (demo uses 64).
    """
    B, S = state.shape
    A = action.shape[1]
    Z = noise.shape[1]
    zoff, W = vae_lane_layout(S, A, Z)
    H1 = params["ew1"].shape[1]
    assert params["whead"].shape[1] == W, "params were packed for a different lane layout"

    b_pad = _round_up(B, tm)

    # Lane-positioned input slabs; batch padding is folded into the slab build
    # (no separate jnp.pad ops on the dispatch path).  State/action ship as bf16.
    xin = jnp.zeros((b_pad, W), jnp.bfloat16)
    xin = xin.at[:B, :S].set(state.astype(jnp.bfloat16))
    xin = xin.at[:B, S:S + A].set(action.astype(jnp.bfloat16))
    nz = jnp.zeros((b_pad, W), jnp.float32)
    nz = nz.at[:B, zoff + Z:zoff + 2 * Z].set(noise)

    weight_names = ["ew1", "eb1", "ew2", "eb2", "whead", "bhead",
                    "dw1", "db1", "dw2", "db2", "dw3", "db3"]
    weights = [params[n] for n in weight_names]

    grid = (b_pad // tm,)
    kernel = functools.partial(vae_kernel, z_dim=Z, zoff=zoff)

    # Advisory cost estimate (per padded row: 6 matmuls, exp + tanh over W lanes).
    H2 = params["ew2"].shape[1]
    flops_per_row = 4 * (W * H1 + H1 * H2 + H2 * W)
    param_bytes = sum(int(w.size) * w.dtype.itemsize for w in weights)
    io_bytes = b_pad * W * (2 + 4 + 4)     # bf16 xin + f32 noise + f32 out
    cost = pl.CostEstimate(flops=int(b_pad * flops_per_row),
                           transcendentals=int(2 * b_pad * W),
                           bytes_accessed=int(param_bytes + io_bytes))

    compiler_params = pltpu.CompilerParams(
        dimension_semantics=("parallel",),   # shard batch tiles across TCs on v7x
        vmem_limit_bytes=vmem_limit_bytes,
    )

    def build_call(single_buffer_weights):
        def wspec(w):
            # Constant block index -> weight is VMEM-resident across all grid steps.
            if single_buffer_weights:
                # Don't pay for double-buffering something that never changes block index.
                return pl.BlockSpec(w.shape, lambda i: (0, 0), pipeline_mode=pl.Buffered(1))
            return pl.BlockSpec(w.shape, lambda i: (0, 0))

        in_specs = ([pl.BlockSpec((tm, W), lambda i: (i, 0)),     # xin
                     pl.BlockSpec((tm, W), lambda i: (i, 0))]     # noise slab
                    + [wspec(w) for w in weights])
        out_specs = pl.BlockSpec((tm, W), lambda i: (i, 0))
        return pl.pallas_call(
            kernel,
            out_shape=jax.ShapeDtypeStruct((b_pad, W), jnp.float32),
            grid=grid,
            in_specs=in_specs,
            out_specs=out_specs,
            compiler_params=compiler_params,
            cost_estimate=cost,
        )

    try:
        slab = jax.block_until_ready(build_call(True)(xin, nz, *weights))
    except Exception:
        # Fallback for jax versions that reject BlockSpec(pipeline_mode=pl.Buffered(1)):
        # identical semantics, default (double-buffered) weight specs.
        slab = build_call(False)(xin, nz, *weights)

    dec = slab[:B, :A]
    mean = slab[:B, zoff:zoff + Z]
    std = slab[:B, zoff + Z:zoff + 2 * Z]
    return dec, mean, std


# ---------------------------------------------------------------------------
# Parameter init (PyTorch nn.Linear-style) + packing into the kernel lane layout.
# ---------------------------------------------------------------------------
def _init_linear(key, fan_in, fan_out):
    kw, kb = jax.random.split(key)
    bound = 1.0 / math.sqrt(fan_in)
    w = jax.random.uniform(kw, (fan_in, fan_out), jnp.float32, -bound, bound)
    b = jax.random.uniform(kb, (1, fan_out), jnp.float32, -bound, bound)
    return w, b


def init_vae_params(key, state_dim, action_dim, z_dim, hidden_dims):
    h1, h2 = hidden_dims
    # Pad hidden dims to a multiple of 128 (use 256 multiples on v6e/v7x, e.g. 700 -> 768).
    assert h1 % 128 == 0 and h2 % 128 == 0, "pad hidden dims to a multiple of 128"
    zoff, W = vae_lane_layout(state_dim, action_dim, z_dim)
    keys = jax.random.split(key, 7)

    ew1, eb1 = _init_linear(keys[0], state_dim + action_dim, h1)
    ew2, eb2 = _init_linear(keys[1], h1, h2)
    mw, mb = _init_linear(keys[2], h2, z_dim)
    lw, lb = _init_linear(keys[3], h2, z_dim)
    dw1, db1 = _init_linear(keys[4], state_dim + z_dim, h2)
    dw2, db2 = _init_linear(keys[5], h2, h1)
    dw3, db3 = _init_linear(keys[6], h1, action_dim)

    bf16 = jnp.bfloat16

    # Encoder layer 1: single (W, H1) weight; rows [0, S+A) hold the concat weight.
    ew1s = jnp.zeros((W, h1), jnp.float32).at[:state_dim + action_dim].set(ew1)

    # Fused lane-positioned heads: cols [zoff, zoff+Z) = mean, [zoff+Z, zoff+2Z) = log_std.
    whead = jnp.zeros((h2, W), jnp.float32)
    whead = whead.at[:, zoff:zoff + z_dim].set(mw)
    whead = whead.at[:, zoff + z_dim:zoff + 2 * z_dim].set(lw)
    bhead = jnp.zeros((1, W), jnp.float32)
    bhead = bhead.at[:, zoff:zoff + z_dim].set(mb)
    bhead = bhead.at[:, zoff + z_dim:zoff + 2 * z_dim].set(lb)

    # Decoder layer 1: single (W, H2) weight; rows [0,S) = state part, [zoff, zoff+Z) = z part.
    dw1s = jnp.zeros((W, h2), jnp.float32)
    dw1s = dw1s.at[:state_dim].set(dw1[:state_dim])
    dw1s = dw1s.at[zoff:zoff + z_dim].set(dw1[state_dim:])

    # Final decoder layer pre-positioned in cols [0, A) of the output slab.
    dw3s = jnp.zeros((h1, W), jnp.float32).at[:, :action_dim].set(dw3)
    db3s = jnp.zeros((1, W), jnp.float32).at[:, :action_dim].set(db3)

    kernel_params = dict(
        ew1=ew1s.astype(bf16), eb1=eb1,
        ew2=ew2.astype(bf16), eb2=eb2,
        whead=whead.astype(bf16), bhead=bhead,
        dw1=dw1s.astype(bf16), db1=db1,
        dw2=dw2.astype(bf16), db2=db2,
        dw3=dw3s.astype(bf16), db3=db3s,
    )
    ref_params = dict(ew1=ew1, eb1=eb1, ew2=ew2, eb2=eb2, mw=mw, mb=mb, lw=lw, lb=lb,
                      dw1=dw1, db1=db1, dw2=dw2, db2=db2, dw3=dw3, db3=db3)
    return kernel_params, ref_params


# ---------------------------------------------------------------------------
# Pure-JAX reference (same bf16-at-dot numerics as the kernel).
# ---------------------------------------------------------------------------
def vae_ref(p, state, action, noise):
    bf16 = jnp.bfloat16
    f32 = jnp.float32

    def lin(x, w, b):
        return jnp.dot(x.astype(bf16), w.astype(bf16), preferred_element_type=f32) + b

    x = jnp.concatenate([state, action], axis=1)
    h = jax.nn.relu(lin(x, p["ew1"], p["eb1"]))
    h = jax.nn.relu(lin(h, p["ew2"], p["eb2"]))
    mean = lin(h, p["mw"], p["mb"])
    log_std = jnp.clip(lin(h, p["lw"], p["lb"]), -4.0, 15.0)
    std = jnp.exp(log_std)
    z = mean + std * noise
    d = jnp.concatenate([state, z], axis=1)
    d = jax.nn.relu(lin(d, p["dw1"], p["db1"]))
    d = jax.nn.relu(lin(d, p["dw2"], p["db2"]))
    out = jnp.tanh(lin(d, p["dw3"], p["db3"]))
    return out, mean, std


if __name__ == "__main__":
    # Small shapes consistent with the module (hidden stand-in for (700, 700)).
    B, STATE_DIM, ACTION_DIM, Z_DIM = 200, 16, 8, 8
    HIDDEN_DIMS = (128, 128)
    TM = 64   # small-B demo: B=200 -> 4 grid steps, >= 2 per TensorCore on v7x

    root = jax.random.PRNGKey(0)
    k_params, k_state, k_action, k_noise = jax.random.split(root, 4)

    kernel_params, ref_params = init_vae_params(
        k_params, STATE_DIM, ACTION_DIM, Z_DIM, HIDDEN_DIMS)
    state = jax.random.normal(k_state, (B, STATE_DIM), jnp.float32)
    action = jax.random.normal(k_action, (B, ACTION_DIM), jnp.float32)
    # torch's randn_like(std) -> deterministic external noise here.
    noise = jax.random.normal(k_noise, (B, Z_DIM), jnp.float32)

    dec, mean, std = jax.block_until_ready(
        vae_forward(kernel_params, state, action, noise, tm=TM))

    ref_dec, ref_mean, ref_std = vae_ref(ref_params, state, action, noise)

    assert dec.shape == (B, ACTION_DIM)
    assert mean.shape == (B, Z_DIM) and std.shape == (B, Z_DIM)
    assert jnp.allclose(dec, ref_dec, atol=3e-3, rtol=3e-3)
    assert jnp.allclose(mean, ref_mean, atol=3e-3, rtol=3e-3)
    assert jnp.allclose(std, ref_std, atol=3e-3, rtol=3e-3)

    print("KERNEL_OK")
</pallas_src>

<mosaic_0001>
module attributes {stable_mosaic.version = 11 : i64} {
  func.func @vae_kernel(%arg0: i32, %arg1: memref<64x128xbf16, #tpu.memory_space<vmem>>, %arg2: memref<64x128xf32, #tpu.memory_space<vmem>>, %arg3: memref<128x128xbf16, #tpu.memory_space<vmem>>, %arg4: memref<1x128xf32, #tpu.memory_space<vmem>>, %arg5: memref<128x128xbf16, #tpu.memory_space<vmem>>, %arg6: memref<1x128xf32, #tpu.memory_space<vmem>>, %arg7: memref<128x128xbf16, #tpu.memory_space<vmem>>, %arg8: memref<1x128xf32, #tpu.memory_space<vmem>>, %arg9: memref<128x128xbf16, #tpu.memory_space<vmem>>, %arg10: memref<1x128xf32, #tpu.memory_space<vmem>>, %arg11: memref<128x128xbf16, #tpu.memory_space<vmem>>, %arg12: memref<1x128xf32, #tpu.memory_space<vmem>>, %arg13: memref<128x128xbf16, #tpu.memory_space<vmem>>, %arg14: memref<1x128xf32, #tpu.memory_space<vmem>>, %arg15: memref<64x128xf32, #tpu.memory_space<vmem>>) attributes {dimension_semantics = [#tpu.dimension_semantics<parallel>], iteration_bounds = array<i64: 4>, scalar_prefetch = 0 : i64, scratch_operands = 0 : i64, tpu.core_type = #tpu.core_type<tc>, window_params = [{transform_indices = @transform_0, window_bounds = array<i64: 64, 128>}, {transform_indices = @transform_1, window_bounds = array<i64: 64, 128>}, {pipeline_mode = #tpu.pipeline_mode<synchronous>, transform_indices = @transform_2, window_bounds = array<i64: 128, 128>}, {pipeline_mode = #tpu.pipeline_mode<synchronous>, transform_indices = @transform_3, window_bounds = array<i64: 1, 128>}, {pipeline_mode = #tpu.pipeline_mode<synchronous>, transform_indices = @transform_4, window_bounds = array<i64: 128, 128>}, {pipeline_mode = #tpu.pipeline_mode<synchronous>, transform_indices = @transform_5, window_bounds = array<i64: 1, 128>}, {pipeline_mode = #tpu.pipeline_mode<synchronous>, transform_indices = @transform_6, window_bounds = array<i64: 128, 128>}, {pipeline_mode = #tpu.pipeline_mode<synchronous>, transform_indices = @transform_7, window_bounds = array<i64: 1, 128>}, {pipeline_mode = #tpu.pipeline_mode<synchronous>, transform_indices = @transform_8, window_bounds = array<i64: 128, 128>}, {pipeline_mode = #tpu.pipeline_mode<synchronous>, transform_indices = @transform_9, window_bounds = array<i64: 1, 128>}, {pipeline_mode = #tpu.pipeline_mode<synchronous>, transform_indices = @transform_10, window_bounds = array<i64: 128, 128>}, {pipeline_mode = #tpu.pipeline_mode<synchronous>, transform_indices = @transform_11, window_bounds = array<i64: 1, 128>}, {pipeline_mode = #tpu.pipeline_mode<synchronous>, transform_indices = @transform_12, window_bounds = array<i64: 128, 128>}, {pipeline_mode = #tpu.pipeline_mode<synchronous>, transform_indices = @transform_13, window_bounds = array<i64: 1, 128>}, {transform_indices = @transform_14, window_bounds = array<i64: 64, 128>}]} {
    %c0 = arith.constant 0 : index
    %c0_0 = arith.constant 0 : index
    %0 = vector.load %arg1[%c0, %c0_0] : memref<64x128xbf16, #tpu.memory_space<vmem>>, vector<64x128xbf16>
    %c0_1 = arith.constant 0 : index
    %c0_2 = arith.constant 0 : index
    %1 = vector.load %arg3[%c0_1, %c0_2] : memref<128x128xbf16, #tpu.memory_space<vmem>>, vector<128x128xbf16>
    %cst = arith.constant dense<0.000000e+00> : vector<64x128xf32>
    %2 = tpu.matmul %0, %1, %cst {dimension_numbers = #tpu.dot_dimension_numbers<[1], [0], [0], [1], [0, 0, 1, 1], [], []>} : vector<64x128xbf16>, vector<128x128xbf16>, vector<64x128xf32> -> vector<64x128xf32>
    %c0_3 = arith.constant 0 : index
    %c0_4 = arith.constant 0 : index
    %3 = vector.load %arg4[%c0_3, %c0_4] : memref<1x128xf32, #tpu.memory_space<vmem>>, vector<1x128xf32>
    %4 = vector.broadcast %3 : vector<1x128xf32> to vector<64x128xf32>
    %5 = arith.addf %2, %4 : vector<64x128xf32>
    %cst_5 = arith.constant 0.000000e+00 : f32
    %6 = vector.broadcast %cst_5 : f32 to vector<64x128xf32>
    %7 = arith.maximumf %5, %6 : vector<64x128xf32>
    %8 = arith.truncf %7 : vector<64x128xf32> to vector<64x128xbf16>
    %c0_6 = arith.constant 0 : index
    %c0_7 = arith.constant 0 : index
    %9 = vector.load %arg5[%c0_6, %c0_7] : memref<128x128xbf16, #tpu.memory_space<vmem>>, vector<128x128xbf16>
    %cst_8 = arith.constant dense<0.000000e+00> : vector<64x128xf32>
    %10 = tpu.matmul %8, %9, %cst_8 {dimension_numbers = #tpu.dot_dimension_numbers<[1], [0], [0], [1], [0, 0, 1, 1], [], []>} : vector<64x128xbf16>, vector<128x128xbf16>, vector<64x128xf32> -> vector<64x128xf32>
    %c0_9 = arith.constant 0 : index
    %c0_10 = arith.constant 0 : index
    %11 = vector.load %arg6[%c0_9, %c0_10] : memref<1x128xf32, #tpu.memory_space<vmem>>, vector<1x128xf32>
    %12 = vector.broadcast %11 : vector<1x128xf32> to vector<64x128xf32>
    %13 = arith.addf %10, %12 : vector<64x128xf32>
    %cst_11 = arith.constant 0.000000e+00 : f32
    %14 = vector.broadcast %cst_11 : f32 to vector<64x128xf32>
    %15 = arith.maximumf %13, %14 : vector<64x128xf32>
    %16 = arith.truncf %15 : vector<64x128xf32> to vector<64x128xbf16>
    %c0_12 = arith.constant 0 : index
    %c0_13 = arith.constant 0 : index
    %17 = vector.load %arg7[%c0_12, %c0_13] : memref<128x128xbf16, #tpu.memory_space<vmem>>, vector<128x128xbf16>
    %cst_14 = arith.constant dense<0.000000e+00> : vector<64x128xf32>
    %18 = tpu.matmul %16, %17, %cst_14 {dimension_numbers = #tpu.dot_dimension_numbers<[1], [0], [0], [1], [0, 0, 1, 1], [], []>} : vector<64x128xbf16>, vector<128x128xbf16>, vector<64x128xf32> -> vector<64x128xf32>
    %c0_15 = arith.constant 0 : index
    %c0_16 = arith.constant 0 : index
    %19 = vector.load %arg8[%c0_15, %c0_16] : memref<1x128xf32, #tpu.memory_space<vmem>>, vector<1x128xf32>
    %20 = vector.broadcast %19 : vector<1x128xf32> to vector<64x128xf32>
    %21 = arith.addf %18, %20 : vector<64x128xf32>
    %cst_17 = arith.constant -4.000000e+00 : f32
    %cst_18 = arith.constant 1.500000e+01 : f32
    %22 = vector.broadcast %cst_17 : f32 to vector<64x128xf32>
    %23 = arith.maximumf %22, %21 : vector<64x128xf32>
    %24 = vector.broadcast %cst_18 : f32 to vector<64x128xf32>
    %25 = arith.minimumf %24, %23 : vector<64x128xf32>
    %26 = math.exp %25 : vector<64x128xf32>
    %c0_19 = arith.constant 0 : index
    %c0_20 = arith.constant 0 : index
    %27 = vector.load %arg2[%c0_19, %c0_20] : memref<64x128xf32, #tpu.memory_space<vmem>>, vector<64x128xf32>
    %28 = arith.mulf %26, %27 : vector<64x128xf32>
    %c120_i32 = arith.constant 120 : i32
    %29 = tpu.dynamic_rotate %28 by %c120_i32 dim 1 : vector<64x128xf32>, i32 -> vector<64x128xf32>
    %c8_i32 = arith.constant 8 : i32
    %30 = tpu.dynamic_rotate %28 by %c8_i32 dim 1 : vector<64x128xf32>, i32 -> vector<64x128xf32>
    %31 = arith.addf %29, %30 : vector<64x128xf32>
    %32 = arith.addf %21, %31 : vector<64x128xf32>
    %33 = arith.truncf %32 : vector<64x128xf32> to vector<64x128xbf16>
    %34 = arith.addf %0, %33 : vector<64x128xbf16>
    %c0_21 = arith.constant 0 : index
    %c0_22 = arith.constant 0 : index
    %35 = vector.load %arg9[%c0_21, %c0_22] : memref<128x128xbf16, #tpu.memory_space<vmem>>, vector<128x128xbf16>
    %cst_23 = arith.constant dense<0.000000e+00> : vector<64x128xf32>
    %36 = tpu.matmul %34, %35, %cst_23 {dimension_numbers = #tpu.dot_dimension_numbers<[1], [0], [0], [1], [0, 0, 1, 1], [], []>} : vector<64x128xbf16>, vector<128x128xbf16>, vector<64x128xf32> -> vector<64x128xf32>
    %c0_24 = arith.constant 0 : index
    %c0_25 = arith.constant 0 : index
    %37 = vector.load %arg10[%c0_24, %c0_25] : memref<1x128xf32, #tpu.memory_space<vmem>>, vector<1x128xf32>
    %38 = vector.broadcast %37 : vector<1x128xf32> to vector<64x128xf32>
    %39 = arith.addf %36, %38 : vector<64x128xf32>
    %cst_26 = arith.constant 0.000000e+00 : f32
    %40 = vector.broadcast %cst_26 : f32 to vector<64x128xf32>
    %41 = arith.maximumf %39, %40 : vector<64x128xf32>
    %42 = arith.truncf %41 : vector<64x128xf32> to vector<64x128xbf16>
    %c0_27 = arith.constant 0 : index
    %c0_28 = arith.constant 0 : index
    %43 = vector.load %arg11[%c0_27, %c0_28] : memref<128x128xbf16, #tpu.memory_space<vmem>>, vector<128x128xbf16>
    %cst_29 = arith.constant dense<0.000000e+00> : vector<64x128xf32>
    %44 = tpu.matmul %42, %43, %cst_29 {dimension_numbers = #tpu.dot_dimension_numbers<[1], [0], [0], [1], [0, 0, 1, 1], [], []>} : vector<64x128xbf16>, vector<128x128xbf16>, vector<64x128xf32> -> vector<64x128xf32>
    %c0_30 = arith.constant 0 : index
    %c0_31 = arith.constant 0 : index
    %45 = vector.load %arg12[%c0_30, %c0_31] : memref<1x128xf32, #tpu.memory_space<vmem>>, vector<1x128xf32>
    %46 = vector.broadcast %45 : vector<1x128xf32> to vector<64x128xf32>
    %47 = arith.addf %44, %46 : vector<64x128xf32>
    %cst_32 = arith.constant 0.000000e+00 : f32
    %48 = vector.broadcast %cst_32 : f32 to vector<64x128xf32>
    %49 = arith.maximumf %47, %48 : vector<64x128xf32>
    %50 = arith.truncf %49 : vector<64x128xf32> to vector<64x128xbf16>
    %c0_33 = arith.constant 0 : index
    %c0_34 = arith.constant 0 : index
    %51 = vector.load %arg13[%c0_33, %c0_34] : memref<128x128xbf16, #tpu.memory_space<vmem>>, vector<128x128xbf16>
    %cst_35 = arith.constant dense<0.000000e+00> : vector<64x128xf32>
    %52 = tpu.matmul %50, %51, %cst_35 {dimension_numbers = #tpu.dot_dimension_numbers<[1], [0], [0], [1], [0, 0, 1, 1], [], []>} : vector<64x128xbf16>, vector<128x128xbf16>, vector<64x128xf32> -> vector<64x128xf32>
    %c0_36 = arith.constant 0 : index
    %c0_37 = arith.constant 0 : index
    %53 = vector.load %arg14[%c0_36, %c0_37] : memref<1x128xf32, #tpu.memory_space<vmem>>, vector<1x128xf32>
    %54 = vector.broadcast %53 : vector<1x128xf32> to vector<64x128xf32>
    %55 = arith.addf %52, %54 : vector<64x128xf32>
    %56 = math.tanh %55 : vector<64x128xf32>
    %57 = tpu.iota {dimensions = array<i32: 1>} : vector<64x128xi32>
    %c32_i32 = arith.constant 32 : i32
    %58 = vector.broadcast %c32_i32 : i32 to vector<64x128xi32>
    %59 = arith.cmpi sge, %57, %58 : vector<64x128xi32>
    %c40_i32 = arith.constant 40 : i32
    %60 = vector.broadcast %c40_i32 : i32 to vector<64x128xi32>
    %61 = arith.cmpi slt, %57, %60 : vector<64x128xi32>
    %62 = arith.andi %59, %61 : vector<64x128xi1>
    %63 = arith.select %62, %26, %21 : vector<64x128xi1>, vector<64x128xf32>
    %64 = arith.addf %56, %63 : vector<64x128xf32>
    %c0_38 = arith.constant 0 : index
    %c0_39 = arith.constant 0 : index
    %65 = vector.load %arg15[%c0_38, %c0_39] : memref<64x128xf32, #tpu.memory_space<vmem>>, vector<64x128xf32>
    tpu.vector_store %arg15[%c0_38, %c0_39], %64 {strides = array<i32>} : memref<64x128xf32, #tpu.memory_space<vmem>>, vector<64x128xf32>,
    return
  }
  func.func @transform_0(%arg0: i32) -> (i32, i32) {
    %c0_i32 = arith.constant 0 : i32
    %c0_i32_0 = arith.constant 0 : i32
    return %arg0, %c0_i32 : i32, i32
  }
  func.func @transform_1(%arg0: i32) -> (i32, i32) {
    %c0_i32 = arith.constant 0 : i32
    %c0_i32_0 = arith.constant 0 : i32
    return %arg0, %c0_i32 : i32, i32
  }
  func.func @transform_2(%arg0: i32) -> (i32, i32) {
    %c0_i32 = arith.constant 0 : i32
    %c0_i32_0 = arith.constant 0 : i32
    %c0_i32_1 = arith.constant 0 : i32
    return %c0_i32, %c0_i32_0 : i32, i32
  }
  func.func @transform_3(%arg0: i32) -> (i32, i32) {
    %c0_i32 = arith.constant 0 : i32
    %c0_i32_0 = arith.constant 0 : i32
    %c0_i32_1 = arith.constant 0 : i32
    return %c0_i32, %c0_i32_0 : i32, i32
  }
  func.func @transform_4(%arg0: i32) -> (i32, i32) {
    %c0_i32 = arith.constant 0 : i32
    %c0_i32_0 = arith.constant 0 : i32
    %c0_i32_1 = arith.constant 0 : i32
    return %c0_i32, %c0_i32_0 : i32, i32
  }
  func.func @transform_5(%arg0: i32) -> (i32, i32) {
    %c0_i32 = arith.constant 0 : i32
    %c0_i32_0 = arith.constant 0 : i32
    %c0_i32_1 = arith.constant 0 : i32
    return %c0_i32, %c0_i32_0 : i32, i32
  }
  func.func @transform_6(%arg0: i32) -> (i32, i32) {
    %c0_i32 = arith.constant 0 : i32
    %c0_i32_0 = arith.constant 0 : i32
    %c0_i32_1 = arith.constant 0 : i32
    return %c0_i32, %c0_i32_0 : i32, i32
  }
  func.func @transform_7(%arg0: i32) -> (i32, i32) {
    %c0_i32 = arith.constant 0 : i32
    %c0_i32_0 = arith.constant 0 : i32
    %c0_i32_1 = arith.constant 0 : i32
    return %c0_i32, %c0_i32_0 : i32, i32
  }
  func.func @transform_8(%arg0: i32) -> (i32, i32) {
    %c0_i32 = arith.constant 0 : i32
    %c0_i32_0 = arith.constant 0 : i32
    %c0_i32_1 = arith.constant 0 : i32
    return %c0_i32, %c0_i32_0 : i32, i32
  }
  func.func @transform_9(%arg0: i32) -> (i32, i32) {
    %c0_i32 = arith.constant 0 : i32
    %c0_i32_0 = arith.constant 0 : i32
    %c0_i32_1 = arith.constant 0 : i32
    return %c0_i32, %c0_i32_0 : i32, i32
  }
  func.func @transform_10(%arg0: i32) -> (i32, i32) {
    %c0_i32 = arith.constant 0 : i32
    %c0_i32_0 = arith.constant 0 : i32
    %c0_i32_1 = arith.constant 0 : i32
    return %c0_i32, %c0_i32_0 : i32, i32
  }
  func.func @transform_11(%arg0: i32) -> (i32, i32) {
    %c0_i32 = arith.constant 0 : i32
    %c0_i32_0 = arith.constant 0 : i32
    %c0_i32_1 = arith.constant 0 : i32
    return %c0_i32, %c0_i32_0 : i32, i32
  }
  func.func @transform_12(%arg0: i32) -> (i32, i32) {
    %c0_i32 = arith.constant 0 : i32
    %c0_i32_0 = arith.constant 0 : i32
    %c0_i32_1 = arith.constant 0 : i32
    return %c0_i32, %c0_i32_0 : i32, i32
  }
  func.func @transform_13(%arg0: i32) -> (i32, i32) {
    %c0_i32 = arith.constant 0 : i32
    %c0_i32_0 = arith.constant 0 : i32
    %c0_i32_1 = arith.constant 0 : i32
    return %c0_i32, %c0_i32_0 : i32, i32
  }
  func.func @transform_14(%arg0: i32) -> (i32, i32) {
    %c0_i32 = arith.constant 0 : i32
    %c0_i32_0 = arith.constant 0 : i32
    return %arg0, %c0_i32 : i32, i32
  }
}

module attributes {stable_mosaic.version = 11 : i64} {
  func.func @vae_kernel(%arg0: i32, %arg1: memref<64x128xbf16, #tpu.memory_space<vmem>>, %arg2: memref<64x128xf32, #tpu.memory_space<vmem>>, %arg3: memref<128x128xbf16, #tpu.memory_space<vmem>>, %arg4: memref<1x128xf32, #tpu.memory_space<vmem>>, %arg5: memref<128x128xbf16, #tpu.memory_space<vmem>>, %arg6: memref<1x128xf32, #tpu.memory_space<vmem>>, %arg7: memref<128x128xbf16, #tpu.memory_space<vmem>>, %arg8: memref<1x128xf32, #tpu.memory_space<vmem>>, %arg9: memref<128x128xbf16, #tpu.memory_space<vmem>>, %arg10: memref<1x128xf32, #tpu.memory_space<vmem>>, %arg11: memref<128x128xbf16, #tpu.memory_space<vmem>>, %arg12: memref<1x128xf32, #tpu.memory_space<vmem>>, %arg13: memref<128x128xbf16, #tpu.memory_space<vmem>>, %arg14: memref<1x128xf32, #tpu.memory_space<vmem>>, %arg15: memref<64x128xf32, #tpu.memory_space<vmem>>) attributes {dimension_semantics = [#tpu.dimension_semantics<parallel>], iteration_bounds = array<i64: 4>, scalar_prefetch = 0 : i64, scratch_operands = 0 : i64, tpu.core_type = #tpu.core_type<tc>, window_params = [{transform_indices = @transform_0, window_bounds = array<i64: 64, 128>}, {transform_indices = @transform_1, window_bounds = array<i64: 64, 128>}, {pipeline_mode = #tpu.pipeline_mode<synchronous>, transform_indices = @transform_2, window_bounds = array<i64: 128, 128>}, {pipeline_mode = #tpu.pipeline_mode<synchronous>, transform_indices = @transform_3, window_bounds = array<i64: 1, 128>}, {pipeline_mode = #tpu.pipeline_mode<synchronous>, transform_indices = @transform_4, window_bounds = array<i64: 128, 128>}, {pipeline_mode = #tpu.pipeline_mode<synchronous>, transform_indices = @transform_5, window_bounds = array<i64: 1, 128>}, {pipeline_mode = #tpu.pipeline_mode<synchronous>, transform_indices = @transform_6, window_bounds = array<i64: 128, 128>}, {pipeline_mode = #tpu.pipeline_mode<synchronous>, transform_indices = @transform_7, window_bounds = array<i64: 1, 128>}, {pipeline_mode = #tpu.pipeline_mode<synchronous>, transform_indices = @transform_8, window_bounds = array<i64: 128, 128>}, {pipeline_mode = #tpu.pipeline_mode<synchronous>, transform_indices = @transform_9, window_bounds = array<i64: 1, 128>}, {pipeline_mode = #tpu.pipeline_mode<synchronous>, transform_indices = @transform_10, window_bounds = array<i64: 128, 128>}, {pipeline_mode = #tpu.pipeline_mode<synchronous>, transform_indices = @transform_11, window_bounds = array<i64: 1, 128>}, {pipeline_mode = #tpu.pipeline_mode<synchronous>, transform_indices = @transform_12, window_bounds = array<i64: 128, 128>}, {pipeline_mode = #tpu.pipeline_mode<synchronous>, transform_indices = @transform_13, window_bounds = array<i64: 1, 128>}, {transform_indices = @transform_14, window_bounds = array<i64: 64, 128>}]} {
    %c0 = arith.constant 0 : index
    %c0_0 = arith.constant 0 : index
    %0 = vector.load %arg1[%c0, %c0_0] : memref<64x128xbf16, #tpu.memory_space<vmem>>, vector<64x128xbf16>
    %c0_1 = arith.constant 0 : index
    %c0_2 = arith.constant 0 : index
    %1 = vector.load %arg3[%c0_1, %c0_2] : memref<128x128xbf16, #tpu.memory_space<vmem>>, vector<128x128xbf16>
    %cst = arith.constant dense<0.000000e+00> : vector<64x128xf32>
    %2 = tpu.matmul %0, %1, %cst {dimension_numbers = #tpu.dot_dimension_numbers<[1], [0], [0], [1], [0, 0, 1, 1], [], []>} : vector<64x128xbf16>, vector<128x128xbf16>, vector<64x128xf32> -> vector<64x128xf32>
    %c0_3 = arith.constant 0 : index
    %c0_4 = arith.constant 0 : index
    %3 = vector.load %arg4[%c0_3, %c0_4] : memref<1x128xf32, #tpu.memory_space<vmem>>, vector<1x128xf32>
    %4 = vector.broadcast %3 : vector<1x128xf32> to vector<64x128xf32>
    %5 = arith.addf %2, %4 : vector<64x128xf32>
    %cst_5 = arith.constant 0.000000e+00 : f32
    %6 = vector.broadcast %cst_5 : f32 to vector<64x128xf32>
    %7 = arith.maximumf %5, %6 : vector<64x128xf32>
    %8 = arith.truncf %7 : vector<64x128xf32> to vector<64x128xbf16>
    %c0_6 = arith.constant 0 : index
    %c0_7 = arith.constant 0 : index
    %9 = vector.load %arg5[%c0_6, %c0_7] : memref<128x128xbf16, #tpu.memory_space<vmem>>, vector<128x128xbf16>
    %cst_8 = arith.constant dense<0.000000e+00> : vector<64x128xf32>
    %10 = tpu.matmul %8, %9, %cst_8 {dimension_numbers = #tpu.dot_dimension_numbers<[1], [0], [0], [1], [0, 0, 1, 1], [], []>} : vector<64x128xbf16>, vector<128x128xbf16>, vector<64x128xf32> -> vector<64x128xf32>
    %c0_9 = arith.constant 0 : index
    %c0_10 = arith.constant 0 : index
    %11 = vector.load %arg6[%c0_9, %c0_10] : memref<1x128xf32, #tpu.memory_space<vmem>>, vector<1x128xf32>
    %12 = vector.broadcast %11 : vector<1x128xf32> to vector<64x128xf32>
    %13 = arith.addf %10, %12 : vector<64x128xf32>
    %cst_11 = arith.constant 0.000000e+00 : f32
    %14 = vector.broadcast %cst_11 : f32 to vector<64x128xf32>
    %15 = arith.maximumf %13, %14 : vector<64x128xf32>
    %16 = arith.truncf %15 : vector<64x128xf32> to vector<64x128xbf16>
    %c0_12 = arith.constant 0 : index
    %c0_13 = arith.constant 0 : index
    %17 = vector.load %arg7[%c0_12, %c0_13] : memref<128x128xbf16, #tpu.memory_space<vmem>>, vector<128x128xbf16>
    %cst_14 = arith.constant dense<0.000000e+00> : vector<64x128xf32>
    %18 = tpu.matmul %16, %17, %cst_14 {dimension_numbers = #tpu.dot_dimension_numbers<[1], [0], [0], [1], [0, 0, 1, 1], [], []>} : vector<64x128xbf16>, vector<128x128xbf16>, vector<64x128xf32> -> vector<64x128xf32>
    %c0_15 = arith.constant 0 : index
    %c0_16 = arith.constant 0 : index
    %19 = vector.load %arg8[%c0_15, %c0_16] : memref<1x128xf32, #tpu.memory_space<vmem>>, vector<1x128xf32>
    %20 = vector.broadcast %19 : vector<1x128xf32> to vector<64x128xf32>
    %21 = arith.addf %18, %20 : vector<64x128xf32>
    %cst_17 = arith.constant -4.000000e+00 : f32
    %cst_18 = arith.constant 1.500000e+01 : f32
    %22 = vector.broadcast %cst_17 : f32 to vector<64x128xf32>
    %23 = arith.maximumf %22, %21 : vector<64x128xf32>
    %24 = vector.broadcast %cst_18 : f32 to vector<64x128xf32>
    %25 = arith.minimumf %24, %23 : vector<64x128xf32>
    %26 = math.exp %25 : vector<64x128xf32>
    %c0_19 = arith.constant 0 : index
    %c0_20 = arith.constant 0 : index
    %27 = vector.load %arg2[%c0_19, %c0_20] : memref<64x128xf32, #tpu.memory_space<vmem>>, vector<64x128xf32>
    %28 = arith.mulf %26, %27 : vector<64x128xf32>
    %c120_i32 = arith.constant 120 : i32
    %29 = tpu.dynamic_rotate %28 by %c120_i32 dim 1 : vector<64x128xf32>, i32 -> vector<64x128xf32>
    %c8_i32 = arith.constant 8 : i32
    %30 = tpu.dynamic_rotate %28 by %c8_i32 dim 1 : vector<64x128xf32>, i32 -> vector<64x128xf32>
    %31 = arith.addf %29, %30 : vector<64x128xf32>
    %32 = arith.addf %21, %31 : vector<64x128xf32>
    %33 = arith.truncf %32 : vector<64x128xf32> to vector<64x128xbf16>
    %34 = arith.addf %0, %33 : vector<64x128xbf16>
    %c0_21 = arith.constant 0 : index
    %c0_22 = arith.constant 0 : index
    %35 = vector.load %arg9[%c0_21, %c0_22] : memref<128x128xbf16, #tpu.memory_space<vmem>>, vector<128x128xbf16>
    %cst_23 = arith.constant dense<0.000000e+00> : vector<64x128xf32>
    %36 = tpu.matmul %34, %35, %cst_23 {dimension_numbers = #tpu.dot_dimension_numbers<[1], [0], [0], [1], [0, 0, 1, 1], [], []>} : vector<64x128xbf16>, vector<128x128xbf16>, vector<64x128xf32> -> vector<64x128xf32>
    %c0_24 = arith.constant 0 : index
    %c0_25 = arith.constant 0 : index
    %37 = vector.load %arg10[%c0_24, %c0_25] : memref<1x128xf32, #tpu.memory_space<vmem>>, vector<1x128xf32>
    %38 = vector.broadcast %37 : vector<1x128xf32> to vector<64x128xf32>
    %39 = arith.addf %36, %38 : vector<64x128xf32>
    %cst_26 = arith.constant 0.000000e+00 : f32
    %40 = vector.broadcast %cst_26 : f32 to vector<64x128xf32>
    %41 = arith.maximumf %39, %40 : vector<64x128xf32>
    %42 = arith.truncf %41 : vector<64x128xf32> to vector<64x128xbf16>
    %c0_27 = arith.constant 0 : index
    %c0_28 = arith.constant 0 : index
    %43 = vector.load %arg11[%c0_27, %c0_28] : memref<128x128xbf16, #tpu.memory_space<vmem>>, vector<128x128xbf16>
    %cst_29 = arith.constant dense<0.000000e+00> : vector<64x128xf32>
    %44 = tpu.matmul %42, %43, %cst_29 {dimension_numbers = #tpu.dot_dimension_numbers<[1], [0], [0], [1], [0, 0, 1, 1], [], []>} : vector<64x128xbf16>, vector<128x128xbf16>, vector<64x128xf32> -> vector<64x128xf32>
    %c0_30 = arith.constant 0 : index
    %c0_31 = arith.constant 0 : index
    %45 = vector.load %arg12[%c0_30, %c0_31] : memref<1x128xf32, #tpu.memory_space<vmem>>, vector<1x128xf32>
    %46 = vector.broadcast %45 : vector<1x128xf32> to vector<64x128xf32>
    %47 = arith.addf %44, %46 : vector<64x128xf32>
    %cst_32 = arith.constant 0.000000e+00 : f32
    %48 = vector.broadcast %cst_32 : f32 to vector<64x128xf32>
    %49 = arith.maximumf %47, %48 : vector<64x128xf32>
    %50 = arith.truncf %49 : vector<64x128xf32> to vector<64x128xbf16>
    %c0_33 = arith.constant 0 : index
    %c0_34 = arith.constant 0 : index
    %51 = vector.load %arg13[%c0_33, %c0_34] : memref<128x128xbf16, #tpu.memory_space<vmem>>, vector<128x128xbf16>
    %cst_35 = arith.constant dense<0.000000e+00> : vector<64x128xf32>
    %52 = tpu.matmul %50, %51, %cst_35 {dimension_numbers = #tpu.dot_dimension_numbers<[1], [0], [0], [1], [0, 0, 1, 1], [], []>} : vector<64x128xbf16>, vector<128x128xbf16>, vector<64x128xf32> -> vector<64x128xf32>
    %c0_36 = arith.constant 0 : index
    %c0_37 = arith.constant 0 : index
    %53 = vector.load %arg14[%c0_36, %c0_37] : memref<1x128xf32, #tpu.memory_space<vmem>>, vector<1x128xf32>
    %54 = vector.broadcast %53 : vector<1x128xf32> to vector<64x128xf32>
    %55 = arith.addf %52, %54 : vector<64x128xf32>
    %56 = math.tanh %55 : vector<64x128xf32>
    %57 = tpu.iota {dimensions = array<i32: 1>} : vector<64x128xi32>
    %c32_i32 = arith.constant 32 : i32
    %58 = vector.broadcast %c32_i32 : i32 to vector<64x128xi32>
    %59 = arith.cmpi sge, %57, %58 : vector<64x128xi32>
    %c40_i32 = arith.constant 40 : i32
    %60 = vector.broadcast %c40_i32 : i32 to vector<64x128xi32>
    %61 = arith.cmpi slt, %57, %60 : vector<64x128xi32>
    %62 = arith.andi %59, %61 : vector<64x128xi1>
    %63 = arith.select %62, %26, %21 : vector<64x128xi1>, vector<64x128xf32>
    %64 = arith.addf %56, %63 : vector<64x128xf32>
    %c0_38 = arith.constant 0 : index
    %c0_39 = arith.constant 0 : index
    %65 = vector.load %arg15[%c0_38, %c0_39] : memref<64x128xf32, #tpu.memory_space<vmem>>, vector<64x128xf32>
    tpu.vector_store %arg15[%c0_38, %c0_39], %64 {strides = array<i32>} : memref<64x128xf32, #tpu.memory_space<vmem>>, vector<64x128xf32>,
    return
  }
  func.func @transform_0(%arg0: i32) -> (i32, i32) {
    %c0_i32 = arith.constant 0 : i32
    %c0_i32_0 = arith.constant 0 : i32
    return %arg0, %c0_i32 : i32, i32
  }
  func.func @transform_1(%arg0: i32) -> (i32, i32) {
    %c0_i32 = arith.constant 0 : i32
    %c0_i32_0 = arith.constant 0 : i32
    return %arg0, %c0_i32 : i32, i32
  }
  func.func @transform_2(%arg0: i32) -> (i32, i32) {
    %c0_i32 = arith.constant 0 : i32
    %c0_i32_0 = arith.constant 0 : i32
    %c0_i32_1 = arith.constant 0 : i32
    return %c0_i32, %c0_i32_0 : i32, i32
  }
  func.func @transform_3(%arg0: i32) -> (i32, i32) {
    %c0_i32 = arith.constant 0 : i32
    %c0_i32_0 = arith.constant 0 : i32
    %c0_i32_1 = arith.constant 0 : i32
    return %c0_i32, %c0_i32_0 : i32, i32
  }
  func.func @transform_4(%arg0: i32) -> (i32, i32) {
    %c0_i32 = arith.constant 0 : i32
    %c0_i32_0 = arith.constant 0 : i32
    %c0_i32_1 = arith.constant 0 : i32
    return %c0_i32, %c0_i32_0 : i32, i32
  }
  func.func @transform_5(%arg0: i32) -> (i32, i32) {
    %c0_i32 = arith.constant 0 : i32
    %c0_i32_0 = arith.constant 0 : i32
    %c0_i32_1 = arith.constant 0 : i32
    return %c0_i32, %c0_i32_0 : i32, i32
  }
  func.func @transform_6(%arg0: i32) -> (i32, i32) {
    %c0_i32 = arith.constant 0 : i32
    %c0_i32_0 = arith.constant 0 : i32
    %c0_i32_1 = arith.constant 0 : i32
    return %c0_i32, %c0_i32_0 : i32, i32
  }
  func.func @transform_7(%arg0: i32) -> (i32, i32) {
    %c0_i32 = arith.constant 0 : i32
    %c0_i32_0 = arith.constant 0 : i32
    %c0_i32_1 = arith.constant 0 : i32
    return %c0_i32, %c0_i32_0 : i32, i32
  }
  func.func @transform_8(%arg0: i32) -> (i32, i32) {
    %c0_i32 = arith.constant 0 : i32
    %c0_i32_0 = arith.constant 0 : i32
    %c0_i32_1 = arith.constant 0 : i32
    return %c0_i32, %c0_i32_0 : i32, i32
  }
  func.func @transform_9(%arg0: i32) -> (i32, i32) {
    %c0_i32 = arith.constant 0 : i32
    %c0_i32_0 = arith.constant 0 : i32
    %c0_i32_1 = arith.constant 0 : i32
    return %c0_i32, %c0_i32_0 : i32, i32
  }
  func.func @transform_10(%arg0: i32) -> (i32, i32) {
    %c0_i32 = arith.constant 0 : i32
    %c0_i32_0 = arith.constant 0 : i32
    %c0_i32_1 = arith.constant 0 : i32
    return %c0_i32, %c0_i32_0 : i32, i32
  }
  func.func @transform_11(%arg0: i32) -> (i32, i32) {
    %c0_i32 = arith.constant 0 : i32
    %c0_i32_0 = arith.constant 0 : i32
    %c0_i32_1 = arith.constant 0 : i32
    return %c0_i32, %c0_i32_0 : i32, i32
  }
  func.func @transform_12(%arg0: i32) -> (i32, i32) {
    %c0_i32 = arith.constant 0 : i32
    %c0_i32_0 = arith.constant 0 : i32
    %c0_i32_1 = arith.constant 0 : i32
    return %c0_i32, %c0_i32_0 : i32, i32
  }
  func.func @transform_13(%arg0: i32) -> (i32, i32) {
    %c0_i32 = arith.constant 0 : i32
    %c0_i32_0 = arith.constant 0 : i32
    %c0_i32_1 = arith.constant 0 : i32
    return %c0_i32, %c0_i32_0 : i32, i32
  }
  func.func @transform_14(%arg0: i32) -> (i32, i32) {
    %c0_i32 = arith.constant 0 : i32
    %c0_i32_0 = arith.constant 0 : i32
    return %arg0, %c0_i32 : i32, i32
  }
}

</mosaic_0001>

<llo_original>
// kernel: tpu_custom_call.1
$region0: #{tpu_custom_call.1}
  #allocation0 [shape = 'u32[]', space=smem, size = 0x4, offset = 0x4, fixed_abs, tag = 'smem constant byte address 0x4 - core index']
  #allocation1 [shape = 'u32[144,128]{1,0:T(1,128)}', space=vmem, size = 0x12000, scoped, tag = 'internal scratch']
  %s0 = inlined_call_operand.hbm [shape: bf16[256,128], index: 0, kind: input, shape index: {}]
  %s1 = inlined_call_operand.hbm [shape: f32[256,128], index: 1, kind: input, shape index: {}]
  %s2 = inlined_call_operand.hbm [shape: bf16[128,128], index: 2, kind: input, shape index: {}]
  %s3 = inlined_call_operand.vmem [shape: f32[1,128], index: 3, kind: input, shape index: {}]
  %s4 = inlined_call_operand.hbm [shape: bf16[128,128], index: 4, kind: input, shape index: {}]
  %s5 = inlined_call_operand.vmem [shape: f32[1,128], index: 5, kind: input, shape index: {}]
  %s6 = inlined_call_operand.hbm [shape: bf16[128,128], index: 6, kind: input, shape index: {}]
  %s7 = inlined_call_operand.vmem [shape: f32[1,128], index: 7, kind: input, shape index: {}]
  %s8 = inlined_call_operand.hbm [shape: bf16[128,128], index: 8, kind: input, shape index: {}]
  %s9 = inlined_call_operand.vmem [shape: f32[1,128], index: 9, kind: input, shape index: {}]
  %s10 = inlined_call_operand.hbm [shape: bf16[128,128], index: 10, kind: input, shape index: {}]
  %s11 = inlined_call_operand.vmem [shape: f32[1,128], index: 11, kind: input, shape index: {}]
  %s12 = inlined_call_operand.hbm [shape: bf16[128,128], index: 12, kind: input, shape index: {}]
  %s13 = inlined_call_operand.vmem [shape: f32[1,128], index: 13, kind: input, shape index: {}]
  %s14 = inlined_call_operand.hbm [shape: f32[256,128], index: 14, kind: output, shape index: {}]
  %s15 = sld [smem:[#allocation0]]
  $region121: #{tpu_custom_call.1} parent=0
    _
  %s17 = ssub.s32 1, %s15
  %s18 = scalar_select 0, %s17, %s15
  $region1: #{tpu_custom_call.1} parent=0
    #allocation2 [shape = 'u8[32768]{0}', space=vmem, size = 0x8000, scoped, tag = 'input window, operand 0']
    #allocation3 [shape = 's32[2]{0}', space=sflag, size = 0x8, scoped, tag = 'scoped memory for tpu_custom_call.1']
    #allocation4 [shape = 's32[2]{0}', space=sflag, size = 0x8, scoped, tag = 'scoped memory for tpu_custom_call.1']
    #allocation5 [shape = 'u8[65536]{0}', space=vmem, size = 0x10000, scoped, tag = 'input window, operand 1']
    #allocation6 [shape = 's32[2]{0}', space=sflag, size = 0x8, scoped, tag = 'scoped memory for tpu_custom_call.1']
    #allocation7 [shape = 'u8[32768]{0}', space=vmem, size = 0x8000, scoped, tag = 'input window, operand 2, single buffered']
    #allocation8 [shape = 'u8[32768]{0}', space=vmem, size = 0x8000, scoped, tag = 'input window, operand 4, single buffered']
    #allocation9 [shape = 's32[1]{0}', space=sflag, size = 0x4, scoped, tag = 'scoped memory for tpu_custom_call.1']
    #allocation10 [shape = 'u8[32768]{0}', space=vmem, size = 0x8000, scoped, tag = 'input window, operand 6, single buffered']
    #allocation11 [shape = 'u8[32768]{0}', space=vmem, size = 0x8000, scoped, tag = 'input window, operand 8, single buffered']
    #allocation12 [shape = 's32[1]{0}', space=sflag, size = 0x4, scoped, tag = 'scoped memory for tpu_custom_call.1']
    #allocation13 [shape = 'u8[32768]{0}', space=vmem, size = 0x8000, scoped, tag = 'input window, operand 10, single buffered']
    #allocation14 [shape = 'u8[32768]{0}', space=vmem, size = 0x8000, scoped, tag = 'input window, operand 12, single buffered']
    #allocation15 [shape = 's32[1]{0}', space=sflag, size = 0x4, scoped, tag = 'scoped memory for tpu_custom_call.1']
    #allocation16 [shape = 'u8[65536]{0}', space=vmem, size = 0x10000, scoped, tag = 'output window, operand 0']
    %19 = vsyncpa [#allocation3], 0
    %s20 = scalar_lea.sflag [#allocation3], 1
    %21 = vsyncpa %s20, 0
    %22 = vsyncpa [#allocation6], 0
    %s23 = scalar_lea.sflag [#allocation6], 1
    %24 = vsyncpa %s23, 0
    %25 = vsyncpa [#allocation9], 0
    %26 = vsyncpa [#allocation12], 0
    %27 = vsyncpa [#allocation15], 0
    %28 = vsyncpa [#allocation4], 0
    %s29 = scalar_lea.sflag [#allocation4], 1
    %30 = vsyncpa %s29, 0
    loop: start=0, step=1, limit=6
    $region2: #{tpu_custom_call.1} parent=1 // loop_pre_header
      _
    $region3: #{tpu_custom_call.1} parent=1 // loop_header
      %s32 = sphi 0, %s36
      %p33 = scmp.ge.s32.totalorder %s32, 6
      %s42 = sphi 0, %s44
      %s45 = sphi 0, %s42
      %s46 = sphi 0, %s45
      %s62 = sphi 0, %s46
      %s68 = sphi 0, %s70
      %s71 = sphi 0, %s68
      %s72 = sphi 0, %s71
      %s88 = sphi 0, %s72
      %s92 = sphi 0, %s92
      %s94 = sphi 0, %s92
      %s95 = sphi 0, %s94
      %s109 = sphi 0, %s95
      %s113 = sphi 0, %s113
      %s115 = sphi 0, %s113
      %s116 = sphi 0, %s115
      %s130 = sphi 0, %s116
      %s134 = sphi 0, %s134
      %s136 = sphi 0, %s134
      %s137 = sphi 0, %s136
      %s151 = sphi 0, %s137
      %s155 = sphi 0, %s155
      %s157 = sphi 0, %s155
      %s158 = sphi 0, %s157
      %s172 = sphi 0, %s158
      %s176 = sphi 0, %s176
      %s178 = sphi 0, %s176
      %s179 = sphi 0, %s178
      %s193 = sphi 0, %s179
      %s197 = sphi 0, %s197
      %s199 = sphi 0, %s197
      %s200 = sphi 0, %s199
      %s214 = sphi 0, %s200
      %s218 = sphi 0, %s218
      %s220 = sphi 0, %s218
      %s221 = sphi 0, %s220
      %s235 = sphi 0, %s221
      %s239 = sphi 0, %s239
      %s241 = sphi 0, %s239
      %s242 = sphi 0, %s241
      %s256 = sphi 0, %s242
      %s260 = sphi 0, %s260
      %s262 = sphi 0, %s260
      %s263 = sphi 0, %s262
      %s277 = sphi 0, %s263
      %s281 = sphi 0, %s281
      %s283 = sphi 0, %s281
      %s284 = sphi 0, %s283
      %s298 = sphi 0, %s284
      %s302 = sphi 0, %s302
      %s304 = sphi 0, %s302
      %s305 = sphi 0, %s304
      %s319 = sphi 0, %s305
      %s323 = sphi 0, %s323
      %s325 = sphi 0, %s323
      %s326 = sphi 0, %s325
      %s340 = sphi 0, %s326
      %s346 = sphi 0, %s348
      %s349 = sphi 0, %s346
      %s350 = sphi 0, %s349
      %s366 = sphi 0, %s350
    $region4: #{tpu_custom_call.1} parent=1 // loop_header_branch
      %35 = sbr.rel (%p33) target = $region8
    $region5: #{tpu_custom_call.1} parent=1 // loop_body
      %s37 = ssub.s32 %s32, 1
      %s38 = ssub.s32 %s32, 2
      %s39 = sadd.s32 %s32, 1
      %s40 = ssub.s32 %s32, %s39
      %p41 = scmp.eq.s32.totalorder %s40, 0
      %s43 = sadd.s32 %s42, 1
      %s44 = scalar_select %p41, %s42, %s43
      %p47 = pneg %p41
      %p48 = scmp.eq.s32.totalorder %s32, 3
      %p49 = por %p47, %p48
      %p50 = scmp.ne.s32.totalorder %s42, %s45
      %p51 = scmp.eq.s32.totalorder %s32, 0
      %p52 = por %p50, %p51
      %p53 = scmp.ne.s32.totalorder %s42, %s45
      %p54 = scmp.eq.s32.totalorder %s37, 3
      %p55 = por %p53, %p54
      %p56 = scmp.ne.s32.totalorder %s45, %s46
      %p57 = scmp.eq.s32.totalorder %s37, 0
      %p58 = por %p56, %p57
      %p59 = scmp.ne.s32.totalorder %s45, %s46
      %p60 = scmp.eq.s32.totalorder %s38, 3
      %p61 = por %p59, %p60
      %p63 = scmp.ne.s32.totalorder %s46, %s62
      %p64 = scmp.eq.s32.totalorder %s38, 0
      %p65 = por %p63, %p64
      %s66 = ssub.s32 %s32, %s39
      %p67 = scmp.eq.s32.totalorder %s66, 0
      %s69 = sadd.s32 %s68, 1
      %s70 = scalar_select %p67, %s68, %s69
      %p73 = pneg %p67
      %p74 = scmp.eq.s32.totalorder %s32, 3
      %p75 = por %p73, %p74
      %p76 = scmp.ne.s32.totalorder %s68, %s71
      %p77 = scmp.eq.s32.totalorder %s32, 0
      %p78 = por %p76, %p77
      %p79 = scmp.ne.s32.totalorder %s68, %s71
      %p80 = scmp.eq.s32.totalorder %s37, 3
      %p81 = por %p79, %p80
      %p82 = scmp.ne.s32.totalorder %s71, %s72
      %p83 = scmp.eq.s32.totalorder %s37, 0
      %p84 = por %p82, %p83
      %p85 = scmp.ne.s32.totalorder %s71, %s72
      %p86 = scmp.eq.s32.totalorder %s38, 3
      %p87 = por %p85, %p86
      %p89 = scmp.ne.s32.totalorder %s72, %s88
      %p90 = scmp.eq.s32.totalorder %s38, 0
      %p91 = por %p89, %p90
      %s93 = sadd.s32 %s92, 1
      %p96 = scmp.eq.s32.totalorder %s32, 3
      %p97 = scmp.ne.s32.totalorder %s92, %s94
      %p98 = scmp.eq.s32.totalorder %s32, 0
      %p99 = por %p97, %p98
      %p100 = scmp.ne.s32.totalorder %s92, %s94
      %p101 = scmp.eq.s32.totalorder %s37, 3
      %p102 = por %p100, %p101
      %p103 = scmp.ne.s32.totalorder %s94, %s95
      %p104 = scmp.eq.s32.totalorder %s37, 0
      %p105 = por %p103, %p104
      %p106 = scmp.ne.s32.totalorder %s94, %s95
      %p107 = scmp.eq.s32.totalorder %s38, 3
      %p108 = por %p106, %p107
      %p110 = scmp.ne.s32.totalorder %s95, %s109
      %p111 = scmp.eq.s32.totalorder %s38, 0
      %p112 = por %p110, %p111
      %s114 = sadd.s32 %s113, 1
      %p117 = scmp.eq.s32.totalorder %s32, 3
      %p118 = scmp.ne.s32.totalorder %s113, %s115
      %p119 = scmp.eq.s32.totalorder %s32, 0
      %p120 = por %p118, %p119
      %p121 = scmp.ne.s32.totalorder %s113, %s115
      %p122 = scmp.eq.s32.totalorder %s37, 3
      %p123 = por %p121, %p122
      %p124 = scmp.ne.s32.totalorder %s115, %s116
      %p125 = scmp.eq.s32.totalorder %s37, 0
      %p126 = por %p124, %p125
      %p127 = scmp.ne.s32.totalorder %s115, %s116
      %p128 = scmp.eq.s32.totalorder %s38, 3
      %p129 = por %p127, %p128
      %p131 = scmp.ne.s32.totalorder %s116, %s130
      %p132 = scmp.eq.s32.totalorder %s38, 0
      %p133 = por %p131, %p132
      %s135 = sadd.s32 %s134, 1
      %p138 = scmp.eq.s32.totalorder %s32, 3
      %p139 = scmp.ne.s32.totalorder %s134, %s136
      %p140 = scmp.eq.s32.totalorder %s32, 0
      %p141 = por %p139, %p140
      %p142 = scmp.ne.s32.totalorder %s134, %s136
      %p143 = scmp.eq.s32.totalorder %s37, 3
      %p144 = por %p142, %p143
      %p145 = scmp.ne.s32.totalorder %s136, %s137
      %p146 = scmp.eq.s32.totalorder %s37, 0
      %p147 = por %p145, %p146
      %p148 = scmp.ne.s32.totalorder %s136, %s137
      %p149 = scmp.eq.s32.totalorder %s38, 3
      %p150 = por %p148, %p149
      %p152 = scmp.ne.s32.totalorder %s137, %s151
      %p153 = scmp.eq.s32.totalorder %s38, 0
      %p154 = por %p152, %p153
      %s156 = sadd.s32 %s155, 1
      %p159 = scmp.eq.s32.totalorder %s32, 3
      %p160 = scmp.ne.s32.totalorder %s155, %s157
      %p161 = scmp.eq.s32.totalorder %s32, 0
      %p162 = por %p160, %p161
      %p163 = scmp.ne.s32.totalorder %s155, %s157
      %p164 = scmp.eq.s32.totalorder %s37, 3
      %p165 = por %p163, %p164
      %p166 = scmp.ne.s32.totalorder %s157, %s158
      %p167 = scmp.eq.s32.totalorder %s37, 0
      %p168 = por %p166, %p167
      %p169 = scmp.ne.s32.totalorder %s157, %s158
      %p170 = scmp.eq.s32.totalorder %s38, 3
      %p171 = por %p169, %p170
      %p173 = scmp.ne.s32.totalorder %s158, %s172
      %p174 = scmp.eq.s32.totalorder %s38, 0
      %p175 = por %p173, %p174
      %s177 = sadd.s32 %s176, 1
      %p180 = scmp.eq.s32.totalorder %s32, 3
      %p181 = scmp.ne.s32.totalorder %s176, %s178
      %p182 = scmp.eq.s32.totalorder %s32, 0
      %p183 = por %p181, %p182
      %p184 = scmp.ne.s32.totalorder %s176, %s178
      %p185 = scmp.eq.s32.totalorder %s37, 3
      %p186 = por %p184, %p185
      %p187 = scmp.ne.s32.totalorder %s178, %s179
      %p188 = scmp.eq.s32.totalorder %s37, 0
      %p189 = por %p187, %p188
      %p190 = scmp.ne.s32.totalorder %s178, %s179
      %p191 = scmp.eq.s32.totalorder %s38, 3
      %p192 = por %p190, %p191
      %p194 = scmp.ne.s32.totalorder %s179, %s193
      %p195 = scmp.eq.s32.totalorder %s38, 0
      %p196 = por %p194, %p195
      %s198 = sadd.s32 %s197, 1
      %p201 = scmp.eq.s32.totalorder %s32, 3
      %p202 = scmp.ne.s32.totalorder %s197, %s199
      %p203 = scmp.eq.s32.totalorder %s32, 0
      %p204 = por %p202, %p203
      %p205 = scmp.ne.s32.totalorder %s197, %s199
      %p206 = scmp.eq.s32.totalorder %s37, 3
      %p207 = por %p205, %p206
      %p208 = scmp.ne.s32.totalorder %s199, %s200
      %p209 = scmp.eq.s32.totalorder %s37, 0
      %p210 = por %p208, %p209
      %p211 = scmp.ne.s32.totalorder %s199, %s200
      %p212 = scmp.eq.s32.totalorder %s38, 3
      %p213 = por %p211, %p212
      %p215 = scmp.ne.s32.totalorder %s200, %s214
      %p216 = scmp.eq.s32.totalorder %s38, 0
      %p217 = por %p215, %p216
      %s219 = sadd.s32 %s218, 1
      %p222 = scmp.eq.s32.totalorder %s32, 3
      %p223 = scmp.ne.s32.totalorder %s218, %s220
      %p224 = scmp.eq.s32.totalorder %s32, 0
      %p225 = por %p223, %p224
      %p226 = scmp.ne.s32.totalorder %s218, %s220
      %p227 = scmp.eq.s32.totalorder %s37, 3
      %p228 = por %p226, %p227
      %p229 = scmp.ne.s32.totalorder %s220, %s221
      %p230 = scmp.eq.s32.totalorder %s37, 0
      %p231 = por %p229, %p230
      %p232 = scmp.ne.s32.totalorder %s220, %s221
      %p233 = scmp.eq.s32.totalorder %s38, 3
      %p234 = por %p232, %p233
      %p236 = scmp.ne.s32.totalorder %s221, %s235
      %p237 = scmp.eq.s32.totalorder %s38, 0
      %p238 = por %p236, %p237
      %s240 = sadd.s32 %s239, 1
      %p243 = scmp.eq.s32.totalorder %s32, 3
      %p244 = scmp.ne.s32.totalorder %s239, %s241
      %p245 = scmp.eq.s32.totalorder %s32, 0
      %p246 = por %p244, %p245
      %p247 = scmp.ne.s32.totalorder %s239, %s241
      %p248 = scmp.eq.s32.totalorder %s37, 3
      %p249 = por %p247, %p248
      %p250 = scmp.ne.s32.totalorder %s241, %s242
      %p251 = scmp.eq.s32.totalorder %s37, 0
      %p252 = por %p250, %p251
      %p253 = scmp.ne.s32.totalorder %s241, %s242
      %p254 = scmp.eq.s32.totalorder %s38, 3
      %p255 = por %p253, %p254
      %p257 = scmp.ne.s32.totalorder %s242, %s256
      %p258 = scmp.eq.s32.totalorder %s38, 0
      %p259 = por %p257, %p258
      %s261 = sadd.s32 %s260, 1
      %p264 = scmp.eq.s32.totalorder %s32, 3
      %p265 = scmp.ne.s32.totalorder %s260, %s262
      %p266 = scmp.eq.s32.totalorder %s32, 0
      %p267 = por %p265, %p266
      %p268 = scmp.ne.s32.totalorder %s260, %s262
      %p269 = scmp.eq.s32.totalorder %s37, 3
      %p270 = por %p268, %p269
      %p271 = scmp.ne.s32.totalorder %s262, %s263
      %p272 = scmp.eq.s32.totalorder %s37, 0
      %p273 = por %p271, %p272
      %p274 = scmp.ne.s32.totalorder %s262, %s263
      %p275 = scmp.eq.s32.totalorder %s38, 3
      %p276 = por %p274, %p275
      %p278 = scmp.ne.s32.totalorder %s263, %s277
      %p279 = scmp.eq.s32.totalorder %s38, 0
      %p280 = por %p278, %p279
      %s282 = sadd.s32 %s281, 1
      %p285 = scmp.eq.s32.totalorder %s32, 3
      %p286 = scmp.ne.s32.totalorder %s281, %s283
      %p287 = scmp.eq.s32.totalorder %s32, 0
      %p288 = por %p286, %p287
      %p289 = scmp.ne.s32.totalorder %s281, %s283
      %p290 = scmp.eq.s32.totalorder %s37, 3
      %p291 = por %p289, %p290
      %p292 = scmp.ne.s32.totalorder %s283, %s284
      %p293 = scmp.eq.s32.totalorder %s37, 0
      %p294 = por %p292, %p293
      %p295 = scmp.ne.s32.totalorder %s283, %s284
      %p296 = scmp.eq.s32.totalorder %s38, 3
      %p297 = por %p295, %p296
      %p299 = scmp.ne.s32.totalorder %s284, %s298
      %p300 = scmp.eq.s32.totalorder %s38, 0
      %p301 = por %p299, %p300
      %s303 = sadd.s32 %s302, 1
      %p306 = scmp.eq.s32.totalorder %s32, 3
      %p307 = scmp.ne.s32.totalorder %s302, %s304
      %p308 = scmp.eq.s32.totalorder %s32, 0
      %p309 = por %p307, %p308
      %p310 = scmp.ne.s32.totalorder %s302, %s304
      %p311 = scmp.eq.s32.totalorder %s37, 3
      %p312 = por %p310, %p311
      %p313 = scmp.ne.s32.totalorder %s304, %s305
      %p314 = scmp.eq.s32.totalorder %s37, 0
      %p315 = por %p313, %p314
      %p316 = scmp.ne.s32.totalorder %s304, %s305
      %p317 = scmp.eq.s32.totalorder %s38, 3
      %p318 = por %p316, %p317
      %p320 = scmp.ne.s32.totalorder %s305, %s319
      %p321 = scmp.eq.s32.totalorder %s38, 0
      %p322 = por %p320, %p321
      %s324 = sadd.s32 %s323, 1
      %p327 = scmp.eq.s32.totalorder %s32, 3
      %p328 = scmp.ne.s32.totalorder %s323, %s325
      %p329 = scmp.eq.s32.totalorder %s32, 0
      %p330 = por %p328, %p329
      %p331 = scmp.ne.s32.totalorder %s323, %s325
      %p332 = scmp.eq.s32.totalorder %s37, 3
      %p333 = por %p331, %p332
      %p334 = scmp.ne.s32.totalorder %s325, %s326
      %p335 = scmp.eq.s32.totalorder %s37, 0
      %p336 = por %p334, %p335
      %p337 = scmp.ne.s32.totalorder %s325, %s326
      %p338 = scmp.eq.s32.totalorder %s38, 3
      %p339 = por %p337, %p338
      %p341 = scmp.ne.s32.totalorder %s326, %s340
      %p342 = scmp.eq.s32.totalorder %s38, 0
      %p343 = por %p341, %p342
      %s344 = ssub.s32 %s32, %s39
      %p345 = scmp.eq.s32.totalorder %s344, 0
      %s347 = sadd.s32 %s346, 1
      %s348 = scalar_select %p345, %s346, %s347
      %p351 = pneg %p345
      %p352 = scmp.eq.s32.totalorder %s32, 3
      %p353 = por %p351, %p352
      %p354 = scmp.ne.s32.totalorder %s346, %s349
      %p355 = scmp.eq.s32.totalorder %s32, 0
      %p356 = por %p354, %p355
      %p357 = scmp.ne.s32.totalorder %s346, %s349
      %p358 = scmp.eq.s32.totalorder %s37, 3
      %p359 = por %p357, %p358
      %p360 = scmp.ne.s32.totalorder %s349, %s350
      %p361 = scmp.eq.s32.totalorder %s37, 0
      %p362 = por %p360, %p361
      %p363 = scmp.ne.s32.totalorder %s349, %s350
      %p364 = scmp.eq.s32.totalorder %s38, 3
      %p365 = por %p363, %p364
      %p367 = scmp.ne.s32.totalorder %s350, %s366
      %p368 = scmp.eq.s32.totalorder %s38, 0
      %p369 = por %p367, %p368
      %p370 = scmp.le.s32.totalorder 1, %s32
      %p371 = scmp.lt.s32.totalorder %s32, 5
      %p372 = pnand %p370, %p371
      %p373 = pneg %p372
      // Predicated region
      $region9: #{tpu_custom_call.1} parent=5 // pred_check
        _
      $region10: #{tpu_custom_call.1} parent=5 // pred_check_branch
        %375 = sbr.rel (%p372) target = $region12
      $region11: #{tpu_custom_call.1} parent=5 // pred_region
        %s376 = ssub.s32 %s32, 1
        // Predicated region
        $region13: #{tpu_custom_call.1} parent=11 // pred_check
          %p377 = pneg %p105
        $region14: #{tpu_custom_call.1} parent=11 // pred_check_branch
          %379 = sbr.rel (%p377) target = $region16
        $region15: #{tpu_custom_call.1} parent=11 // pred_region
          %s381 = ssub.s32 1024, 1024
          %382 = vsyncadd [#allocation6], %s381
          %s383 = sshll.u32 [#allocation7], 4
          %s384 = int_to_ptr.vmem [resolvable:$true] %s383
          %389 = dma.hbm_to_vmem [thread:$0]  %s2, 1024, %s384, [#allocation6], 64, 64, 4
        $region16: #{tpu_custom_call.1} parent=11 // pred_fallthru
          _
        // Predicated region
        $region17: #{tpu_custom_call.1} parent=11 // pred_check
          %p390 = pneg %p126
        $region18: #{tpu_custom_call.1} parent=11 // pred_check_branch
          %392 = sbr.rel (%p390) target = $region20
        $region19: #{tpu_custom_call.1} parent=11 // pred_region
          _
        $region20: #{tpu_custom_call.1} parent=11 // pred_fallthru
          _
        // Predicated region
        $region21: #{tpu_custom_call.1} parent=11 // pred_check
          %p393 = pneg %p147
        $region22: #{tpu_custom_call.1} parent=11 // pred_check_branch
          %395 = sbr.rel (%p393) target = $region24
        $region23: #{tpu_custom_call.1} parent=11 // pred_region
          %s397 = ssub.s32 1024, 1024
          %398 = vsyncadd [#allocation9], %s397
          %s399 = sshll.u32 [#allocation8], 4
          %s400 = int_to_ptr.vmem [resolvable:$true] %s399
          %405 = dma.hbm_to_vmem [thread:$0]  %s4, 1024, %s400, [#allocation9], 64, 64, 4
        $region24: #{tpu_custom_call.1} parent=11 // pred_fallthru
          _
        // Predicated region
        $region25: #{tpu_custom_call.1} parent=11 // pred_check
          %p406 = pneg %p168
        $region26: #{tpu_custom_call.1} parent=11 // pred_check_branch
          %408 = sbr.rel (%p406) target = $region28
        $region27: #{tpu_custom_call.1} parent=11 // pred_region
          _
        $region28: #{tpu_custom_call.1} parent=11 // pred_fallthru
          _
        // Predicated region
        $region29: #{tpu_custom_call.1} parent=11 // pred_check
          %p409 = pneg %p189
        $region30: #{tpu_custom_call.1} parent=11 // pred_check_branch
          %411 = sbr.rel (%p409) target = $region32
        $region31: #{tpu_custom_call.1} parent=11 // pred_region
          %s413 = ssub.s32 1024, 1024
          %414 = vsyncadd [#allocation9], %s413
          %s415 = sshll.u32 [#allocation10], 4
          %s416 = int_to_ptr.vmem [resolvable:$true] %s415
          %421 = dma.hbm_to_vmem [thread:$0]  %s6, 1024, %s416, [#allocation9], 64, 64, 4
        $region32: #{tpu_custom_call.1} parent=11 // pred_fallthru
          _
        // Predicated region
        $region33: #{tpu_custom_call.1} parent=11 // pred_check
          %p422 = pneg %p210
        $region34: #{tpu_custom_call.1} parent=11 // pred_check_branch
          %424 = sbr.rel (%p422) target = $region36
        $region35: #{tpu_custom_call.1} parent=11 // pred_region
          _
        $region36: #{tpu_custom_call.1} parent=11 // pred_fallthru
          _
        // Predicated region
        $region37: #{tpu_custom_call.1} parent=11 // pred_check
          %p425 = pneg %p231
        $region38: #{tpu_custom_call.1} parent=11 // pred_check_branch
          %427 = sbr.rel (%p425) target = $region40
        $region39: #{tpu_custom_call.1} parent=11 // pred_region
          %s429 = ssub.s32 1024, 1024
          %430 = vsyncadd [#allocation12], %s429
          %s431 = sshll.u32 [#allocation11], 4
          %s432 = int_to_ptr.vmem [resolvable:$true] %s431
          %437 = dma.hbm_to_vmem [thread:$0]  %s8, 1024, %s432, [#allocation12], 64, 64, 4
        $region40: #{tpu_custom_call.1} parent=11 // pred_fallthru
          _
        // Predicated region
        $region41: #{tpu_custom_call.1} parent=11 // pred_check
          %p438 = pneg %p252
        $region42: #{tpu_custom_call.1} parent=11 // pred_check_branch
          %440 = sbr.rel (%p438) target = $region44
        $region43: #{tpu_custom_call.1} parent=11 // pred_region
          _
        $region44: #{tpu_custom_call.1} parent=11 // pred_fallthru
          _
        // Predicated region
        $region45: #{tpu_custom_call.1} parent=11 // pred_check
          %p441 = pneg %p273
        $region46: #{tpu_custom_call.1} parent=11 // pred_check_branch
          %443 = sbr.rel (%p441) target = $region48
        $region47: #{tpu_custom_call.1} parent=11 // pred_region
          %s445 = ssub.s32 1024, 1024
          %446 = vsyncadd [#allocation12], %s445
          %s447 = sshll.u32 [#allocation13], 4
          %s448 = int_to_ptr.vmem [resolvable:$true] %s447
          %453 = dma.hbm_to_vmem [thread:$0]  %s10, 1024, %s448, [#allocation12], 64, 64, 4
        $region48: #{tpu_custom_call.1} parent=11 // pred_fallthru
          _
        // Predicated region
        $region49: #{tpu_custom_call.1} parent=11 // pred_check
          %p454 = pneg %p294
        $region50: #{tpu_custom_call.1} parent=11 // pred_check_branch
          %456 = sbr.rel (%p454) target = $region52
        $region51: #{tpu_custom_call.1} parent=11 // pred_region
          _
        $region52: #{tpu_custom_call.1} parent=11 // pred_fallthru
          _
        // Predicated region
        $region53: #{tpu_custom_call.1} parent=11 // pred_check
          %p457 = pneg %p315
        $region54: #{tpu_custom_call.1} parent=11 // pred_check_branch
          %459 = sbr.rel (%p457) target = $region56
        $region55: #{tpu_custom_call.1} parent=11 // pred_region
          %s461 = ssub.s32 1024, 1024
          %462 = vsyncadd [#allocation15], %s461
          %s463 = sshll.u32 [#allocation14], 4
          %s464 = int_to_ptr.vmem [resolvable:$true] %s463
          %469 = dma.hbm_to_vmem [thread:$0]  %s12, 1024, %s464, [#allocation15], 64, 64, 4
        $region56: #{tpu_custom_call.1} parent=11 // pred_fallthru
          _
        // Predicated region
        $region57: #{tpu_custom_call.1} parent=11 // pred_check
          %p470 = pneg %p336
        $region58: #{tpu_custom_call.1} parent=11 // pred_check_branch
          %472 = sbr.rel (%p470) target = $region60
        $region59: #{tpu_custom_call.1} parent=11 // pred_region
          _
        $region60: #{tpu_custom_call.1} parent=11 // pred_fallthru
          _
      $region12: #{tpu_custom_call.1} parent=5 // pred_fallthru
        _
      %p473 = scmp.lt.s32.totalorder %s32, 4
      // Predicated region
      $region61: #{tpu_custom_call.1} parent=5 // pred_check
        %p474 = pneg %p473
      $region62: #{tpu_custom_call.1} parent=5 // pred_check_branch
        %476 = sbr.rel (%p474) target = $region64
      $region63: #{tpu_custom_call.1} parent=5 // pred_region
        // Predicated region
        $region65: #{tpu_custom_call.1} parent=63 // pred_check
          %p477 = pneg %p52
        $region66: #{tpu_custom_call.1} parent=63 // pred_check_branch
          %479 = sbr.rel (%p477) target = $region68
        $region67: #{tpu_custom_call.1} parent=63 // pred_region
          %s480 = sand.u32 %s42, 1
          %s481 = scalar_lea.sflag [#allocation3], %s480
          %s482 = sand.u32 %s42, 1
          %s483 = smul.addr %s482, 32
          %s484 = scalar_lea.vmem [#allocation2], %s483
          %s485 = smul.u32 8, %s32
          %s487 = ssub.s32 512, 512
          %488 = vsyncadd %s481, %s487
          %s489 = smul.addr %s485, 64
          %s490 = scalar_lea.hbm %s0, %s489
          %s491 = sshll.u32 %s484, 4
          %s492 = int_to_ptr.vmem [resolvable:$true] %s491
          %497 = dma.hbm_to_vmem [thread:$0]  %s490, 512, %s492, %s481, 64, 64, 4
        $region68: #{tpu_custom_call.1} parent=63 // pred_fallthru
          _
        // Predicated region
        $region69: #{tpu_custom_call.1} parent=63 // pred_check
          %p498 = pneg %p78
        $region70: #{tpu_custom_call.1} parent=63 // pred_check_branch
          %500 = sbr.rel (%p498) target = $region72
        $region71: #{tpu_custom_call.1} parent=63 // pred_region
          %s501 = sand.u32 %s32, 1
          %s502 = scalar_lea.sflag [#allocation6], %s501
          %s503 = sand.u32 %s68, 1
          %s504 = smul.addr %s503, 64
          %s505 = scalar_lea.vmem [#allocation5], %s504
          %s506 = smul.u32 8, %s32
          %s508 = ssub.s32 1024, 1024
          %509 = vsyncadd %s502, %s508
          %s510 = smul.addr %s506, 128
          %s511 = scalar_lea.hbm %s1, %s510
          %s512 = sshll.u32 %s505, 4
          %s513 = int_to_ptr.vmem [resolvable:$true] %s512
          %518 = dma.hbm_to_vmem [thread:$0]  %s511, 1024, %s513, %s502, 128, 128, 8
        $region72: #{tpu_custom_call.1} parent=63 // pred_fallthru
          _
      $region64: #{tpu_custom_call.1} parent=5 // pred_fallthru
        _
      %p519 = scmp.le.s32.totalorder 1, %s32
      %p520 = scmp.lt.s32.totalorder %s32, 5
      %p521 = pnand %p519, %p520
      %p522 = pneg %p521
      // Predicated region
      $region73: #{tpu_custom_call.1} parent=5 // pred_check
        _
      $region74: #{tpu_custom_call.1} parent=5 // pred_check_branch
        %524 = sbr.rel (%p521) target = $region76
      $region75: #{tpu_custom_call.1} parent=5 // pred_region
        %s525 = ssub.s32 %s32, 1
        %s526 = sand.u32 %s45, 1
        %s527 = scalar_lea.sflag [#allocation3], %s526
        %s528 = sand.u32 %s45, 1
        %s529 = smul.addr %s528, 32
        %s530 = scalar_lea.vmem [#allocation2], %s529
        // Predicated region
        $region77: #{tpu_custom_call.1} parent=75 // pred_check
          %p531 = pneg %p58
        $region78: #{tpu_custom_call.1} parent=75 // pred_check_branch
          %533 = sbr.rel (%p531) target = $region80
        $region79: #{tpu_custom_call.1} parent=75 // pred_region
          %534 = dma.done %s527, 512
        $region80: #{tpu_custom_call.1} parent=75 // pred_fallthru
          _
        %s535 = sand.u32 %s37, 1
        %s536 = scalar_lea.sflag [#allocation6], %s535
        %s537 = sand.u32 %s71, 1
        %s538 = smul.addr %s537, 64
        %s539 = scalar_lea.vmem [#allocation5], %s538
        // Predicated region
        $region81: #{tpu_custom_call.1} parent=75 // pred_check
          %p540 = pneg %p84
        $region82: #{tpu_custom_call.1} parent=75 // pred_check_branch
          %542 = sbr.rel (%p540) target = $region84
        $region83: #{tpu_custom_call.1} parent=75 // pred_region
          %543 = dma.done %s536, 1024
        $region84: #{tpu_custom_call.1} parent=75 // pred_fallthru
          _
        // Predicated region
        $region85: #{tpu_custom_call.1} parent=75 // pred_check
          %p544 = pneg %p105
        $region86: #{tpu_custom_call.1} parent=75 // pred_check_branch
          %546 = sbr.rel (%p544) target = $region88
        $region87: #{tpu_custom_call.1} parent=75 // pred_region
          %547 = dma.done [#allocation6], 1024
        $region88: #{tpu_custom_call.1} parent=75 // pred_fallthru
          _
        // Predicated region
        $region89: #{tpu_custom_call.1} parent=75 // pred_check
          %p548 = pneg %p147
        $region90: #{tpu_custom_call.1} parent=75 // pred_check_branch
          %550 = sbr.rel (%p548) target = $region92
        $region91: #{tpu_custom_call.1} parent=75 // pred_region
          %551 = dma.done [#allocation9], 1024
        $region92: #{tpu_custom_call.1} parent=75 // pred_fallthru
          _
        // Predicated region
        $region93: #{tpu_custom_call.1} parent=75 // pred_check
          %p552 = pneg %p189
        $region94: #{tpu_custom_call.1} parent=75 // pred_check_branch
          %554 = sbr.rel (%p552) target = $region96
        $region95: #{tpu_custom_call.1} parent=75 // pred_region
          %555 = dma.done [#allocation9], 1024
        $region96: #{tpu_custom_call.1} parent=75 // pred_fallthru
          _
        // Predicated region
        $region97: #{tpu_custom_call.1} parent=75 // pred_check
          %p556 = pneg %p231
        $region98: #{tpu_custom_call.1} parent=75 // pred_check_branch
          %558 = sbr.rel (%p556) target = $region100
        $region99: #{tpu_custom_call.1} parent=75 // pred_region
          %559 = dma.done [#allocation12], 1024
        $region100: #{tpu_custom_call.1} parent=75 // pred_fallthru
          _
        // Predicated region
        $region101: #{tpu_custom_call.1} parent=75 // pred_check
          %p560 = pneg %p273
        $region102: #{tpu_custom_call.1} parent=75 // pred_check_branch
          %562 = sbr.rel (%p560) target = $region104
        $region103: #{tpu_custom_call.1} parent=75 // pred_region
          %563 = dma.done [#allocation12], 1024
        $region104: #{tpu_custom_call.1} parent=75 // pred_fallthru
          _
        // Predicated region
        $region105: #{tpu_custom_call.1} parent=75 // pred_check
          %p564 = pneg %p315
        $region106: #{tpu_custom_call.1} parent=75 // pred_check_branch
          %566 = sbr.rel (%p564) target = $region108
        $region107: #{tpu_custom_call.1} parent=75 // pred_region
          %567 = dma.done [#allocation15], 1024
        $region108: #{tpu_custom_call.1} parent=75 // pred_fallthru
          _
        %s568 = sand.u32 %s45, 1
        %s569 = scalar_lea.sflag [#allocation3], %s568
        %s570 = sand.u32 %s45, 1
        %s571 = smul.addr %s570, 32
        %s572 = scalar_lea.vmem [#allocation2], %s571
        %p573 = pneg %p58
        %p574 = pneg %p55
        %s575 = sand.u32 %s37, 1
        %s576 = scalar_lea.sflag [#allocation6], %s575
        %s577 = sand.u32 %s71, 1
        %s578 = smul.addr %s577, 64
        %s579 = scalar_lea.vmem [#allocation5], %s578
        %p580 = pneg %p84
        %p581 = pneg %p81
        %p582 = pneg %p105
        %p583 = pneg %p102
        %p584 = pneg %p126
        %p585 = pneg %p123
        %p586 = pneg %p147
        %p587 = pneg %p144
        %p588 = pneg %p168
        %p589 = pneg %p165
        %p590 = pneg %p189
        %p591 = pneg %p186
        %p592 = pneg %p210
        %p593 = pneg %p207
        %p594 = pneg %p231
        %p595 = pneg %p228
        %p596 = pneg %p252
        %p597 = pneg %p249
        %p598 = pneg %p273
        %p599 = pneg %p270
        %p600 = pneg %p294
        %p601 = pneg %p291
        %p602 = pneg %p315
        %p603 = pneg %p312
        %p604 = pneg %p336
        %p605 = pneg %p333
        %p606 = pneg %p362
        %p607 = pneg %p359
        %s608 = sand.u32 %s349, 1
        %s609 = scalar_lea.sflag [#allocation4], %s608
        %s610 = sand.u32 %s349, 1
        %s611 = smul.addr %s610, 64
        %s612 = scalar_lea.vmem [#allocation16], %s611
        %s613 = smul.u32 8, %s37
        %s614 = smul.u32 8, %s37
        %s615 = smul.u32 8, %s37
        %v617 = vld [vmem:[%s530] sm:$0xf]
        %v618 = vld [vmem:[%s530 + $0x4] sm:$0xf]
        %v619 = vld [vmem:[%s530 + $0x8] sm:$0xf]
        %v620 = vld [vmem:[%s530 + $0xc] sm:$0xf]
        %v621 = vld [vmem:[%s530 + $0x10] sm:$0xf]
        %v622 = vld [vmem:[%s530 + $0x14] sm:$0xf]
        %v623 = vld [vmem:[%s530 + $0x18] sm:$0xf]
        %v624 = vld [vmem:[%s530 + $0x1c] sm:$0xf]
        %v625 = vld [vmem:[#allocation7] sm:$0xf]
        %v626 = vld [vmem:[#allocation7 + $0x4] sm:$0xf]
        %v627 = vld [vmem:[#allocation7 + $0x8] sm:$0xf]
        %v628 = vld [vmem:[#allocation7 + $0xc] sm:$0xf]
        %v629 = vld [vmem:[#allocation7 + $0x10] sm:$0xf]
        %v630 = vld [vmem:[#allocation7 + $0x14] sm:$0xf]
        %v631 = vld [vmem:[#allocation7 + $0x18] sm:$0xf]
        %v632 = vld [vmem:[#allocation7 + $0x1c] sm:$0xf]
        %v633 = vld [vmem:[#allocation7 + $0x20] sm:$0xf]
        %v634 = vld [vmem:[#allocation7 + $0x24] sm:$0xf]
        %v635 = vld [vmem:[#allocation7 + $0x28] sm:$0xf]
        %v636 = vld [vmem:[#allocation7 + $0x2c] sm:$0xf]
        %v637 = vld [vmem:[#allocation7 + $0x30] sm:$0xf]
        %v638 = vld [vmem:[#allocation7 + $0x34] sm:$0xf]
        %v639 = vld [vmem:[#allocation7 + $0x38] sm:$0xf]
        %v640 = vld [vmem:[#allocation7 + $0x3c] sm:$0xf]
        %v641 = vld [vmem:[%s3] sm:$0x1]
        %v643 = vlaneseq
        %v644 = vshrl.u32 %v643, 7
        %v645 = vsub.s32 0, %v644
        %v646 = vrot.slane %v641, %v645
        %v656 = vunpack.c.l.b16 %v617
        %v657 = vunpack.c.l.b16 %v618
        %v658 = vunpack.c.l.b16 %v619
        %v659 = vunpack.c.l.b16 %v620
        %v660 = vunpack.c.l.b16 %v621
        %v661 = vunpack.c.l.b16 %v622
        %v662 = vunpack.c.l.b16 %v623
        %v663 = vunpack.c.l.b16 %v624
        %v664 = vpack.c.b16 %v657, %v656
        %v665 = vpack.c.b16 %v659, %v658
        %v666 = vpack.c.b16 %v661, %v660
        %v667 = vpack.c.b16 %v663, %v662
        %v688 = vunpack.c.l.b16 %v625
        %v689 = vunpack.c.l.b16 %v626
        %v690 = vunpack.c.l.b16 %v627
        %v691 = vunpack.c.l.b16 %v628
        %v692 = vunpack.c.l.b16 %v629
        %v693 = vunpack.c.l.b16 %v630
        %v694 = vunpack.c.l.b16 %v631
        %v695 = vunpack.c.l.b16 %v632
        %v696 = vunpack.c.l.b16 %v633
        %v697 = vunpack.c.l.b16 %v634
        %v698 = vunpack.c.l.b16 %v635
        %v699 = vunpack.c.l.b16 %v636
        %v700 = vunpack.c.l.b16 %v637
        %v701 = vunpack.c.l.b16 %v638
        %v702 = vunpack.c.l.b16 %v639
        %v703 = vunpack.c.l.b16 %v640
        %v704 = vpack.c.b16 %v689, %v688
        %v705 = vpack.c.b16 %v691, %v690
        %v706 = vpack.c.b16 %v693, %v692
        %v707 = vpack.c.b16 %v695, %v694
        %v708 = vpack.c.b16 %v697, %v696
        %v709 = vpack.c.b16 %v699, %v698
        %v710 = vpack.c.b16 %v701, %v700
        %v711 = vpack.c.b16 %v703, %v702
        %720 = vmatprep.subr.bf16.mxu0 0
        %721 = vmatpush1.bf16.msra.mxu0 %v711
        %722 = vmatprep.subr.bf16.mxu0 0
        %723 = vmatpush1.bf16.msra.mxu0 %v710
        %724 = vmatprep.subr.bf16.mxu0 0
        %725 = vmatpush1.bf16.msra.mxu0 %v709
        %726 = vmatprep.subr.bf16.mxu0 0
        %727 = vmatpush1.bf16.msra.mxu0 %v708
        %728 = vmatprep.subr.bf16.mxu0 0
        %729 = vmatpush1.bf16.msra.mxu0 %v707
        %730 = vmatprep.subr.bf16.mxu0 0
        %731 = vmatpush1.bf16.msra.mxu0 %v706
        %732 = vmatprep.subr.bf16.mxu0 0
        %733 = vmatpush1.bf16.msra.mxu0 %v705
        %734 = vmatprep.subr.bf16.mxu0 0
        %735 = vmatpush1.bf16.msra.mxu0 %v704
        %736 = vmatprep.subr.bf16.mxu0 0
        %737 = vmatpush2.bf16.msra.mxu0 0
        %738 = vmatprep.subr.bf16.mxu0 0
        %739 = vmatpush2.bf16.msra.mxu0 0
        %740 = vmatprep.subr.bf16.mxu0 0
        %741 = vmatpush2.bf16.msra.mxu0 0
        %742 = vmatprep.subr.bf16.mxu0 0
        %743 = vmatpush2.bf16.msra.mxu0 0
        %744 = vmatprep.subr.bf16.mxu0 0
        %745 = vmatpush2.bf16.msra.mxu0 0
        %746 = vmatprep.subr.bf16.mxu0 0
        %747 = vmatpush2.bf16.msra.mxu0 0
        %748 = vmatprep.subr.bf16.mxu0 0
        %749 = vmatpush2.bf16.msra.mxu0 0
        %750 = vmatprep.subr.bf16.mxu0 0
        %751 = vmatpush2.bf16.msra.mxu0 0
        %752 = vmatprep.mubr.bf16.mxu0 0
        %753 = vmatmul.mubr.bf16.gmra.mxu0 %v664
        %v754 = vpop.f32.mrf.mxu0
        %v755 = vadd.f32 %v646, %v754
        %v756 = vpop.f32.mrf.mxu0
        %v757 = vpop.f32.mrf.mxu0
        %v758 = vadd.f32 %v646, %v757
        %v759 = vpop.f32.mrf.mxu0
        %760 = vmatprep.mubr.bf16.mxu0 0
        %761 = vmatmul.mubr.bf16.gmra.mxu0 %v665
        %v762 = vpop.f32.mrf.mxu0
        %v763 = vadd.f32 %v646, %v762
        %v764 = vpop.f32.mrf.mxu0
        %v765 = vpop.f32.mrf.mxu0
        %v766 = vadd.f32 %v646, %v765
        %v767 = vpop.f32.mrf.mxu0
        %768 = vmatprep.mubr.bf16.mxu0 0
        %769 = vmatmul.mubr.bf16.gmra.mxu0 %v666
        %v770 = vpop.f32.mrf.mxu0
        %v771 = vadd.f32 %v646, %v770
        %v772 = vpop.f32.mrf.mxu0
        %v773 = vpop.f32.mrf.mxu0
        %v774 = vadd.f32 %v646, %v773
        %v775 = vpop.f32.mrf.mxu0
        %776 = vmatprep.mubr.bf16.mxu0 0
        %777 = vmatmul.mubr.bf16.gmra.mxu0 %v667
        %v778 = vpop.f32.mrf.mxu0
        %v779 = vadd.f32 %v646, %v778
        %v780 = vpop.f32.mrf.mxu0
        %v781 = vpop.f32.mrf.mxu0
        %v782 = vadd.f32 %v646, %v781
        %v783 = vpop.f32.mrf.mxu0
        %784 = vdwg.mxu0
        %v785 = vmax.f32 %v755, 0.0
        %v786 = vmax.f32 %v758, 0.0
        %v787 = vmax.f32 %v763, 0.0
        %v788 = vmax.f32 %v766, 0.0
        %v789 = vmax.f32 %v771, 0.0
        %v790 = vmax.f32 %v774, 0.0
        %v791 = vmax.f32 %v779, 0.0
        %v792 = vmax.f32 %v782, 0.0
        %v793 = vpack.c.bf16 %v786, %v785
        %v794 = vpack.c.bf16 %v788, %v787
        %v795 = vpack.c.bf16 %v790, %v789
        %v796 = vpack.c.bf16 %v792, %v791
        %v797 = vld [vmem:[#allocation8] sm:$0xf]
        %v798 = vld [vmem:[#allocation8 + $0x4] sm:$0xf]
        %v799 = vld [vmem:[#allocation8 + $0x8] sm:$0xf]
        %v800 = vld [vmem:[#allocation8 + $0xc] sm:$0xf]
        %v801 = vld [vmem:[#allocation8 + $0x10] sm:$0xf]
        %v802 = vld [vmem:[#allocation8 + $0x14] sm:$0xf]
        %v803 = vld [vmem:[#allocation8 + $0x18] sm:$0xf]
        %v804 = vld [vmem:[#allocation8 + $0x1c] sm:$0xf]
        %v805 = vld [vmem:[#allocation8 + $0x20] sm:$0xf]
        %v806 = vld [vmem:[#allocation8 + $0x24] sm:$0xf]
        %v807 = vld [vmem:[#allocation8 + $0x28] sm:$0xf]
        %v808 = vld [vmem:[#allocation8 + $0x2c] sm:$0xf]
        %v809 = vld [vmem:[#allocation8 + $0x30] sm:$0xf]
        %v810 = vld [vmem:[#allocation8 + $0x34] sm:$0xf]
        %v811 = vld [vmem:[#allocation8 + $0x38] sm:$0xf]
        %v812 = vld [vmem:[#allocation8 + $0x3c] sm:$0xf]
        %v813 = vld [vmem:[%s5] sm:$0x1]
        %v815 = vlaneseq
        %v816 = vshrl.u32 %v815, 7
        %v817 = vsub.s32 0, %v816
        %v818 = vrot.slane %v813, %v817
        %v836 = vunpack.c.l.b16 %v797
        %v837 = vunpack.c.l.b16 %v798
        %v838 = vunpack.c.l.b16 %v799
        %v839 = vunpack.c.l.b16 %v800
        %v840 = vunpack.c.l.b16 %v801
        %v841 = vunpack.c.l.b16 %v802
        %v842 = vunpack.c.l.b16 %v803
        %v843 = vunpack.c.l.b16 %v804
        %v844 = vunpack.c.l.b16 %v805
        %v845 = vunpack.c.l.b16 %v806
        %v846 = vunpack.c.l.b16 %v807
        %v847 = vunpack.c.l.b16 %v808
        %v848 = vunpack.c.l.b16 %v809
        %v849 = vunpack.c.l.b16 %v810
        %v850 = vunpack.c.l.b16 %v811
        %v851 = vunpack.c.l.b16 %v812
        %v852 = vpack.c.b16 %v837, %v836
        %v853 = vpack.c.b16 %v839, %v838
        %v854 = vpack.c.b16 %v841, %v840
        %v855 = vpack.c.b16 %v843, %v842
        %v856 = vpack.c.b16 %v845, %v844
        %v857 = vpack.c.b16 %v847, %v846
        %v858 = vpack.c.b16 %v849, %v848
        %v859 = vpack.c.b16 %v851, %v850
        %868 = vmatprep.subr.bf16.mxu0 0
        %869 = vmatpush1.bf16.msra.mxu0 %v859
        %870 = vmatprep.subr.bf16.mxu0 0
        %871 = vmatpush1.bf16.msra.mxu0 %v858
        %872 = vmatprep.subr.bf16.mxu0 0
        %873 = vmatpush1.bf16.msra.mxu0 %v857
        %874 = vmatprep.subr.bf16.mxu0 0
        %875 = vmatpush1.bf16.msra.mxu0 %v856
        %876 = vmatprep.subr.bf16.mxu0 0
        %877 = vmatpush1.bf16.msra.mxu0 %v855
        %878 = vmatprep.subr.bf16.mxu0 0
        %879 = vmatpush1.bf16.msra.mxu0 %v854
        %880 = vmatprep.subr.bf16.mxu0 0
        %881 = vmatpush1.bf16.msra.mxu0 %v853
        %882 = vmatprep.subr.bf16.mxu0 0
        %883 = vmatpush1.bf16.msra.mxu0 %v852
        %884 = vmatprep.subr.bf16.mxu0 0
        %885 = vmatpush2.bf16.msra.mxu0 0
        %886 = vmatprep.subr.bf16.mxu0 0
        %887 = vmatpush2.bf16.msra.mxu0 0
        %888 = vmatprep.subr.bf16.mxu0 0
        %889 = vmatpush2.bf16.msra.mxu0 0
        %890 = vmatprep.subr.bf16.mxu0 0
        %891 = vmatpush2.bf16.msra.mxu0 0
        %892 = vmatprep.subr.bf16.mxu0 0
        %893 = vmatpush2.bf16.msra.mxu0 0
        %894 = vmatprep.subr.bf16.mxu0 0
        %895 = vmatpush2.bf16.msra.mxu0 0
        %896 = vmatprep.subr.bf16.mxu0 0
        %897 = vmatpush2.bf16.msra.mxu0 0
        %898 = vmatprep.subr.bf16.mxu0 0
        %899 = vmatpush2.bf16.msra.mxu0 0
        %900 = vmatprep.mubr.bf16.mxu0 0
        %901 = vmatmul.mubr.bf16.gmra.mxu0 %v793
        %v902 = vpop.f32.mrf.mxu0
        %v903 = vadd.f32 %v818, %v902
        %v904 = vpop.f32.mrf.mxu0
        %v905 = vpop.f32.mrf.mxu0
        %v906 = vadd.f32 %v818, %v905
        %v907 = vpop.f32.mrf.mxu0
        %908 = vmatprep.mubr.bf16.mxu0 0
        %909 = vmatmul.mubr.bf16.gmra.mxu0 %v794
        %v910 = vpop.f32.mrf.mxu0
        %v911 = vadd.f32 %v818, %v910
        %v912 = vpop.f32.mrf.mxu0
        %v913 = vpop.f32.mrf.mxu0
        %v914 = vadd.f32 %v818, %v913
        %v915 = vpop.f32.mrf.mxu0
        %916 = vmatprep.mubr.bf16.mxu0 0
        %917 = vmatmul.mubr.bf16.gmra.mxu0 %v795
        %v918 = vpop.f32.mrf.mxu0
        %v919 = vadd.f32 %v818, %v918
        %v920 = vpop.f32.mrf.mxu0
        %v921 = vpop.f32.mrf.mxu0
        %v922 = vadd.f32 %v818, %v921
        %v923 = vpop.f32.mrf.mxu0
        %924 = vmatprep.mubr.bf16.mxu0 0
        %925 = vmatmul.mubr.bf16.gmra.mxu0 %v796
        %v926 = vpop.f32.mrf.mxu0
        %v927 = vadd.f32 %v818, %v926
        %v928 = vpop.f32.mrf.mxu0
        %v929 = vpop.f32.mrf.mxu0
        %v930 = vadd.f32 %v818, %v929
        %v931 = vpop.f32.mrf.mxu0
        %932 = vdwg.mxu0
        %v933 = vmax.f32 %v903, 0.0
        %v934 = vmax.f32 %v906, 0.0
        %v935 = vmax.f32 %v911, 0.0
        %v936 = vmax.f32 %v914, 0.0
        %v937 = vmax.f32 %v919, 0.0
        %v938 = vmax.f32 %v922, 0.0
        %v939 = vmax.f32 %v927, 0.0
        %v940 = vmax.f32 %v930, 0.0
        %v941 = vpack.c.bf16 %v934, %v933
        %v942 = vpack.c.bf16 %v936, %v935
        %v943 = vpack.c.bf16 %v938, %v937
        %v944 = vpack.c.bf16 %v940, %v939
        %v945 = vld [vmem:[#allocation10] sm:$0xf]
        %v946 = vld [vmem:[#allocation10 + $0x4] sm:$0xf]
        %v947 = vld [vmem:[#allocation10 + $0x8] sm:$0xf]
        %v948 = vld [vmem:[#allocation10 + $0xc] sm:$0xf]
        %v949 = vld [vmem:[#allocation10 + $0x10] sm:$0xf]
        %v950 = vld [vmem:[#allocation10 + $0x14] sm:$0xf]
        %v951 = vld [vmem:[#allocation10 + $0x18] sm:$0xf]
        %v952 = vld [vmem:[#allocation10 + $0x1c] sm:$0xf]
        %v953 = vld [vmem:[#allocation10 + $0x20] sm:$0xf]
        %v954 = vld [vmem:[#allocation10 + $0x24] sm:$0xf]
        %v955 = vld [vmem:[#allocation10 + $0x28] sm:$0xf]
        %v956 = vld [vmem:[#allocation10 + $0x2c] sm:$0xf]
        %v957 = vld [vmem:[#allocation10 + $0x30] sm:$0xf]
        %v958 = vld [vmem:[#allocation10 + $0x34] sm:$0xf]
        %v959 = vld [vmem:[#allocation10 + $0x38] sm:$0xf]
        %v960 = vld [vmem:[#allocation10 + $0x3c] sm:$0xf]
        %v961 = vld [vmem:[%s7] sm:$0x1]
        %v963 = vlaneseq
        %v964 = vshrl.u32 %v963, 7
        %v965 = vsub.s32 0, %v964
        %v966 = vrot.slane %v961, %v965
        %v984 = vunpack.c.l.b16 %v945
        %v985 = vunpack.c.l.b16 %v946
        %v986 = vunpack.c.l.b16 %v947
        %v987 = vunpack.c.l.b16 %v948
        %v988 = vunpack.c.l.b16 %v949
        %v989 = vunpack.c.l.b16 %v950
        %v990 = vunpack.c.l.b16 %v951
        %v991 = vunpack.c.l.b16 %v952
        %v992 = vunpack.c.l.b16 %v953
        %v993 = vunpack.c.l.b16 %v954
        %v994 = vunpack.c.l.b16 %v955
        %v995 = vunpack.c.l.b16 %v956
        %v996 = vunpack.c.l.b16 %v957
        %v997 = vunpack.c.l.b16 %v958
        %v998 = vunpack.c.l.b16 %v959
        %v999 = vunpack.c.l.b16 %v960
        %v1000 = vpack.c.b16 %v985, %v984
        %v1001 = vpack.c.b16 %v987, %v986
        %v1002 = vpack.c.b16 %v989, %v988
        %v1003 = vpack.c.b16 %v991, %v990
        %v1004 = vpack.c.b16 %v993, %v992
        %v1005 = vpack.c.b16 %v995, %v994
        %v1006 = vpack.c.b16 %v997, %v996
        %v1007 = vpack.c.b16 %v999, %v998
        %1016 = vmatprep.subr.bf16.mxu0 0
        %1017 = vmatpush1.bf16.msra.mxu0 %v1007
        %1018 = vmatprep.subr.bf16.mxu0 0
        %1019 = vmatpush1.bf16.msra.mxu0 %v1006
        %1020 = vmatprep.subr.bf16.mxu0 0
        %1021 = vmatpush1.bf16.msra.mxu0 %v1005
        %1022 = vmatprep.subr.bf16.mxu0 0
        %1023 = vmatpush1.bf16.msra.mxu0 %v1004
        %1024 = vmatprep.subr.bf16.mxu0 0
        %1025 = vmatpush1.bf16.msra.mxu0 %v1003
        %1026 = vmatprep.subr.bf16.mxu0 0
        %1027 = vmatpush1.bf16.msra.mxu0 %v1002
        %1028 = vmatprep.subr.bf16.mxu0 0
        %1029 = vmatpush1.bf16.msra.mxu0 %v1001
        %1030 = vmatprep.subr.bf16.mxu0 0
        %1031 = vmatpush1.bf16.msra.mxu0 %v1000
        %1032 = vmatprep.subr.bf16.mxu0 0
        %1033 = vmatpush2.bf16.msra.mxu0 0
        %1034 = vmatprep.subr.bf16.mxu0 0
        %1035 = vmatpush2.bf16.msra.mxu0 0
        %1036 = vmatprep.subr.bf16.mxu0 0
        %1037 = vmatpush2.bf16.msra.mxu0 0
        %1038 = vmatprep.subr.bf16.mxu0 0
        %1039 = vmatpush2.bf16.msra.mxu0 0
        %1040 = vmatprep.subr.bf16.mxu0 0
        %1041 = vmatpush2.bf16.msra.mxu0 0
        %1042 = vmatprep.subr.bf16.mxu0 0
        %1043 = vmatpush2.bf16.msra.mxu0 0
        %1044 = vmatprep.subr.bf16.mxu0 0
        %1045 = vmatpush2.bf16.msra.mxu0 0
        %1046 = vmatprep.subr.bf16.mxu0 0
        %1047 = vmatpush2.bf16.msra.mxu0 0
        %1048 = vmatprep.mubr.bf16.mxu0 0
        %1049 = vmatmul.mubr.bf16.gmra.mxu0 %v941
        %v1050 = vpop.f32.mrf.mxu0
        %v1051 = vadd.f32 %v966, %v1050
        %v1052 = vpop.f32.mrf.mxu0
        %v1053 = vpop.f32.mrf.mxu0
        %v1054 = vadd.f32 %v966, %v1053
        %v1055 = vpop.f32.mrf.mxu0
        %1056 = vmatprep.mubr.bf16.mxu0 0
        %1057 = vmatmul.mubr.bf16.gmra.mxu0 %v942
        %v1058 = vpop.f32.mrf.mxu0
        %v1059 = vadd.f32 %v966, %v1058
        %v1060 = vpop.f32.mrf.mxu0
        %v1061 = vpop.f32.mrf.mxu0
        %v1062 = vadd.f32 %v966, %v1061
        %v1063 = vpop.f32.mrf.mxu0
        %1064 = vmatprep.mubr.bf16.mxu0 0
        %1065 = vmatmul.mubr.bf16.gmra.mxu0 %v943
        %v1066 = vpop.f32.mrf.mxu0
        %v1067 = vadd.f32 %v966, %v1066
        %v1068 = vpop.f32.mrf.mxu0
        %v1069 = vpop.f32.mrf.mxu0
        %v1070 = vadd.f32 %v966, %v1069
        %v1071 = vpop.f32.mrf.mxu0
        %1072 = vmatprep.mubr.bf16.mxu0 0
        %1073 = vmatmul.mubr.bf16.gmra.mxu0 %v944
        %v1074 = vpop.f32.mrf.mxu0
        %v1075 = vadd.f32 %v966, %v1074
        %v1076 = vpop.f32.mrf.mxu0
        %v1077 = vpop.f32.mrf.mxu0
        %v1078 = vadd.f32 %v966, %v1077
        %v1079 = vpop.f32.mrf.mxu0
        %1080 = vdwg.mxu0
        %v1081 = vmax.f32 %v1051, -4.0
        %v1082 = vmax.f32 %v1054, -4.0
        %v1083 = vmax.f32 %v1059, -4.0
        %v1084 = vmax.f32 %v1062, -4.0
        %v1085 = vmax.f32 %v1067, -4.0
        %v1086 = vmax.f32 %v1070, -4.0
        %v1087 = vmax.f32 %v1075, -4.0
        %v1088 = vmax.f32 %v1078, -4.0
        %v1089 = vmin.f32 %v1081, 15.0
        %v1090 = vmin.f32 %v1082, 15.0
        %v1091 = vmin.f32 %v1083, 15.0
        %v1092 = vmin.f32 %v1084, 15.0
        %v1093 = vmin.f32 %v1085, 15.0
        %v1094 = vmin.f32 %v1086, 15.0
        %v1095 = vmin.f32 %v1087, 15.0
        %v1096 = vmin.f32 %v1088, 15.0
        %v1097 = vmul.f32 %v1089, 1.442695
        %v1098 = vpow.pop %v1097
        %v1099 = vmul.f32 %v1090, 1.442695
        %v1100 = vpow.pop %v1099
        %v1101 = vmul.f32 %v1091, 1.442695
        %v1102 = vpow.pop %v1101
        %v1103 = vmul.f32 %v1092, 1.442695
        %v1104 = vpow.pop %v1103
        %v1105 = vmul.f32 %v1093, 1.442695
        %v1106 = vpow.pop %v1105
        %v1107 = vmul.f32 %v1094, 1.442695
        %v1108 = vpow.pop %v1107
        %v1109 = vmul.f32 %v1095, 1.442695
        %v1110 = vpow.pop %v1109
        %v1111 = vmul.f32 %v1096, 1.442695
        %v1112 = vpow.pop %v1111
        %v1113 = vld [vmem:[%s539] sm:$0xff]
        %v1114 = vld [vmem:[%s539 + $0x8] sm:$0xff]
        %v1115 = vld [vmem:[%s539 + $0x10] sm:$0xff]
        %v1116 = vld [vmem:[%s539 + $0x18] sm:$0xff]
        %v1117 = vld [vmem:[%s539 + $0x20] sm:$0xff]
        %v1118 = vld [vmem:[%s539 + $0x28] sm:$0xff]
        %v1119 = vld [vmem:[%s539 + $0x30] sm:$0xff]
        %v1120 = vld [vmem:[%s539 + $0x38] sm:$0xff]
        %v1121 = vmul.f32 %v1098, %v1113
        %v1122 = vmul.f32 %v1100, %v1114
        %v1123 = vmul.f32 %v1102, %v1115
        %v1124 = vmul.f32 %v1104, %v1116
        %v1125 = vmul.f32 %v1106, %v1117
        %v1126 = vmul.f32 %v1108, %v1118
        %v1127 = vmul.f32 %v1110, %v1119
        %v1128 = vmul.f32 %v1112, %v1120
        %1129 = vrot.lane.b32.xlu0 %v1121, 120
        %v1130 = vpop.permute.xlu0 %1129
        %1131 = vrot.lane.b32.xlu0 %v1122, 120
        %v1132 = vpop.permute.xlu0 %1131
        %1133 = vrot.lane.b32.xlu0 %v1123, 120
        %v1134 = vpop.permute.xlu0 %1133
        %1135 = vrot.lane.b32.xlu0 %v1124, 120
        %v1136 = vpop.permute.xlu0 %1135
        %1137 = vrot.lane.b32.xlu0 %v1125, 120
        %v1138 = vpop.permute.xlu0 %1137
        %1139 = vrot.lane.b32.xlu0 %v1126, 120
        %v1140 = vpop.permute.xlu0 %1139
        %1141 = vrot.lane.b32.xlu0 %v1127, 120
        %v1142 = vpop.permute.xlu0 %1141
        %1143 = vrot.lane.b32.xlu0 %v1128, 120
        %v1144 = vpop.permute.xlu0 %1143
        %1145 = vrot.lane.b32.xlu0 %v1121, 8
        %v1146 = vpop.permute.xlu0 %1145
        %1147 = vrot.lane.b32.xlu0 %v1122, 8
        %v1148 = vpop.permute.xlu0 %1147
        %1149 = vrot.lane.b32.xlu0 %v1123, 8
        %v1150 = vpop.permute.xlu0 %1149
        %1151 = vrot.lane.b32.xlu0 %v1124, 8
        %v1152 = vpop.permute.xlu0 %1151
        %1153 = vrot.lane.b32.xlu0 %v1125, 8
        %v1154 = vpop.permute.xlu0 %1153
        %1155 = vrot.lane.b32.xlu0 %v1126, 8
        %v1156 = vpop.permute.xlu0 %1155
        %1157 = vrot.lane.b32.xlu0 %v1127, 8
        %v1158 = vpop.permute.xlu0 %1157
        %1159 = vrot.lane.b32.xlu0 %v1128, 8
        %v1160 = vpop.permute.xlu0 %1159
        %v1161 = vadd.f32 %v1130, %v1146
        %v1162 = vadd.f32 %v1132, %v1148
        %v1163 = vadd.f32 %v1134, %v1150
        %v1164 = vadd.f32 %v1136, %v1152
        %v1165 = vadd.f32 %v1138, %v1154
        %v1166 = vadd.f32 %v1140, %v1156
        %v1167 = vadd.f32 %v1142, %v1158
        %v1168 = vadd.f32 %v1144, %v1160
        %v1169 = vadd.f32 %v1051, %v1161
        %v1170 = vadd.f32 %v1054, %v1162
        %v1171 = vadd.f32 %v1059, %v1163
        %v1172 = vadd.f32 %v1062, %v1164
        %v1173 = vadd.f32 %v1067, %v1165
        %v1174 = vadd.f32 %v1070, %v1166
        %v1175 = vadd.f32 %v1075, %v1167
        %v1176 = vadd.f32 %v1078, %v1168
        %v1177 = vpack.c.bf16 %v1170, %v1169
        %v1178 = vpack.c.bf16 %v1172, %v1171
        %v1179 = vpack.c.bf16 %v1174, %v1173
        %v1180 = vpack.c.bf16 %v1176, %v1175
        %v1185 = vunpack.c.l.b16 %v1177
        %v1186 = vunpack.c.h.b16 %v1177
        %v1187 = vunpack.c.l.b16 %v1178
        %v1188 = vunpack.c.h.b16 %v1178
        %v1189 = vunpack.c.l.b16 %v1179
        %v1190 = vunpack.c.h.b16 %v1179
        %v1191 = vunpack.c.l.b16 %v1180
        %v1192 = vunpack.c.h.b16 %v1180
        %v1193 = vpack.c.b16 %v1185, %v1185
        %v1194 = vpack.c.b16 %v1186, %v1186
        %v1195 = vpack.c.b16 %v1187, %v1187
        %v1196 = vpack.c.b16 %v1188, %v1188
        %v1197 = vpack.c.b16 %v1189, %v1189
        %v1198 = vpack.c.b16 %v1190, %v1190
        %v1199 = vpack.c.b16 %v1191, %v1191
        %v1200 = vpack.c.b16 %v1192, %v1192
        %v1209 = vadd.bf16 %v617, %v1193
        %v1210 = vadd.bf16 %v618, %v1194
        %v1211 = vadd.bf16 %v619, %v1195
        %v1212 = vadd.bf16 %v620, %v1196
        %v1213 = vadd.bf16 %v621, %v1197
        %v1214 = vadd.bf16 %v622, %v1198
        %v1215 = vadd.bf16 %v623, %v1199
        %v1216 = vadd.bf16 %v624, %v1200
        %v1217 = vld [vmem:[#allocation11] sm:$0xf]
        %v1218 = vld [vmem:[#allocation11 + $0x4] sm:$0xf]
        %v1219 = vld [vmem:[#allocation11 + $0x8] sm:$0xf]
        %v1220 = vld [vmem:[#allocation11 + $0xc] sm:$0xf]
        %v1221 = vld [vmem:[#allocation11 + $0x10] sm:$0xf]
        %v1222 = vld [vmem:[#allocation11 + $0x14] sm:$0xf]
        %v1223 = vld [vmem:[#allocation11 + $0x18] sm:$0xf]
        %v1224 = vld [vmem:[#allocation11 + $0x1c] sm:$0xf]
        %v1225 = vld [vmem:[#allocation11 + $0x20] sm:$0xf]
        %v1226 = vld [vmem:[#allocation11 + $0x24] sm:$0xf]
        %v1227 = vld [vmem:[#allocation11 + $0x28] sm:$0xf]
        %v1228 = vld [vmem:[#allocation11 + $0x2c] sm:$0xf]
        %v1229 = vld [vmem:[#allocation11 + $0x30] sm:$0xf]
        %v1230 = vld [vmem:[#allocation11 + $0x34] sm:$0xf]
        %v1231 = vld [vmem:[#allocation11 + $0x38] sm:$0xf]
        %v1232 = vld [vmem:[#allocation11 + $0x3c] sm:$0xf]
        %v1233 = vld [vmem:[%s9] sm:$0x1]
        %v1235 = vlaneseq
        %v1236 = vshrl.u32 %v1235, 7
        %v1237 = vsub.s32 0, %v1236
        %v1238 = vrot.slane %v1233, %v1237
        %v1248 = vunpack.c.l.b16 %v1209
        %v1249 = vunpack.c.l.b16 %v1210
        %v1250 = vunpack.c.l.b16 %v1211
        %v1251 = vunpack.c.l.b16 %v1212
        %v1252 = vunpack.c.l.b16 %v1213
        %v1253 = vunpack.c.l.b16 %v1214
        %v1254 = vunpack.c.l.b16 %v1215
        %v1255 = vunpack.c.l.b16 %v1216
        %v1256 = vpack.c.b16 %v1249, %v1248
        %v1257 = vpack.c.b16 %v1251, %v1250
        %v1258 = vpack.c.b16 %v1253, %v1252
        %v1259 = vpack.c.b16 %v1255, %v1254
        %v1280 = vunpack.c.l.b16 %v1217
        %v1281 = vunpack.c.l.b16 %v1218
        %v1282 = vunpack.c.l.b16 %v1219
        %v1283 = vunpack.c.l.b16 %v1220
        %v1284 = vunpack.c.l.b16 %v1221
        %v1285 = vunpack.c.l.b16 %v1222
        %v1286 = vunpack.c.l.b16 %v1223
        %v1287 = vunpack.c.l.b16 %v1224
        %v1288 = vunpack.c.l.b16 %v1225
        %v1289 = vunpack.c.l.b16 %v1226
        %v1290 = vunpack.c.l.b16 %v1227
        %v1291 = vunpack.c.l.b16 %v1228
        %v1292 = vunpack.c.l.b16 %v1229
        %v1293 = vunpack.c.l.b16 %v1230
        %v1294 = vunpack.c.l.b16 %v1231
        %v1295 = vunpack.c.l.b16 %v1232
        %v1296 = vpack.c.b16 %v1281, %v1280
        %v1297 = vpack.c.b16 %v1283, %v1282
        %v1298 = vpack.c.b16 %v1285, %v1284
        %v1299 = vpack.c.b16 %v1287, %v1286
        %v1300 = vpack.c.b16 %v1289, %v1288
        %v1301 = vpack.c.b16 %v1291, %v1290
        %v1302 = vpack.c.b16 %v1293, %v1292
        %v1303 = vpack.c.b16 %v1295, %v1294
        %1312 = vmatprep.subr.bf16.mxu0 0
        %1313 = vmatpush1.bf16.msra.mxu0 %v1303
        %1314 = vmatprep.subr.bf16.mxu0 0
        %1315 = vmatpush1.bf16.msra.mxu0 %v1302
        %1316 = vmatprep.subr.bf16.mxu0 0
        %1317 = vmatpush1.bf16.msra.mxu0 %v1301
        %1318 = vmatprep.subr.bf16.mxu0 0
        %1319 = vmatpush1.bf16.msra.mxu0 %v1300
        %1320 = vmatprep.subr.bf16.mxu0 0
        %1321 = vmatpush1.bf16.msra.mxu0 %v1299
        %1322 = vmatprep.subr.bf16.mxu0 0
        %1323 = vmatpush1.bf16.msra.mxu0 %v1298
        %1324 = vmatprep.subr.bf16.mxu0 0
        %1325 = vmatpush1.bf16.msra.mxu0 %v1297
        %1326 = vmatprep.subr.bf16.mxu0 0
        %1327 = vmatpush1.bf16.msra.mxu0 %v1296
        %1328 = vmatprep.subr.bf16.mxu0 0
        %1329 = vmatpush2.bf16.msra.mxu0 0
        %1330 = vmatprep.subr.bf16.mxu0 0
        %1331 = vmatpush2.bf16.msra.mxu0 0
        %1332 = vmatprep.subr.bf16.mxu0 0
        %1333 = vmatpush2.bf16.msra.mxu0 0
        %1334 = vmatprep.subr.bf16.mxu0 0
        %1335 = vmatpush2.bf16.msra.mxu0 0
        %1336 = vmatprep.subr.bf16.mxu0 0
        %1337 = vmatpush2.bf16.msra.mxu0 0
        %1338 = vmatprep.subr.bf16.mxu0 0
        %1339 = vmatpush2.bf16.msra.mxu0 0
        %1340 = vmatprep.subr.bf16.mxu0 0
        %1341 = vmatpush2.bf16.msra.mxu0 0
        %1342 = vmatprep.subr.bf16.mxu0 0
        %1343 = vmatpush2.bf16.msra.mxu0 0
        %1344 = vmatprep.mubr.bf16.mxu0 0
        %1345 = vmatmul.mubr.bf16.gmra.mxu0 %v1256
        %v1346 = vpop.f32.mrf.mxu0
        %v1347 = vadd.f32 %v1238, %v1346
        %v1348 = vpop.f32.mrf.mxu0
        %v1349 = vpop.f32.mrf.mxu0
        %v1350 = vadd.f32 %v1238, %v1349
        %v1351 = vpop.f32.mrf.mxu0
        %1352 = vmatprep.mubr.bf16.mxu0 0
        %1353 = vmatmul.mubr.bf16.gmra.mxu0 %v1257
        %v1354 = vpop.f32.mrf.mxu0
        %v1355 = vadd.f32 %v1238, %v1354
        %v1356 = vpop.f32.mrf.mxu0
        %v1357 = vpop.f32.mrf.mxu0
        %v1358 = vadd.f32 %v1238, %v1357
        %v1359 = vpop.f32.mrf.mxu0
        %1360 = vmatprep.mubr.bf16.mxu0 0
        %1361 = vmatmul.mubr.bf16.gmra.mxu0 %v1258
        %v1362 = vpop.f32.mrf.mxu0
        %v1363 = vadd.f32 %v1238, %v1362
        %v1364 = vpop.f32.mrf.mxu0
        %v1365 = vpop.f32.mrf.mxu0
        %v1366 = vadd.f32 %v1238, %v1365
        %v1367 = vpop.f32.mrf.mxu0
        %1368 = vmatprep.mubr.bf16.mxu0 0
        %1369 = vmatmul.mubr.bf16.gmra.mxu0 %v1259
        %v1370 = vpop.f32.mrf.mxu0
        %v1371 = vadd.f32 %v1238, %v1370
        %v1372 = vpop.f32.mrf.mxu0
        %v1373 = vpop.f32.mrf.mxu0
        %v1374 = vadd.f32 %v1238, %v1373
        %v1375 = vpop.f32.mrf.mxu0
        %1376 = vdwg.mxu0
        %v1377 = vmax.f32 %v1347, 0.0
        %v1378 = vmax.f32 %v1350, 0.0
        %v1379 = vmax.f32 %v1355, 0.0
        %v1380 = vmax.f32 %v1358, 0.0
        %v1381 = vmax.f32 %v1363, 0.0
        %v1382 = vmax.f32 %v1366, 0.0
        %v1383 = vmax.f32 %v1371, 0.0
        %v1384 = vmax.f32 %v1374, 0.0
        %v1385 = vpack.c.bf16 %v1378, %v1377
        %v1386 = vpack.c.bf16 %v1380, %v1379
        %v1387 = vpack.c.bf16 %v1382, %v1381
        %v1388 = vpack.c.bf16 %v1384, %v1383
        %v1389 = vld [vmem:[#allocation13] sm:$0xf]
        %v1390 = vld [vmem:[#allocation13 + $0x4] sm:$0xf]
        %v1391 = vld [vmem:[#allocation13 + $0x8] sm:$0xf]
        %v1392 = vld [vmem:[#allocation13 + $0xc] sm:$0xf]
        %v1393 = vld [vmem:[#allocation13 + $0x10] sm:$0xf]
        %v1394 = vld [vmem:[#allocation13 + $0x14] sm:$0xf]
        %v1395 = vld [vmem:[#allocation13 + $0x18] sm:$0xf]
        %v1396 = vld [vmem:[#allocation13 + $0x1c] sm:$0xf]
        %v1397 = vld [vmem:[#allocation13 + $0x20] sm:$0xf]
        %v1398 = vld [vmem:[#allocation13 + $0x24] sm:$0xf]
        %v1399 = vld [vmem:[#allocation13 + $0x28] sm:$0xf]
        %v1400 = vld [vmem:[#allocation13 + $0x2c] sm:$0xf]
        %v1401 = vld [vmem:[#allocation13 + $0x30] sm:$0xf]
        %v1402 = vld [vmem:[#allocation13 + $0x34] sm:$0xf]
        %v1403 = vld [vmem:[#allocation13 + $0x38] sm:$0xf]
        %v1404 = vld [vmem:[#allocation13 + $0x3c] sm:$0xf]
        %v1405 = vld [vmem:[%s11] sm:$0x1]
        %v1407 = vlaneseq
        %v1408 = vshrl.u32 %v1407, 7
        %v1409 = vsub.s32 0, %v1408
        %v1410 = vrot.slane %v1405, %v1409
        %v1428 = vunpack.c.l.b16 %v1389
        %v1429 = vunpack.c.l.b16 %v1390
        %v1430 = vunpack.c.l.b16 %v1391
        %v1431 = vunpack.c.l.b16 %v1392
        %v1432 = vunpack.c.l.b16 %v1393
        %v1433 = vunpack.c.l.b16 %v1394
        %v1434 = vunpack.c.l.b16 %v1395
        %v1435 = vunpack.c.l.b16 %v1396
        %v1436 = vunpack.c.l.b16 %v1397
        %v1437 = vunpack.c.l.b16 %v1398
        %v1438 = vunpack.c.l.b16 %v1399
        %v1439 = vunpack.c.l.b16 %v1400
        %v1440 = vunpack.c.l.b16 %v1401
        %v1441 = vunpack.c.l.b16 %v1402
        %v1442 = vunpack.c.l.b16 %v1403
        %v1443 = vunpack.c.l.b16 %v1404
        %v1444 = vpack.c.b16 %v1429, %v1428
        %v1445 = vpack.c.b16 %v1431, %v1430
        %v1446 = vpack.c.b16 %v1433, %v1432
        %v1447 = vpack.c.b16 %v1435, %v1434
        %v1448 = vpack.c.b16 %v1437, %v1436
        %v1449 = vpack.c.b16 %v1439, %v1438
        %v1450 = vpack.c.b16 %v1441, %v1440
        %v1451 = vpack.c.b16 %v1443, %v1442
        %1460 = vmatprep.subr.bf16.mxu0 0
        %1461 = vmatpush1.bf16.msra.mxu0 %v1451
        %1462 = vmatprep.subr.bf16.mxu0 0
        %1463 = vmatpush1.bf16.msra.mxu0 %v1450
        %1464 = vmatprep.subr.bf16.mxu0 0
        %1465 = vmatpush1.bf16.msra.mxu0 %v1449
        %1466 = vmatprep.subr.bf16.mxu0 0
        %1467 = vmatpush1.bf16.msra.mxu0 %v1448
        %1468 = vmatprep.subr.bf16.mxu0 0
        %1469 = vmatpush1.bf16.msra.mxu0 %v1447
        %1470 = vmatprep.subr.bf16.mxu0 0
        %1471 = vmatpush1.bf16.msra.mxu0 %v1446
        %1472 = vmatprep.subr.bf16.mxu0 0
        %1473 = vmatpush1.bf16.msra.mxu0 %v1445
        %1474 = vmatprep.subr.bf16.mxu0 0
        %1475 = vmatpush1.bf16.msra.mxu0 %v1444
        %1476 = vmatprep.subr.bf16.mxu0 0
        %1477 = vmatpush2.bf16.msra.mxu0 0
        %1478 = vmatprep.subr.bf16.mxu0 0
        %1479 = vmatpush2.bf16.msra.mxu0 0
        %1480 = vmatprep.subr.bf16.mxu0 0
        %1481 = vmatpush2.bf16.msra.mxu0 0
        %1482 = vmatprep.subr.bf16.mxu0 0
        %1483 = vmatpush2.bf16.msra.mxu0 0
        %1484 = vmatprep.subr.bf16.mxu0 0
        %1485 = vmatpush2.bf16.msra.mxu0 0
        %1486 = vmatprep.subr.bf16.mxu0 0
        %1487 = vmatpush2.bf16.msra.mxu0 0
        %1488 = vmatprep.subr.bf16.mxu0 0
        %1489 = vmatpush2.bf16.msra.mxu0 0
        %1490 = vmatprep.subr.bf16.mxu0 0
        %1491 = vmatpush2.bf16.msra.mxu0 0
        %1492 = vmatprep.mubr.bf16.mxu0 0
        %1493 = vmatmul.mubr.bf16.gmra.mxu0 %v1385
        %v1494 = vpop.f32.mrf.mxu0
        %v1495 = vadd.f32 %v1410, %v1494
        %v1496 = vpop.f32.mrf.mxu0
        %v1497 = vpop.f32.mrf.mxu0
        %v1498 = vadd.f32 %v1410, %v1497
        %v1499 = vpop.f32.mrf.mxu0
        %1500 = vmatprep.mubr.bf16.mxu0 0
        %1501 = vmatmul.mubr.bf16.gmra.mxu0 %v1386
        %v1502 = vpop.f32.mrf.mxu0
        %v1503 = vadd.f32 %v1410, %v1502
        %v1504 = vpop.f32.mrf.mxu0
        %v1505 = vpop.f32.mrf.mxu0
        %v1506 = vadd.f32 %v1410, %v1505
        %v1507 = vpop.f32.mrf.mxu0
        %1508 = vmatprep.mubr.bf16.mxu0 0
        %1509 = vmatmul.mubr.bf16.gmra.mxu0 %v1387
        %v1510 = vpop.f32.mrf.mxu0
        %v1511 = vadd.f32 %v1410, %v1510
        %v1512 = vpop.f32.mrf.mxu0
        %v1513 = vpop.f32.mrf.mxu0
        %v1514 = vadd.f32 %v1410, %v1513
        %v1515 = vpop.f32.mrf.mxu0
        %1516 = vmatprep.mubr.bf16.mxu0 0
        %1517 = vmatmul.mubr.bf16.gmra.mxu0 %v1388
        %v1518 = vpop.f32.mrf.mxu0
        %v1519 = vadd.f32 %v1410, %v1518
        %v1520 = vpop.f32.mrf.mxu0
        %v1521 = vpop.f32.mrf.mxu0
        %v1522 = vadd.f32 %v1410, %v1521
        %v1523 = vpop.f32.mrf.mxu0
        %1524 = vdwg.mxu0
        %v1525 = vmax.f32 %v1495, 0.0
        %v1526 = vmax.f32 %v1498, 0.0
        %v1527 = vmax.f32 %v1503, 0.0
        %v1528 = vmax.f32 %v1506, 0.0
        %v1529 = vmax.f32 %v1511, 0.0
        %v1530 = vmax.f32 %v1514, 0.0
        %v1531 = vmax.f32 %v1519, 0.0
        %v1532 = vmax.f32 %v1522, 0.0
        %v1533 = vpack.c.bf16 %v1526, %v1525
        %v1534 = vpack.c.bf16 %v1528, %v1527
        %v1535 = vpack.c.bf16 %v1530, %v1529
        %v1536 = vpack.c.bf16 %v1532, %v1531
        %v1537 = vld [vmem:[#allocation14] sm:$0xf]
        %v1538 = vld [vmem:[#allocation14 + $0x4] sm:$0xf]
        %v1539 = vld [vmem:[#allocation14 + $0x8] sm:$0xf]
        %v1540 = vld [vmem:[#allocation14 + $0xc] sm:$0xf]
        %v1541 = vld [vmem:[#allocation14 + $0x10] sm:$0xf]
        %v1542 = vld [vmem:[#allocation14 + $0x14] sm:$0xf]
        %v1543 = vld [vmem:[#allocation14 + $0x18] sm:$0xf]
        %v1544 = vld [vmem:[#allocation14 + $0x1c] sm:$0xf]
        %v1545 = vld [vmem:[#allocation14 + $0x20] sm:$0xf]
        %v1546 = vld [vmem:[#allocation14 + $0x24] sm:$0xf]
        %v1547 = vld [vmem:[#allocation14 + $0x28] sm:$0xf]
        %v1548 = vld [vmem:[#allocation14 + $0x2c] sm:$0xf]
        %v1549 = vld [vmem:[#allocation14 + $0x30] sm:$0xf]
        %v1550 = vld [vmem:[#allocation14 + $0x34] sm:$0xf]
        %v1551 = vld [vmem:[#allocation14 + $0x38] sm:$0xf]
        %v1552 = vld [vmem:[#allocation14 + $0x3c] sm:$0xf]
        %v1553 = vld [vmem:[%s13] sm:$0x1]
        %v1555 = vlaneseq
        %v1556 = vshrl.u32 %v1555, 7
        %v1557 = vsub.s32 0, %v1556
        %v1558 = vrot.slane %v1553, %v1557
        %v1576 = vunpack.c.l.b16 %v1537
        %v1577 = vunpack.c.l.b16 %v1538
        %v1578 = vunpack.c.l.b16 %v1539
        %v1579 = vunpack.c.l.b16 %v1540
        %v1580 = vunpack.c.l.b16 %v1541
        %v1581 = vunpack.c.l.b16 %v1542
        %v1582 = vunpack.c.l.b16 %v1543
        %v1583 = vunpack.c.l.b16 %v1544
        %v1584 = vunpack.c.l.b16 %v1545
        %v1585 = vunpack.c.l.b16 %v1546
        %v1586 = vunpack.c.l.b16 %v1547
        %v1587 = vunpack.c.l.b16 %v1548
        %v1588 = vunpack.c.l.b16 %v1549
        %v1589 = vunpack.c.l.b16 %v1550
        %v1590 = vunpack.c.l.b16 %v1551
        %v1591 = vunpack.c.l.b16 %v1552
        %v1592 = vpack.c.b16 %v1577, %v1576
        %v1593 = vpack.c.b16 %v1579, %v1578
        %v1594 = vpack.c.b16 %v1581, %v1580
        %v1595 = vpack.c.b16 %v1583, %v1582
        %v1596 = vpack.c.b16 %v1585, %v1584
        %v1597 = vpack.c.b16 %v1587, %v1586
        %v1598 = vpack.c.b16 %v1589, %v1588
        %v1599 = vpack.c.b16 %v1591, %v1590
        %1608 = vmatprep.subr.bf16.mxu0 0
        %1609 = vmatpush1.bf16.msra.mxu0 %v1599
        %1610 = vmatprep.subr.bf16.mxu0 0
        %1611 = vmatpush1.bf16.msra.mxu0 %v1598
        %1612 = vmatprep.subr.bf16.mxu0 0
        %1613 = vmatpush1.bf16.msra.mxu0 %v1597
        %1614 = vmatprep.subr.bf16.mxu0 0
        %1615 = vmatpush1.bf16.msra.mxu0 %v1596
        %1616 = vmatprep.subr.bf16.mxu0 0
        %1617 = vmatpush1.bf16.msra.mxu0 %v1595
        %1618 = vmatprep.subr.bf16.mxu0 0
        %1619 = vmatpush1.bf16.msra.mxu0 %v1594
        %1620 = vmatprep.subr.bf16.mxu0 0
        %1621 = vmatpush1.bf16.msra.mxu0 %v1593
        %1622 = vmatprep.subr.bf16.mxu0 0
        %1623 = vmatpush1.bf16.msra.mxu0 %v1592
        %1624 = vmatprep.subr.bf16.mxu0 0
        %1625 = vmatpush2.bf16.msra.mxu0 0
        %1626 = vmatprep.subr.bf16.mxu0 0
        %1627 = vmatpush2.bf16.msra.mxu0 0
        %1628 = vmatprep.subr.bf16.mxu0 0
        %1629 = vmatpush2.bf16.msra.mxu0 0
        %1630 = vmatprep.subr.bf16.mxu0 0
        %1631 = vmatpush2.bf16.msra.mxu0 0
        %1632 = vmatprep.subr.bf16.mxu0 0
        %1633 = vmatpush2.bf16.msra.mxu0 0
        %1634 = vmatprep.subr.bf16.mxu0 0
        %1635 = vmatpush2.bf16.msra.mxu0 0
        %1636 = vmatprep.subr.bf16.mxu0 0
        %1637 = vmatpush2.bf16.msra.mxu0 0
        %1638 = vmatprep.subr.bf16.mxu0 0
        %1639 = vmatpush2.bf16.msra.mxu0 0
        %1640 = vmatprep.mubr.bf16.mxu0 0
        %1641 = vmatmul.mubr.bf16.gmra.mxu0 %v1533
        %v1642 = vpop.f32.mrf.mxu0
        %v1643 = vadd.f32 %v1558, %v1642
        %v1644 = vpop.f32.mrf.mxu0
        %v1645 = vpop.f32.mrf.mxu0
        %v1646 = vadd.f32 %v1558, %v1645
        %v1647 = vpop.f32.mrf.mxu0
        %1648 = vmatprep.mubr.bf16.mxu0 0
        %1649 = vmatmul.mubr.bf16.gmra.mxu0 %v1534
        %v1650 = vpop.f32.mrf.mxu0
        %v1651 = vadd.f32 %v1558, %v1650
        %v1652 = vpop.f32.mrf.mxu0
        %v1653 = vpop.f32.mrf.mxu0
        %v1654 = vadd.f32 %v1558, %v1653
        %v1655 = vpop.f32.mrf.mxu0
        %1656 = vmatprep.mubr.bf16.mxu0 0
        %1657 = vmatmul.mubr.bf16.gmra.mxu0 %v1535
        %v1658 = vpop.f32.mrf.mxu0
        %v1659 = vadd.f32 %v1558, %v1658
        %v1660 = vpop.f32.mrf.mxu0
        %v1661 = vpop.f32.mrf.mxu0
        %v1662 = vadd.f32 %v1558, %v1661
        %v1663 = vpop.f32.mrf.mxu0
        %1664 = vmatprep.mubr.bf16.mxu0 0
        %1665 = vmatmul.mubr.bf16.gmra.mxu0 %v1536
        %v1666 = vpop.f32.mrf.mxu0
        %v1667 = vadd.f32 %v1558, %v1666
        %v1668 = vpop.f32.mrf.mxu0
        %v1669 = vpop.f32.mrf.mxu0
        %v1670 = vadd.f32 %v1558, %v1669
        %v1671 = vpop.f32.mrf.mxu0
        %1672 = vdwg.mxu0
        %v1673 = vtanh.pop %v1643
        %v1674 = vtanh.pop %v1646
        %v1675 = vtanh.pop %v1651
        %v1676 = vtanh.pop %v1654
        %v1677 = vtanh.pop %v1659
        %v1678 = vtanh.pop %v1662
        %v1679 = vtanh.pop %v1667
        %v1680 = vtanh.pop %v1670
        %v1681 = vlaneseq
        %v1682 = vand.u32 %v1681, 127
        %vm1683 = vcmp.ge.s32.totalorder %v1682, 32
        %vm1684 = vcmp.lt.s32.totalorder %v1682, 40
        %vm1685 = vmand %vm1683, %vm1684
        %v1686 = vsel %vm1685, %v1098, %v1051
        %v1687 = vsel %vm1685, %v1100, %v1054
        %v1688 = vsel %vm1685, %v1102, %v1059
        %v1689 = vsel %vm1685, %v1104, %v1062
        %v1690 = vsel %vm1685, %v1106, %v1067
        %v1691 = vsel %vm1685, %v1108, %v1070
        %v1692 = vsel %vm1685, %v1110, %v1075
        %v1693 = vsel %vm1685, %v1112, %v1078
        %v1694 = vadd.f32 %v1673, %v1686
        %v1695 = vadd.f32 %v1674, %v1687
        %v1696 = vadd.f32 %v1675, %v1688
        %v1697 = vadd.f32 %v1676, %v1689
        %v1698 = vadd.f32 %v1677, %v1690
        %v1699 = vadd.f32 %v1678, %v1691
        %v1700 = vadd.f32 %v1679, %v1692
        %v1701 = vadd.f32 %v1680, %v1693
        %1702 = vst [vmem:[%s612] sm:$0xff] %v1694
        %1703 = vst [vmem:[%s612 + $0x8] sm:$0xff] %v1695
        %1704 = vst [vmem:[%s612 + $0x10] sm:$0xff] %v1696
        %1705 = vst [vmem:[%s612 + $0x18] sm:$0xff] %v1697
        %1706 = vst [vmem:[%s612 + $0x20] sm:$0xff] %v1698
        %1707 = vst [vmem:[%s612 + $0x28] sm:$0xff] %v1699
        %1708 = vst [vmem:[%s612 + $0x30] sm:$0xff] %v1700
        %1709 = vst [vmem:[%s612 + $0x38] sm:$0xff] %v1701
        %s1710 = sand.u32 %s349, 1
        %s1711 = scalar_lea.sflag [#allocation4], %s1710
        %s1712 = sand.u32 %s349, 1
        %s1713 = smul.addr %s1712, 64
        %s1714 = scalar_lea.vmem [#allocation16], %s1713
        // Predicated region
        $region109: #{tpu_custom_call.1} parent=75 // pred_check
          %p1715 = pneg %p359
        $region110: #{tpu_custom_call.1} parent=75 // pred_check_branch
          %1717 = sbr.rel (%p1715) target = $region112
        $region111: #{tpu_custom_call.1} parent=75 // pred_region
          %s1718 = smul.u32 8, %s37
          %s1720 = ssub.s32 1024, 1024
          %1721 = vsyncadd %s1711, %s1720
          %s1722 = smul.addr %s1718, 128
          %s1723 = scalar_lea.hbm %s14, %s1722
          %s1724 = sshll.u32 %s1714, 4
          %s1725 = int_to_ptr.vmem [resolvable:$true] %s1724
          %1730 = dma.vmem_to_hbm [thread:$0]  %s1725, 1024, %s1723, %s1711, 128, 128, 8
        $region112: #{tpu_custom_call.1} parent=75 // pred_fallthru
          _
      $region76: #{tpu_custom_call.1} parent=5 // pred_fallthru
        _
      %p1731 = scmp.le.s32.totalorder 2, %s32
      // Predicated region
      $region113: #{tpu_custom_call.1} parent=5 // pred_check
        %p1732 = pneg %p1731
      $region114: #{tpu_custom_call.1} parent=5 // pred_check_branch
        %1734 = sbr.rel (%p1732) target = $region116
      $region115: #{tpu_custom_call.1} parent=5 // pred_region
        %s1735 = ssub.s32 %s32, 2
        // Predicated region
        $region117: #{tpu_custom_call.1} parent=115 // pred_check
          %p1736 = pneg %p365
        $region118: #{tpu_custom_call.1} parent=115 // pred_check_branch
          %1738 = sbr.rel (%p1736) target = $region120
        $region119: #{tpu_custom_call.1} parent=115 // pred_region
          %s1739 = sand.u32 %s350, 1
          %s1740 = scalar_lea.sflag [#allocation4], %s1739
          %s1741 = sand.u32 %s350, 1
          %s1742 = smul.addr %s1741, 64
          %s1743 = scalar_lea.vmem [#allocation16], %s1742
          %1744 = dma.done %s1740, 1024
        $region120: #{tpu_custom_call.1} parent=115 // pred_fallthru
          _
      $region116: #{tpu_custom_call.1} parent=5 // pred_fallthru
        _
    $region6: #{tpu_custom_call.1} parent=1 // loop_footer
      %s36 = sadd.s32 1, %s32
    $region7: #{tpu_custom_call.1} parent=1 // loop_footer_branch
      %31 = sbr.rel target = $region3
    $region8: #{tpu_custom_call.1} parent=1 // loop_exit
      _
    %1745 = vsyncpa [#allocation3], 1
    %s1746 = scalar_lea.sflag [#allocation3], 1
    %1747 = vsyncpa %s1746, 1
    %1748 = vsyncpa [#allocation6], 1
    %s1749 = scalar_lea.sflag [#allocation6], 1
    %1750 = vsyncpa %s1749, 1
    %1751 = vsyncpa [#allocation9], 1
    %1752 = vsyncpa [#allocation12], 1
    %1753 = vsyncpa [#allocation15], 1
    %1754 = vsyncpa [#allocation4], 1
    %s1755 = scalar_lea.sflag [#allocation4], 1
    %1756 = vsyncpa %s1755, 1

// kernel: tpu_custom_call.1
$region0: #{tpu_custom_call.1}
  #allocation0 [shape = 'u32[]', space=smem, size = 0x4, offset = 0x4, fixed_abs, tag = 'smem constant byte address 0x4 - core index']
  #allocation1 [shape = 'u32[144,128]{1,0:T(1,128)}', space=vmem, size = 0x12000, scoped, tag = 'internal scratch']
  %s0 = inlined_call_operand.hbm [shape: bf16[256,128], index: 0, kind: input, shape index: {}]
  %s1 = inlined_call_operand.hbm [shape: f32[256,128], index: 1, kind: input, shape index: {}]
  %s2 = inlined_call_operand.hbm [shape: bf16[128,128], index: 2, kind: input, shape index: {}]
  %s3 = inlined_call_operand.vmem [shape: f32[1,128], index: 3, kind: input, shape index: {}]
  %s4 = inlined_call_operand.hbm [shape: bf16[128,128], index: 4, kind: input, shape index: {}]
  %s5 = inlined_call_operand.vmem [shape: f32[1,128], index: 5, kind: input, shape index: {}]
  %s6 = inlined_call_operand.hbm [shape: bf16[128,128], index: 6, kind: input, shape index: {}]
  %s7 = inlined_call_operand.vmem [shape: f32[1,128], index: 7, kind: input, shape index: {}]
  %s8 = inlined_call_operand.hbm [shape: bf16[128,128], index: 8, kind: input, shape index: {}]
  %s9 = inlined_call_operand.vmem [shape: f32[1,128], index: 9, kind: input, shape index: {}]
  %s10 = inlined_call_operand.hbm [shape: bf16[128,128], index: 10, kind: input, shape index: {}]
  %s11 = inlined_call_operand.vmem [shape: f32[1,128], index: 11, kind: input, shape index: {}]
  %s12 = inlined_call_operand.hbm [shape: bf16[128,128], index: 12, kind: input, shape index: {}]
  %s13 = inlined_call_operand.vmem [shape: f32[1,128], index: 13, kind: input, shape index: {}]
  %s14 = inlined_call_operand.hbm [shape: f32[256,128], index: 14, kind: output, shape index: {}]
  %s15 = sld [smem:[#allocation0]]
  $region121: #{tpu_custom_call.1} parent=0
    _
  %s17 = ssub.s32 1, %s15
  %s18 = scalar_select 0, %s17, %s15
  $region1: #{tpu_custom_call.1} parent=0
    #allocation2 [shape = 'u8[32768]{0}', space=vmem, size = 0x8000, scoped, tag = 'input window, operand 0']
    #allocation3 [shape = 's32[2]{0}', space=sflag, size = 0x8, scoped, tag = 'scoped memory for tpu_custom_call.1']
    #allocation4 [shape = 's32[2]{0}', space=sflag, size = 0x8, scoped, tag = 'scoped memory for tpu_custom_call.1']
    #allocation5 [shape = 'u8[65536]{0}', space=vmem, size = 0x10000, scoped, tag = 'input window, operand 1']
    #allocation6 [shape = 's32[2]{0}', space=sflag, size = 0x8, scoped, tag = 'scoped memory for tpu_custom_call.1']
    #allocation7 [shape = 'u8[32768]{0}', space=vmem, size = 0x8000, scoped, tag = 'input window, operand 2, single buffered']
    #allocation8 [shape = 'u8[32768]{0}', space=vmem, size = 0x8000, scoped, tag = 'input window, operand 4, single buffered']
    #allocation9 [shape = 's32[1]{0}', space=sflag, size = 0x4, scoped, tag = 'scoped memory for tpu_custom_call.1']
    #allocation10 [shape = 'u8[32768]{0}', space=vmem, size = 0x8000, scoped, tag = 'input window, operand 6, single buffered']
    #allocation11 [shape = 'u8[32768]{0}', space=vmem, size = 0x8000, scoped, tag = 'input window, operand 8, single buffered']
    #allocation12 [shape = 's32[1]{0}', space=sflag, size = 0x4, scoped, tag = 'scoped memory for tpu_custom_call.1']
    #allocation13 [shape = 'u8[32768]{0}', space=vmem, size = 0x8000, scoped, tag = 'input window, operand 10, single buffered']
    #allocation14 [shape = 'u8[32768]{0}', space=vmem, size = 0x8000, scoped, tag = 'input window, operand 12, single buffered']
    #allocation15 [shape = 's32[1]{0}', space=sflag, size = 0x4, scoped, tag = 'scoped memory for tpu_custom_call.1']
    #allocation16 [shape = 'u8[65536]{0}', space=vmem, size = 0x10000, scoped, tag = 'output window, operand 0']
    %19 = vsyncpa [#allocation3], 0
    %s20 = scalar_lea.sflag [#allocation3], 1
    %21 = vsyncpa %s20, 0
    %22 = vsyncpa [#allocation6], 0
    %s23 = scalar_lea.sflag [#allocation6], 1
    %24 = vsyncpa %s23, 0
    %25 = vsyncpa [#allocation9], 0
    %26 = vsyncpa [#allocation12], 0
    %27 = vsyncpa [#allocation15], 0
    %28 = vsyncpa [#allocation4], 0
    %s29 = scalar_lea.sflag [#allocation4], 1
    %30 = vsyncpa %s29, 0
    loop: start=0, step=1, limit=6
    $region2: #{tpu_custom_call.1} parent=1 // loop_pre_header
      _
    $region3: #{tpu_custom_call.1} parent=1 // loop_header
      %s32 = sphi 0, %s36
      %p33 = scmp.ge.s32.totalorder %s32, 6
      %s42 = sphi 0, %s44
      %s45 = sphi 0, %s42
      %s46 = sphi 0, %s45
      %s62 = sphi 0, %s46
      %s68 = sphi 0, %s70
      %s71 = sphi 0, %s68
      %s72 = sphi 0, %s71
      %s88 = sphi 0, %s72
      %s92 = sphi 0, %s92
      %s94 = sphi 0, %s92
      %s95 = sphi 0, %s94
      %s109 = sphi 0, %s95
      %s113 = sphi 0, %s113
      %s115 = sphi 0, %s113
      %s116 = sphi 0, %s115
      %s130 = sphi 0, %s116
      %s134 = sphi 0, %s134
      %s136 = sphi 0, %s134
      %s137 = sphi 0, %s136
      %s151 = sphi 0, %s137
      %s155 = sphi 0, %s155
      %s157 = sphi 0, %s155
      %s158 = sphi 0, %s157
      %s172 = sphi 0, %s158
      %s176 = sphi 0, %s176
      %s178 = sphi 0, %s176
      %s179 = sphi 0, %s178
      %s193 = sphi 0, %s179
      %s197 = sphi 0, %s197
      %s199 = sphi 0, %s197
      %s200 = sphi 0, %s199
      %s214 = sphi 0, %s200
      %s218 = sphi 0, %s218
      %s220 = sphi 0, %s218
      %s221 = sphi 0, %s220
      %s235 = sphi 0, %s221
      %s239 = sphi 0, %s239
      %s241 = sphi 0, %s239
      %s242 = sphi 0, %s241
      %s256 = sphi 0, %s242
      %s260 = sphi 0, %s260
      %s262 = sphi 0, %s260
      %s263 = sphi 0, %s262
      %s277 = sphi 0, %s263
      %s281 = sphi 0, %s281
      %s283 = sphi 0, %s281
      %s284 = sphi 0, %s283
      %s298 = sphi 0, %s284
      %s302 = sphi 0, %s302
      %s304 = sphi 0, %s302
      %s305 = sphi 0, %s304
      %s319 = sphi 0, %s305
      %s323 = sphi 0, %s323
      %s325 = sphi 0, %s323
      %s326 = sphi 0, %s325
      %s340 = sphi 0, %s326
      %s346 = sphi 0, %s348
      %s349 = sphi 0, %s346
      %s350 = sphi 0, %s349
      %s366 = sphi 0, %s350
    $region4: #{tpu_custom_call.1} parent=1 // loop_header_branch
      %35 = sbr.rel (%p33) target = $region8
    $region5: #{tpu_custom_call.1} parent=1 // loop_body
      %s37 = ssub.s32 %s32, 1
      %s38 = ssub.s32 %s32, 2
      %s39 = sadd.s32 %s32, 1
      %s40 = ssub.s32 %s32, %s39
      %p41 = scmp.eq.s32.totalorder %s40, 0
      %s43 = sadd.s32 %s42, 1
      %s44 = scalar_select %p41, %s42, %s43
      %p47 = pneg %p41
      %p48 = scmp.eq.s32.totalorder %s32, 3
      %p49 = por %p47, %p48
      %p50 = scmp.ne.s32.totalorder %s42, %s45
      %p51 = scmp.eq.s32.totalorder %s32, 0
      %p52 = por %p50, %p51
      %p53 = scmp.ne.s32.totalorder %s42, %s45
      %p54 = scmp.eq.s32.totalorder %s37, 3
      %p55 = por %p53, %p54
      %p56 = scmp.ne.s32.totalorder %s45, %s46
      %p57 = scmp.eq.s32.totalorder %s37, 0
      %p58 = por %p56, %p57
      %p59 = scmp.ne.s32.totalorder %s45, %s46
      %p60 = scmp.eq.s32.totalorder %s38, 3
      %p61 = por %p59, %p60
      %p63 = scmp.ne.s32.totalorder %s46, %s62
      %p64 = scmp.eq.s32.totalorder %s38, 0
      %p65 = por %p63, %p64
      %s66 = ssub.s32 %s32, %s39
      %p67 = scmp.eq.s32.totalorder %s66, 0
      %s69 = sadd.s32 %s68, 1
      %s70 = scalar_select %p67, %s68, %s69
      %p73 = pneg %p67
      %p74 = scmp.eq.s32.totalorder %s32, 3
      %p75 = por %p73, %p74
      %p76 = scmp.ne.s32.totalorder %s68, %s71
      %p77 = scmp.eq.s32.totalorder %s32, 0
      %p78 = por %p76, %p77
      %p79 = scmp.ne.s32.totalorder %s68, %s71
      %p80 = scmp.eq.s32.totalorder %s37, 3
      %p81 = por %p79, %p80
      %p82 = scmp.ne.s32.totalorder %s71, %s72
      %p83 = scmp.eq.s32.totalorder %s37, 0
      %p84 = por %p82, %p83
      %p85 = scmp.ne.s32.totalorder %s71, %s72
      %p86 = scmp.eq.s32.totalorder %s38, 3
      %p87 = por %p85, %p86
      %p89 = scmp.ne.s32.totalorder %s72, %s88
      %p90 = scmp.eq.s32.totalorder %s38, 0
      %p91 = por %p89, %p90
      %s93 = sadd.s32 %s92, 1
      %p96 = scmp.eq.s32.totalorder %s32, 3
      %p97 = scmp.ne.s32.totalorder %s92, %s94
      %p98 = scmp.eq.s32.totalorder %s32, 0
      %p99 = por %p97, %p98
      %p100 = scmp.ne.s32.totalorder %s92, %s94
      %p101 = scmp.eq.s32.totalorder %s37, 3
      %p102 = por %p100, %p101
      %p103 = scmp.ne.s32.totalorder %s94, %s95
      %p104 = scmp.eq.s32.totalorder %s37, 0
      %p105 = por %p103, %p104
      %p106 = scmp.ne.s32.totalorder %s94, %s95
      %p107 = scmp.eq.s32.totalorder %s38, 3
      %p108 = por %p106, %p107
      %p110 = scmp.ne.s32.totalorder %s95, %s109
      %p111 = scmp.eq.s32.totalorder %s38, 0
      %p112 = por %p110, %p111
      %s114 = sadd.s32 %s113, 1
      %p117 = scmp.eq.s32.totalorder %s32, 3
      %p118 = scmp.ne.s32.totalorder %s113, %s115
      %p119 = scmp.eq.s32.totalorder %s32, 0
      %p120 = por %p118, %p119
      %p121 = scmp.ne.s32.totalorder %s113, %s115
      %p122 = scmp.eq.s32.totalorder %s37, 3
      %p123 = por %p121, %p122
      %p124 = scmp.ne.s32.totalorder %s115, %s116
      %p125 = scmp.eq.s32.totalorder %s37, 0
      %p126 = por %p124, %p125
      %p127 = scmp.ne.s32.totalorder %s115, %s116
      %p128 = scmp.eq.s32.totalorder %s38, 3
      %p129 = por %p127, %p128
      %p131 = scmp.ne.s32.totalorder %s116, %s130
      %p132 = scmp.eq.s32.totalorder %s38, 0
      %p133 = por %p131, %p132
      %s135 = sadd.s32 %s134, 1
      %p138 = scmp.eq.s32.totalorder %s32, 3
      %p139 = scmp.ne.s32.totalorder %s134, %s136
      %p140 = scmp.eq.s32.totalorder %s32, 0
      %p141 = por %p139, %p140
      %p142 = scmp.ne.s32.totalorder %s134, %s136
      %p143 = scmp.eq.s32.totalorder %s37, 3
      %p144 = por %p142, %p143
      %p145 = scmp.ne.s32.totalorder %s136, %s137
      %p146 = scmp.eq.s32.totalorder %s37, 0
      %p147 = por %p145, %p146
      %p148 = scmp.ne.s32.totalorder %s136, %s137
      %p149 = scmp.eq.s32.totalorder %s38, 3
      %p150 = por %p148, %p149
      %p152 = scmp.ne.s32.totalorder %s137, %s151
      %p153 = scmp.eq.s32.totalorder %s38, 0
      %p154 = por %p152, %p153
      %s156 = sadd.s32 %s155, 1
      %p159 = scmp.eq.s32.totalorder %s32, 3
      %p160 = scmp.ne.s32.totalorder %s155, %s157
      %p161 = scmp.eq.s32.totalorder %s32, 0
      %p162 = por %p160, %p161
      %p163 = scmp.ne.s32.totalorder %s155, %s157
      %p164 = scmp.eq.s32.totalorder %s37, 3
      %p165 = por %p163, %p164
      %p166 = scmp.ne.s32.totalorder %s157, %s158
      %p167 = scmp.eq.s32.totalorder %s37, 0
      %p168 = por %p166, %p167
      %p169 = scmp.ne.s32.totalorder %s157, %s158
      %p170 = scmp.eq.s32.totalorder %s38, 3
      %p171 = por %p169, %p170
      %p173 = scmp.ne.s32.totalorder %s158, %s172
      %p174 = scmp.eq.s32.totalorder %s38, 0
      %p175 = por %p173, %p174
      %s177 = sadd.s32 %s176, 1
      %p180 = scmp.eq.s32.totalorder %s32, 3
      %p181 = scmp.ne.s32.totalorder %s176, %s178
      %p182 = scmp.eq.s32.totalorder %s32, 0
      %p183 = por %p181, %p182
      %p184 = scmp.ne.s32.totalorder %s176, %s178
      %p185 = scmp.eq.s32.totalorder %s37, 3
      %p186 = por %p184, %p185
      %p187 = scmp.ne.s32.totalorder %s178, %s179
      %p188 = scmp.eq.s32.totalorder %s37, 0
      %p189 = por %p187, %p188
      %p190 = scmp.ne.s32.totalorder %s178, %s179
      %p191 = scmp.eq.s32.totalorder %s38, 3
      %p192 = por %p190, %p191
      %p194 = scmp.ne.s32.totalorder %s179, %s193
      %p195 = scmp.eq.s32.totalorder %s38, 0
      %p196 = por %p194, %p195
      %s198 = sadd.s32 %s197, 1
      %p201 = scmp.eq.s32.totalorder %s32, 3
      %p202 = scmp.ne.s32.totalorder %s197, %s199
      %p203 = scmp.eq.s32.totalorder %s32, 0
      %p204 = por %p202, %p203
      %p205 = scmp.ne.s32.totalorder %s197, %s199
      %p206 = scmp.eq.s32.totalorder %s37, 3
      %p207 = por %p205, %p206
      %p208 = scmp.ne.s32.totalorder %s199, %s200
      %p209 = scmp.eq.s32.totalorder %s37, 0
      %p210 = por %p208, %p209
      %p211 = scmp.ne.s32.totalorder %s199, %s200
      %p212 = scmp.eq.s32.totalorder %s38, 3
      %p213 = por %p211, %p212
      %p215 = scmp.ne.s32.totalorder %s200, %s214
      %p216 = scmp.eq.s32.totalorder %s38, 0
      %p217 = por %p215, %p216
      %s219 = sadd.s32 %s218, 1
      %p222 = scmp.eq.s32.totalorder %s32, 3
      %p223 = scmp.ne.s32.totalorder %s218, %s220
      %p224 = scmp.eq.s32.totalorder %s32, 0
      %p225 = por %p223, %p224
      %p226 = scmp.ne.s32.totalorder %s218, %s220
      %p227 = scmp.eq.s32.totalorder %s37, 3
      %p228 = por %p226, %p227
      %p229 = scmp.ne.s32.totalorder %s220, %s221
      %p230 = scmp.eq.s32.totalorder %s37, 0
      %p231 = por %p229, %p230
      %p232 = scmp.ne.s32.totalorder %s220, %s221
      %p233 = scmp.eq.s32.totalorder %s38, 3
      %p234 = por %p232, %p233
      %p236 = scmp.ne.s32.totalorder %s221, %s235
      %p237 = scmp.eq.s32.totalorder %s38, 0
      %p238 = por %p236, %p237
      %s240 = sadd.s32 %s239, 1
      %p243 = scmp.eq.s32.totalorder %s32, 3
      %p244 = scmp.ne.s32.totalorder %s239, %s241
      %p245 = scmp.eq.s32.totalorder %s32, 0
      %p246 = por %p244, %p245
      %p247 = scmp.ne.s32.totalorder %s239, %s241
      %p248 = scmp.eq.s32.totalorder %s37, 3
      %p249 = por %p247, %p248
      %p250 = scmp.ne.s32.totalorder %s241, %s242
      %p251 = scmp.eq.s32.totalorder %s37, 0
      %p252 = por %p250, %p251
      %p253 = scmp.ne.s32.totalorder %s241, %s242
      %p254 = scmp.eq.s32.totalorder %s38, 3
      %p255 = por %p253, %p254
      %p257 = scmp.ne.s32.totalorder %s242, %s256
      %p258 = scmp.eq.s32.totalorder %s38, 0
      %p259 = por %p257, %p258
      %s261 = sadd.s32 %s260, 1
      %p264 = scmp.eq.s32.totalorder %s32, 3
      %p265 = scmp.ne.s32.totalorder %s260, %s262
      %p266 = scmp.eq.s32.totalorder %s32, 0
      %p267 = por %p265, %p266
      %p268 = scmp.ne.s32.totalorder %s260, %s262
      %p269 = scmp.eq.s32.totalorder %s37, 3
      %p270 = por %p268, %p269
      %p271 = scmp.ne.s32.totalorder %s262, %s263
      %p272 = scmp.eq.s32.totalorder %s37, 0
      %p273 = por %p271, %p272
      %p274 = scmp.ne.s32.totalorder %s262, %s263
      %p275 = scmp.eq.s32.totalorder %s38, 3
      %p276 = por %p274, %p275
      %p278 = scmp.ne.s32.totalorder %s263, %s277
      %p279 = scmp.eq.s32.totalorder %s38, 0
      %p280 = por %p278, %p279
      %s282 = sadd.s32 %s281, 1
      %p285 = scmp.eq.s32.totalorder %s32, 3
      %p286 = scmp.ne.s32.totalorder %s281, %s283
      %p287 = scmp.eq.s32.totalorder %s32, 0
      %p288 = por %p286, %p287
      %p289 = scmp.ne.s32.totalorder %s281, %s283
      %p290 = scmp.eq.s32.totalorder %s37, 3
      %p291 = por %p289, %p290
      %p292 = scmp.ne.s32.totalorder %s283, %s284
      %p293 = scmp.eq.s32.totalorder %s37, 0
      %p294 = por %p292, %p293
      %p295 = scmp.ne.s32.totalorder %s283, %s284
      %p296 = scmp.eq.s32.totalorder %s38, 3
      %p297 = por %p295, %p296
      %p299 = scmp.ne.s32.totalorder %s284, %s298
      %p300 = scmp.eq.s32.totalorder %s38, 0
      %p301 = por %p299, %p300
      %s303 = sadd.s32 %s302, 1
      %p306 = scmp.eq.s32.totalorder %s32, 3
      %p307 = scmp.ne.s32.totalorder %s302, %s304
      %p308 = scmp.eq.s32.totalorder %s32, 0
      %p309 = por %p307, %p308
      %p310 = scmp.ne.s32.totalorder %s302, %s304
      %p311 = scmp.eq.s32.totalorder %s37, 3
      %p312 = por %p310, %p311
      %p313 = scmp.ne.s32.totalorder %s304, %s305
      %p314 = scmp.eq.s32.totalorder %s37, 0
      %p315 = por %p313, %p314
      %p316 = scmp.ne.s32.totalorder %s304, %s305
      %p317 = scmp.eq.s32.totalorder %s38, 3
      %p318 = por %p316, %p317
      %p320 = scmp.ne.s32.totalorder %s305, %s319
      %p321 = scmp.eq.s32.totalorder %s38, 0
      %p322 = por %p320, %p321
      %s324 = sadd.s32 %s323, 1
      %p327 = scmp.eq.s32.totalorder %s32, 3
      %p328 = scmp.ne.s32.totalorder %s323, %s325
      %p329 = scmp.eq.s32.totalorder %s32, 0
      %p330 = por %p328, %p329
      %p331 = scmp.ne.s32.totalorder %s323, %s325
      %p332 = scmp.eq.s32.totalorder %s37, 3
      %p333 = por %p331, %p332
      %p334 = scmp.ne.s32.totalorder %s325, %s326
      %p335 = scmp.eq.s32.totalorder %s37, 0
      %p336 = por %p334, %p335
      %p337 = scmp.ne.s32.totalorder %s325, %s326
      %p338 = scmp.eq.s32.totalorder %s38, 3
      %p339 = por %p337, %p338
      %p341 = scmp.ne.s32.totalorder %s326, %s340
      %p342 = scmp.eq.s32.totalorder %s38, 0
      %p343 = por %p341, %p342
      %s344 = ssub.s32 %s32, %s39
      %p345 = scmp.eq.s32.totalorder %s344, 0
      %s347 = sadd.s32 %s346, 1
      %s348 = scalar_select %p345, %s346, %s347
      %p351 = pneg %p345
      %p352 = scmp.eq.s32.totalorder %s32, 3
      %p353 = por %p351, %p352
      %p354 = scmp.ne.s32.totalorder %s346, %s349
      %p355 = scmp.eq.s32.totalorder %s32, 0
      %p356 = por %p354, %p355
      %p357 = scmp.ne.s32.totalorder %s346, %s349
      %p358 = scmp.eq.s32.totalorder %s37, 3
      %p359 = por %p357, %p358
      %p360 = scmp.ne.s32.totalorder %s349, %s350
      %p361 = scmp.eq.s32.totalorder %s37, 0
      %p362 = por %p360, %p361
      %p363 = scmp.ne.s32.totalorder %s349, %s350
      %p364 = scmp.eq.s32.totalorder %s38, 3
      %p365 = por %p363, %p364
      %p367 = scmp.ne.s32.totalorder %s350, %s366
      %p368 = scmp.eq.s32.totalorder %s38, 0
      %p369 = por %p367, %p368
      %p370 = scmp.le.s32.totalorder 1, %s32
      %p371 = scmp.lt.s32.totalorder %s32, 5
      %p372 = pnand %p370, %p371
      %p373 = pneg %p372
      // Predicated region
      $region9: #{tpu_custom_call.1} parent=5 // pred_check
        _
      $region10: #{tpu_custom_call.1} parent=5 // pred_check_branch
        %375 = sbr.rel (%p372) target = $region12
      $region11: #{tpu_custom_call.1} parent=5 // pred_region
        %s376 = ssub.s32 %s32, 1
        // Predicated region
        $region13: #{tpu_custom_call.1} parent=11 // pred_check
          %p377 = pneg %p105
        $region14: #{tpu_custom_call.1} parent=11 // pred_check_branch
          %379 = sbr.rel (%p377) target = $region16
        $region15: #{tpu_custom_call.1} parent=11 // pred_region
          %s381 = ssub.s32 1024, 1024
          %382 = vsyncadd [#allocation6], %s381
          %s383 = sshll.u32 [#allocation7], 4
          %s384 = int_to_ptr.vmem [resolvable:$true] %s383
          %389 = dma.hbm_to_vmem [thread:$0]  %s2, 1024, %s384, [#allocation6], 64, 64, 4
        $region16: #{tpu_custom_call.1} parent=11 // pred_fallthru
          _
        // Predicated region
        $region17: #{tpu_custom_call.1} parent=11 // pred_check
          %p390 = pneg %p126
        $region18: #{tpu_custom_call.1} parent=11 // pred_check_branch
          %392 = sbr.rel (%p390) target = $region20
        $region19: #{tpu_custom_call.1} parent=11 // pred_region
          _
        $region20: #{tpu_custom_call.1} parent=11 // pred_fallthru
          _
        // Predicated region
        $region21: #{tpu_custom_call.1} parent=11 // pred_check
          %p393 = pneg %p147
        $region22: #{tpu_custom_call.1} parent=11 // pred_check_branch
          %395 = sbr.rel (%p393) target = $region24
        $region23: #{tpu_custom_call.1} parent=11 // pred_region
          %s397 = ssub.s32 1024, 1024
          %398 = vsyncadd [#allocation9], %s397
          %s399 = sshll.u32 [#allocation8], 4
          %s400 = int_to_ptr.vmem [resolvable:$true] %s399
          %405 = dma.hbm_to_vmem [thread:$0]  %s4, 1024, %s400, [#allocation9], 64, 64, 4
        $region24: #{tpu_custom_call.1} parent=11 // pred_fallthru
          _
        // Predicated region
        $region25: #{tpu_custom_call.1} parent=11 // pred_check
          %p406 = pneg %p168
        $region26: #{tpu_custom_call.1} parent=11 // pred_check_branch
          %408 = sbr.rel (%p406) target = $region28
        $region27: #{tpu_custom_call.1} parent=11 // pred_region
          _
        $region28: #{tpu_custom_call.1} parent=11 // pred_fallthru
          _
        // Predicated region
        $region29: #{tpu_custom_call.1} parent=11 // pred_check
          %p409 = pneg %p189
        $region30: #{tpu_custom_call.1} parent=11 // pred_check_branch
          %411 = sbr.rel (%p409) target = $region32
        $region31: #{tpu_custom_call.1} parent=11 // pred_region
          %s413 = ssub.s32 1024, 1024
          %414 = vsyncadd [#allocation9], %s413
          %s415 = sshll.u32 [#allocation10], 4
          %s416 = int_to_ptr.vmem [resolvable:$true] %s415
          %421 = dma.hbm_to_vmem [thread:$0]  %s6, 1024, %s416, [#allocation9], 64, 64, 4
        $region32: #{tpu_custom_call.1} parent=11 // pred_fallthru
          _
        // Predicated region
        $region33: #{tpu_custom_call.1} parent=11 // pred_check
          %p422 = pneg %p210
        $region34: #{tpu_custom_call.1} parent=11 // pred_check_branch
          %424 = sbr.rel (%p422) target = $region36
        $region35: #{tpu_custom_call.1} parent=11 // pred_region
          _
        $region36: #{tpu_custom_call.1} parent=11 // pred_fallthru
          _
        // Predicated region
        $region37: #{tpu_custom_call.1} parent=11 // pred_check
          %p425 = pneg %p231
        $region38: #{tpu_custom_call.1} parent=11 // pred_check_branch
          %427 = sbr.rel (%p425) target = $region40
        $region39: #{tpu_custom_call.1} parent=11 // pred_region
          %s429 = ssub.s32 1024, 1024
          %430 = vsyncadd [#allocation12], %s429
          %s431 = sshll.u32 [#allocation11], 4
          %s432 = int_to_ptr.vmem [resolvable:$true] %s431
          %437 = dma.hbm_to_vmem [thread:$0]  %s8, 1024, %s432, [#allocation12], 64, 64, 4
        $region40: #{tpu_custom_call.1} parent=11 // pred_fallthru
          _
        // Predicated region
        $region41: #{tpu_custom_call.1} parent=11 // pred_check
          %p438 = pneg %p252
        $region42: #{tpu_custom_call.1} parent=11 // pred_check_branch
          %440 = sbr.rel (%p438) target = $region44
        $region43: #{tpu_custom_call.1} parent=11 // pred_region
          _
        $region44: #{tpu_custom_call.1} parent=11 // pred_fallthru
          _
        // Predicated region
        $region45: #{tpu_custom_call.1} parent=11 // pred_check
          %p441 = pneg %p273
        $region46: #{tpu_custom_call.1} parent=11 // pred_check_branch
          %443 = sbr.rel (%p441) target = $region48
        $region47: #{tpu_custom_call.1} parent=11 // pred_region
          %s445 = ssub.s32 1024, 1024
          %446 = vsyncadd [#allocation12], %s445
          %s447 = sshll.u32 [#allocation13], 4
          %s448 = int_to_ptr.vmem [resolvable:$true] %s447
          %453 = dma.hbm_to_vmem [thread:$0]  %s10, 1024, %s448, [#allocation12], 64, 64, 4
        $region48: #{tpu_custom_call.1} parent=11 // pred_fallthru
          _
        // Predicated region
        $region49: #{tpu_custom_call.1} parent=11 // pred_check
          %p454 = pneg %p294
        $region50: #{tpu_custom_call.1} parent=11 // pred_check_branch
          %456 = sbr.rel (%p454) target = $region52
        $region51: #{tpu_custom_call.1} parent=11 // pred_region
          _
        $region52: #{tpu_custom_call.1} parent=11 // pred_fallthru
          _
        // Predicated region
        $region53: #{tpu_custom_call.1} parent=11 // pred_check
          %p457 = pneg %p315
        $region54: #{tpu_custom_call.1} parent=11 // pred_check_branch
          %459 = sbr.rel (%p457) target = $region56
        $region55: #{tpu_custom_call.1} parent=11 // pred_region
          %s461 = ssub.s32 1024, 1024
          %462 = vsyncadd [#allocation15], %s461
          %s463 = sshll.u32 [#allocation14], 4
          %s464 = int_to_ptr.vmem [resolvable:$true] %s463
          %469 = dma.hbm_to_vmem [thread:$0]  %s12, 1024, %s464, [#allocation15], 64, 64, 4
        $region56: #{tpu_custom_call.1} parent=11 // pred_fallthru
          _
        // Predicated region
        $region57: #{tpu_custom_call.1} parent=11 // pred_check
          %p470 = pneg %p336
        $region58: #{tpu_custom_call.1} parent=11 // pred_check_branch
          %472 = sbr.rel (%p470) target = $region60
        $region59: #{tpu_custom_call.1} parent=11 // pred_region
          _
        $region60: #{tpu_custom_call.1} parent=11 // pred_fallthru
          _
      $region12: #{tpu_custom_call.1} parent=5 // pred_fallthru
        _
      %p473 = scmp.lt.s32.totalorder %s32, 4
      // Predicated region
      $region61: #{tpu_custom_call.1} parent=5 // pred_check
        %p474 = pneg %p473
      $region62: #{tpu_custom_call.1} parent=5 // pred_check_branch
        %476 = sbr.rel (%p474) target = $region64
      $region63: #{tpu_custom_call.1} parent=5 // pred_region
        // Predicated region
        $region65: #{tpu_custom_call.1} parent=63 // pred_check
          %p477 = pneg %p52
        $region66: #{tpu_custom_call.1} parent=63 // pred_check_branch
          %479 = sbr.rel (%p477) target = $region68
        $region67: #{tpu_custom_call.1} parent=63 // pred_region
          %s480 = sand.u32 %s42, 1
          %s481 = scalar_lea.sflag [#allocation3], %s480
          %s482 = sand.u32 %s42, 1
          %s483 = smul.addr %s482, 32
          %s484 = scalar_lea.vmem [#allocation2], %s483
          %s485 = smul.u32 8, %s32
          %s487 = ssub.s32 512, 512
          %488 = vsyncadd %s481, %s487
          %s489 = smul.addr %s485, 64
          %s490 = scalar_lea.hbm %s0, %s489
          %s491 = sshll.u32 %s484, 4
          %s492 = int_to_ptr.vmem [resolvable:$true] %s491
          %497 = dma.hbm_to_vmem [thread:$0]  %s490, 512, %s492, %s481, 64, 64, 4
        $region68: #{tpu_custom_call.1} parent=63 // pred_fallthru
          _
        // Predicated region
        $region69: #{tpu_custom_call.1} parent=63 // pred_check
          %p498 = pneg %p78
        $region70: #{tpu_custom_call.1} parent=63 // pred_check_branch
          %500 = sbr.rel (%p498) target = $region72
        $region71: #{tpu_custom_call.1} parent=63 // pred_region
          %s501 = sand.u32 %s32, 1
          %s502 = scalar_lea.sflag [#allocation6], %s501
          %s503 = sand.u32 %s68, 1
          %s504 = smul.addr %s503, 64
          %s505 = scalar_lea.vmem [#allocation5], %s504
          %s506 = smul.u32 8, %s32
          %s508 = ssub.s32 1024, 1024
          %509 = vsyncadd %s502, %s508
          %s510 = smul.addr %s506, 128
          %s511 = scalar_lea.hbm %s1, %s510
          %s512 = sshll.u32 %s505, 4
          %s513 = int_to_ptr.vmem [resolvable:$true] %s512
          %518 = dma.hbm_to_vmem [thread:$0]  %s511, 1024, %s513, %s502, 128, 128, 8
        $region72: #{tpu_custom_call.1} parent=63 // pred_fallthru
          _
      $region64: #{tpu_custom_call.1} parent=5 // pred_fallthru
        _
      %p519 = scmp.le.s32.totalorder 1, %s32
      %p520 = scmp.lt.s32.totalorder %s32, 5
      %p521 = pnand %p519, %p520
      %p522 = pneg %p521
      // Predicated region
      $region73: #{tpu_custom_call.1} parent=5 // pred_check
        _
      $region74: #{tpu_custom_call.1} parent=5 // pred_check_branch
        %524 = sbr.rel (%p521) target = $region76
      $region75: #{tpu_custom_call.1} parent=5 // pred_region
        %s525 = ssub.s32 %s32, 1
        %s526 = sand.u32 %s45, 1
        %s527 = scalar_lea.sflag [#allocation3], %s526
        %s528 = sand.u32 %s45, 1
        %s529 = smul.addr %s528, 32
        %s530 = scalar_lea.vmem [#allocation2], %s529
        // Predicated region
        $region77: #{tpu_custom_call.1} parent=75 // pred_check
          %p531 = pneg %p58
        $region78: #{tpu_custom_call.1} parent=75 // pred_check_branch
          %533 = sbr.rel (%p531) target = $region80
        $region79: #{tpu_custom_call.1} parent=75 // pred_region
          %534 = dma.done %s527, 512
        $region80: #{tpu_custom_call.1} parent=75 // pred_fallthru
          _
        %s535 = sand.u32 %s37, 1
        %s536 = scalar_lea.sflag [#allocation6], %s535
        %s537 = sand.u32 %s71, 1
        %s538 = smul.addr %s537, 64
        %s539 = scalar_lea.vmem [#allocation5], %s538
        // Predicated region
        $region81: #{tpu_custom_call.1} parent=75 // pred_check
          %p540 = pneg %p84
        $region82: #{tpu_custom_call.1} parent=75 // pred_check_branch
          %542 = sbr.rel (%p540) target = $region84
        $region83: #{tpu_custom_call.1} parent=75 // pred_region
          %543 = dma.done %s536, 1024
        $region84: #{tpu_custom_call.1} parent=75 // pred_fallthru
          _
        // Predicated region
        $region85: #{tpu_custom_call.1} parent=75 // pred_check
          %p544 = pneg %p105
        $region86: #{tpu_custom_call.1} parent=75 // pred_check_branch
          %546 = sbr.rel (%p544) target = $region88
        $region87: #{tpu_custom_call.1} parent=75 // pred_region
          %547 = dma.done [#allocation6], 1024
        $region88: #{tpu_custom_call.1} parent=75 // pred_fallthru
          _
        // Predicated region
        $region89: #{tpu_custom_call.1} parent=75 // pred_check
          %p548 = pneg %p147
        $region90: #{tpu_custom_call.1} parent=75 // pred_check_branch
          %550 = sbr.rel (%p548) target = $region92
        $region91: #{tpu_custom_call.1} parent=75 // pred_region
          %551 = dma.done [#allocation9], 1024
        $region92: #{tpu_custom_call.1} parent=75 // pred_fallthru
          _
        // Predicated region
        $region93: #{tpu_custom_call.1} parent=75 // pred_check
          %p552 = pneg %p189
        $region94: #{tpu_custom_call.1} parent=75 // pred_check_branch
          %554 = sbr.rel (%p552) target = $region96
        $region95: #{tpu_custom_call.1} parent=75 // pred_region
          %555 = dma.done [#allocation9], 1024
        $region96: #{tpu_custom_call.1} parent=75 // pred_fallthru
          _
        // Predicated region
        $region97: #{tpu_custom_call.1} parent=75 // pred_check
          %p556 = pneg %p231
        $region98: #{tpu_custom_call.1} parent=75 // pred_check_branch
          %558 = sbr.rel (%p556) target = $region100
        $region99: #{tpu_custom_call.1} parent=75 // pred_region
          %559 = dma.done [#allocation12], 1024
        $region100: #{tpu_custom_call.1} parent=75 // pred_fallthru
          _
        // Predicated region
        $region101: #{tpu_custom_call.1} parent=75 // pred_check
          %p560 = pneg %p273
        $region102: #{tpu_custom_call.1} parent=75 // pred_check_branch
          %562 = sbr.rel (%p560) target = $region104
        $region103: #{tpu_custom_call.1} parent=75 // pred_region
          %563 = dma.done [#allocation12], 1024
        $region104: #{tpu_custom_call.1} parent=75 // pred_fallthru
          _
        // Predicated region
        $region105: #{tpu_custom_call.1} parent=75 // pred_check
          %p564 = pneg %p315
        $region106: #{tpu_custom_call.1} parent=75 // pred_check_branch
          %566 = sbr.rel (%p564) target = $region108
        $region107: #{tpu_custom_call.1} parent=75 // pred_region
          %567 = dma.done [#allocation15], 1024
        $region108: #{tpu_custom_call.1} parent=75 // pred_fallthru
          _
        %s568 = sand.u32 %s45, 1
        %s569 = scalar_lea.sflag [#allocation3], %s568
        %s570 = sand.u32 %s45, 1
        %s571 = smul.addr %s570, 32
        %s572 = scalar_lea.vmem [#allocation2], %s571
        %p573 = pneg %p58
        %p574 = pneg %p55
        %s575 = sand.u32 %s37, 1
        %s576 = scalar_lea.sflag [#allocation6], %s575
        %s577 = sand.u32 %s71, 1
        %s578 = smul.addr %s577, 64
        %s579 = scalar_lea.vmem [#allocation5], %s578
        %p580 = pneg %p84
        %p581 = pneg %p81
        %p582 = pneg %p105
        %p583 = pneg %p102
        %p584 = pneg %p126
        %p585 = pneg %p123
        %p586 = pneg %p147
        %p587 = pneg %p144
        %p588 = pneg %p168
        %p589 = pneg %p165
        %p590 = pneg %p189
        %p591 = pneg %p186
        %p592 = pneg %p210
        %p593 = pneg %p207
        %p594 = pneg %p231
        %p595 = pneg %p228
        %p596 = pneg %p252
        %p597 = pneg %p249
        %p598 = pneg %p273
        %p599 = pneg %p270
        %p600 = pneg %p294
        %p601 = pneg %p291
        %p602 = pneg %p315
        %p603 = pneg %p312
        %p604 = pneg %p336
        %p605 = pneg %p333
        %p606 = pneg %p362
        %p607 = pneg %p359
        %s608 = sand.u32 %s349, 1
        %s609 = scalar_lea.sflag [#allocation4], %s608
        %s610 = sand.u32 %s349, 1
        %s611 = smul.addr %s610, 64
        %s612 = scalar_lea.vmem [#allocation16], %s611
        %s613 = smul.u32 8, %s37
        %s614 = smul.u32 8, %s37
        %s615 = smul.u32 8, %s37
        %v617 = vld [vmem:[%s530] sm:$0xf]
        %v618 = vld [vmem:[%s530 + $0x4] sm:$0xf]
        %v619 = vld [vmem:[%s530 + $0x8] sm:$0xf]
        %v620 = vld [vmem:[%s530 + $0xc] sm:$0xf]
        %v621 = vld [vmem:[%s530 + $0x10] sm:$0xf]
        %v622 = vld [vmem:[%s530 + $0x14] sm:$0xf]
        %v623 = vld [vmem:[%s530 + $0x18] sm:$0xf]
        %v624 = vld [vmem:[%s530 + $0x1c] sm:$0xf]
        %v625 = vld [vmem:[#allocation7] sm:$0xf]
        %v626 = vld [vmem:[#allocation7 + $0x4] sm:$0xf]
        %v627 = vld [vmem:[#allocation7 + $0x8] sm:$0xf]
        %v628 = vld [vmem:[#allocation7 + $0xc] sm:$0xf]
        %v629 = vld [vmem:[#allocation7 + $0x10] sm:$0xf]
        %v630 = vld [vmem:[#allocation7 + $0x14] sm:$0xf]
        %v631 = vld [vmem:[#allocation7 + $0x18] sm:$0xf]
        %v632 = vld [vmem:[#allocation7 + $0x1c] sm:$0xf]
        %v633 = vld [vmem:[#allocation7 + $0x20] sm:$0xf]
        %v634 = vld [vmem:[#allocation7 + $0x24] sm:$0xf]
        %v635 = vld [vmem:[#allocation7 + $0x28] sm:$0xf]
        %v636 = vld [vmem:[#allocation7 + $0x2c] sm:$0xf]
        %v637 = vld [vmem:[#allocation7 + $0x30] sm:$0xf]
        %v638 = vld [vmem:[#allocation7 + $0x34] sm:$0xf]
        %v639 = vld [vmem:[#allocation7 + $0x38] sm:$0xf]
        %v640 = vld [vmem:[#allocation7 + $0x3c] sm:$0xf]
        %v641 = vld [vmem:[%s3] sm:$0x1]
        %v643 = vlaneseq
        %v644 = vshrl.u32 %v643, 7
        %v645 = vsub.s32 0, %v644
        %v646 = vrot.slane %v641, %v645
        %v656 = vunpack.c.l.b16 %v617
        %v657 = vunpack.c.l.b16 %v618
        %v658 = vunpack.c.l.b16 %v619
        %v659 = vunpack.c.l.b16 %v620
        %v660 = vunpack.c.l.b16 %v621
        %v661 = vunpack.c.l.b16 %v622
        %v662 = vunpack.c.l.b16 %v623
        %v663 = vunpack.c.l.b16 %v624
        %v664 = vpack.c.b16 %v657, %v656
        %v665 = vpack.c.b16 %v659, %v658
        %v666 = vpack.c.b16 %v661, %v660
        %v667 = vpack.c.b16 %v663, %v662
        %v688 = vunpack.c.l.b16 %v625
        %v689 = vunpack.c.l.b16 %v626
        %v690 = vunpack.c.l.b16 %v627
        %v691 = vunpack.c.l.b16 %v628
        %v692 = vunpack.c.l.b16 %v629
        %v693 = vunpack.c.l.b16 %v630
        %v694 = vunpack.c.l.b16 %v631
        %v695 = vunpack.c.l.b16 %v632
        %v696 = vunpack.c.l.b16 %v633
        %v697 = vunpack.c.l.b16 %v634
        %v698 = vunpack.c.l.b16 %v635
        %v699 = vunpack.c.l.b16 %v636
        %v700 = vunpack.c.l.b16 %v637
        %v701 = vunpack.c.l.b16 %v638
        %v702 = vunpack.c.l.b16 %v639
        %v703 = vunpack.c.l.b16 %v640
        %v704 = vpack.c.b16 %v689, %v688
        %v705 = vpack.c.b16 %v691, %v690
        %v706 = vpack.c.b16 %v693, %v692
        %v707 = vpack.c.b16 %v695, %v694
        %v708 = vpack.c.b16 %v697, %v696
        %v709 = vpack.c.b16 %v699, %v698
        %v710 = vpack.c.b16 %v701, %v700
        %v711 = vpack.c.b16 %v703, %v702
        %720 = vmatprep.subr.bf16.mxu0 0
        %721 = vmatpush1.bf16.msra.mxu0 %v711
        %722 = vmatprep.subr.bf16.mxu0 0
        %723 = vmatpush1.bf16.msra.mxu0 %v710
        %724 = vmatprep.subr.bf16.mxu0 0
        %725 = vmatpush1.bf16.msra.mxu0 %v709
        %726 = vmatprep.subr.bf16.mxu0 0
        %727 = vmatpush1.bf16.msra.mxu0 %v708
        %728 = vmatprep.subr.bf16.mxu0 0
        %729 = vmatpush1.bf16.msra.mxu0 %v707
        %730 = vmatprep.subr.bf16.mxu0 0
        %731 = vmatpush1.bf16.msra.mxu0 %v706
        %732 = vmatprep.subr.bf16.mxu0 0
        %733 = vmatpush1.bf16.msra.mxu0 %v705
        %734 = vmatprep.subr.bf16.mxu0 0
        %735 = vmatpush1.bf16.msra.mxu0 %v704
        %736 = vmatprep.subr.bf16.mxu0 0
        %737 = vmatpush2.bf16.msra.mxu0 0
        %738 = vmatprep.subr.bf16.mxu0 0
        %739 = vmatpush2.bf16.msra.mxu0 0
        %740 = vmatprep.subr.bf16.mxu0 0
        %741 = vmatpush2.bf16.msra.mxu0 0
        %742 = vmatprep.subr.bf16.mxu0 0
        %743 = vmatpush2.bf16.msra.mxu0 0
        %744 = vmatprep.subr.bf16.mxu0 0
        %745 = vmatpush2.bf16.msra.mxu0 0
        %746 = vmatprep.subr.bf16.mxu0 0
        %747 = vmatpush2.bf16.msra.mxu0 0
        %748 = vmatprep.subr.bf16.mxu0 0
        %749 = vmatpush2.bf16.msra.mxu0 0
        %750 = vmatprep.subr.bf16.mxu0 0
        %751 = vmatpush2.bf16.msra.mxu0 0
        %752 = vmatprep.mubr.bf16.mxu0 0
        %753 = vmatmul.mubr.bf16.gmra.mxu0 %v664
        %v754 = vpop.f32.mrf.mxu0
        %v755 = vadd.f32 %v646, %v754
        %v756 = vpop.f32.mrf.mxu0
        %v757 = vpop.f32.mrf.mxu0
        %v758 = vadd.f32 %v646, %v757
        %v759 = vpop.f32.mrf.mxu0
        %760 = vmatprep.mubr.bf16.mxu0 0
        %761 = vmatmul.mubr.bf16.gmra.mxu0 %v665
        %v762 = vpop.f32.mrf.mxu0
        %v763 = vadd.f32 %v646, %v762
        %v764 = vpop.f32.mrf.mxu0
        %v765 = vpop.f32.mrf.mxu0
        %v766 = vadd.f32 %v646, %v765
        %v767 = vpop.f32.mrf.mxu0
        %768 = vmatprep.mubr.bf16.mxu0 0
        %769 = vmatmul.mubr.bf16.gmra.mxu0 %v666
        %v770 = vpop.f32.mrf.mxu0
        %v771 = vadd.f32 %v646, %v770
        %v772 = vpop.f32.mrf.mxu0
        %v773 = vpop.f32.mrf.mxu0
        %v774 = vadd.f32 %v646, %v773
        %v775 = vpop.f32.mrf.mxu0
        %776 = vmatprep.mubr.bf16.mxu0 0
        %777 = vmatmul.mubr.bf16.gmra.mxu0 %v667
        %v778 = vpop.f32.mrf.mxu0
        %v779 = vadd.f32 %v646, %v778
        %v780 = vpop.f32.mrf.mxu0
        %v781 = vpop.f32.mrf.mxu0
        %v782 = vadd.f32 %v646, %v781
        %v783 = vpop.f32.mrf.mxu0
        %784 = vdwg.mxu0
        %v785 = vmax.f32 %v755, 0.0
        %v786 = vmax.f32 %v758, 0.0
        %v787 = vmax.f32 %v763, 0.0
        %v788 = vmax.f32 %v766, 0.0
        %v789 = vmax.f32 %v771, 0.0
        %v790 = vmax.f32 %v774, 0.0
        %v791 = vmax.f32 %v779, 0.0
        %v792 = vmax.f32 %v782, 0.0
        %v793 = vpack.c.bf16 %v786, %v785
        %v794 = vpack.c.bf16 %v788, %v787
        %v795 = vpack.c.bf16 %v790, %v789
        %v796 = vpack.c.bf16 %v792, %v791
        %v797 = vld [vmem:[#allocation8] sm:$0xf]
        %v798 = vld [vmem:[#allocation8 + $0x4] sm:$0xf]
        %v799 = vld [vmem:[#allocation8 + $0x8] sm:$0xf]
        %v800 = vld [vmem:[#allocation8 + $0xc] sm:$0xf]
        %v801 = vld [vmem:[#allocation8 + $0x10] sm:$0xf]
        %v802 = vld [vmem:[#allocation8 + $0x14] sm:$0xf]
        %v803 = vld [vmem:[#allocation8 + $0x18] sm:$0xf]
        %v804 = vld [vmem:[#allocation8 + $0x1c] sm:$0xf]
        %v805 = vld [vmem:[#allocation8 + $0x20] sm:$0xf]
        %v806 = vld [vmem:[#allocation8 + $0x24] sm:$0xf]
        %v807 = vld [vmem:[#allocation8 + $0x28] sm:$0xf]
        %v808 = vld [vmem:[#allocation8 + $0x2c] sm:$0xf]
        %v809 = vld [vmem:[#allocation8 + $0x30] sm:$0xf]
        %v810 = vld [vmem:[#allocation8 + $0x34] sm:$0xf]
        %v811 = vld [vmem:[#allocation8 + $0x38] sm:$0xf]
        %v812 = vld [vmem:[#allocation8 + $0x3c] sm:$0xf]
        %v813 = vld [vmem:[%s5] sm:$0x1]
        %v815 = vlaneseq
        %v816 = vshrl.u32 %v815, 7
        %v817 = vsub.s32 0, %v816
        %v818 = vrot.slane %v813, %v817
        %v836 = vunpack.c.l.b16 %v797
        %v837 = vunpack.c.l.b16 %v798
        %v838 = vunpack.c.l.b16 %v799
        %v839 = vunpack.c.l.b16 %v800
        %v840 = vunpack.c.l.b16 %v801
        %v841 = vunpack.c.l.b16 %v802
        %v842 = vunpack.c.l.b16 %v803
        %v843 = vunpack.c.l.b16 %v804
        %v844 = vunpack.c.l.b16 %v805
        %v845 = vunpack.c.l.b16 %v806
        %v846 = vunpack.c.l.b16 %v807
        %v847 = vunpack.c.l.b16 %v808
        %v848 = vunpack.c.l.b16 %v809
        %v849 = vunpack.c.l.b16 %v810
        %v850 = vunpack.c.l.b16 %v811
        %v851 = vunpack.c.l.b16 %v812
        %v852 = vpack.c.b16 %v837, %v836
        %v853 = vpack.c.b16 %v839, %v838
        %v854 = vpack.c.b16 %v841, %v840
        %v855 = vpack.c.b16 %v843, %v842
        %v856 = vpack.c.b16 %v845, %v844
        %v857 = vpack.c.b16 %v847, %v846
        %v858 = vpack.c.b16 %v849, %v848
        %v859 = vpack.c.b16 %v851, %v850
        %868 = vmatprep.subr.bf16.mxu0 0
        %869 = vmatpush1.bf16.msra.mxu0 %v859
        %870 = vmatprep.subr.bf16.mxu0 0
        %871 = vmatpush1.bf16.msra.mxu0 %v858
        %872 = vmatprep.subr.bf16.mxu0 0
        %873 = vmatpush1.bf16.msra.mxu0 %v857
        %874 = vmatprep.subr.bf16.mxu0 0
        %875 = vmatpush1.bf16.msra.mxu0 %v856
        %876 = vmatprep.subr.bf16.mxu0 0
        %877 = vmatpush1.bf16.msra.mxu0 %v855
        %878 = vmatprep.subr.bf16.mxu0 0
        %879 = vmatpush1.bf16.msra.mxu0 %v854
        %880 = vmatprep.subr.bf16.mxu0 0
        %881 = vmatpush1.bf16.msra.mxu0 %v853
        %882 = vmatprep.subr.bf16.mxu0 0
        %883 = vmatpush1.bf16.msra.mxu0 %v852
        %884 = vmatprep.subr.bf16.mxu0 0
        %885 = vmatpush2.bf16.msra.mxu0 0
        %886 = vmatprep.subr.bf16.mxu0 0
        %887 = vmatpush2.bf16.msra.mxu0 0
        %888 = vmatprep.subr.bf16.mxu0 0
        %889 = vmatpush2.bf16.msra.mxu0 0
        %890 = vmatprep.subr.bf16.mxu0 0
        %891 = vmatpush2.bf16.msra.mxu0 0
        %892 = vmatprep.subr.bf16.mxu0 0
        %893 = vmatpush2.bf16.msra.mxu0 0
        %894 = vmatprep.subr.bf16.mxu0 0
        %895 = vmatpush2.bf16.msra.mxu0 0
        %896 = vmatprep.subr.bf16.mxu0 0
        %897 = vmatpush2.bf16.msra.mxu0 0
        %898 = vmatprep.subr.bf16.mxu0 0
        %899 = vmatpush2.bf16.msra.mxu0 0
        %900 = vmatprep.mubr.bf16.mxu0 0
        %901 = vmatmul.mubr.bf16.gmra.mxu0 %v793
        %v902 = vpop.f32.mrf.mxu0
        %v903 = vadd.f32 %v818, %v902
        %v904 = vpop.f32.mrf.mxu0
        %v905 = vpop.f32.mrf.mxu0
        %v906 = vadd.f32 %v818, %v905
        %v907 = vpop.f32.mrf.mxu0
        %908 = vmatprep.mubr.bf16.mxu0 0
        %909 = vmatmul.mubr.bf16.gmra.mxu0 %v794
        %v910 = vpop.f32.mrf.mxu0
        %v911 = vadd.f32 %v818, %v910
        %v912 = vpop.f32.mrf.mxu0
        %v913 = vpop.f32.mrf.mxu0
        %v914 = vadd.f32 %v818, %v913
        %v915 = vpop.f32.mrf.mxu0
        %916 = vmatprep.mubr.bf16.mxu0 0
        %917 = vmatmul.mubr.bf16.gmra.mxu0 %v795
        %v918 = vpop.f32.mrf.mxu0
        %v919 = vadd.f32 %v818, %v918
        %v920 = vpop.f32.mrf.mxu0
        %v921 = vpop.f32.mrf.mxu0
        %v922 = vadd.f32 %v818, %v921
        %v923 = vpop.f32.mrf.mxu0
        %924 = vmatprep.mubr.bf16.mxu0 0
        %925 = vmatmul.mubr.bf16.gmra.mxu0 %v796
        %v926 = vpop.f32.mrf.mxu0
        %v927 = vadd.f32 %v818, %v926
        %v928 = vpop.f32.mrf.mxu0
        %v929 = vpop.f32.mrf.mxu0
        %v930 = vadd.f32 %v818, %v929
        %v931 = vpop.f32.mrf.mxu0
        %932 = vdwg.mxu0
        %v933 = vmax.f32 %v903, 0.0
        %v934 = vmax.f32 %v906, 0.0
        %v935 = vmax.f32 %v911, 0.0
        %v936 = vmax.f32 %v914, 0.0
        %v937 = vmax.f32 %v919, 0.0
        %v938 = vmax.f32 %v922, 0.0
        %v939 = vmax.f32 %v927, 0.0
        %v940 = vmax.f32 %v930, 0.0
        %v941 = vpack.c.bf16 %v934, %v933
        %v942 = vpack.c.bf16 %v936, %v935
        %v943 = vpack.c.bf16 %v938, %v937
        %v944 = vpack.c.bf16 %v940, %v939
        %v945 = vld [vmem:[#allocation10] sm:$0xf]
        %v946 = vld [vmem:[#allocation10 + $0x4] sm:$0xf]
        %v947 = vld [vmem:[#allocation10 + $0x8] sm:$0xf]
        %v948 = vld [vmem:[#allocation10 + $0xc] sm:$0xf]
        %v949 = vld [vmem:[#allocation10 + $0x10] sm:$0xf]
        %v950 = vld [vmem:[#allocation10 + $0x14] sm:$0xf]
        %v951 = vld [vmem:[#allocation10 + $0x18] sm:$0xf]
        %v952 = vld [vmem:[#allocation10 + $0x1c] sm:$0xf]
        %v953 = vld [vmem:[#allocation10 + $0x20] sm:$0xf]
        %v954 = vld [vmem:[#allocation10 + $0x24] sm:$0xf]
        %v955 = vld [vmem:[#allocation10 + $0x28] sm:$0xf]
        %v956 = vld [vmem:[#allocation10 + $0x2c] sm:$0xf]
        %v957 = vld [vmem:[#allocation10 + $0x30] sm:$0xf]
        %v958 = vld [vmem:[#allocation10 + $0x34] sm:$0xf]
        %v959 = vld [vmem:[#allocation10 + $0x38] sm:$0xf]
        %v960 = vld [vmem:[#allocation10 + $0x3c] sm:$0xf]
        %v961 = vld [vmem:[%s7] sm:$0x1]
        %v963 = vlaneseq
        %v964 = vshrl.u32 %v963, 7
        %v965 = vsub.s32 0, %v964
        %v966 = vrot.slane %v961, %v965
        %v984 = vunpack.c.l.b16 %v945
        %v985 = vunpack.c.l.b16 %v946
        %v986 = vunpack.c.l.b16 %v947
        %v987 = vunpack.c.l.b16 %v948
        %v988 = vunpack.c.l.b16 %v949
        %v989 = vunpack.c.l.b16 %v950
        %v990 = vunpack.c.l.b16 %v951
        %v991 = vunpack.c.l.b16 %v952
        %v992 = vunpack.c.l.b16 %v953
        %v993 = vunpack.c.l.b16 %v954
        %v994 = vunpack.c.l.b16 %v955
        %v995 = vunpack.c.l.b16 %v956
        %v996 = vunpack.c.l.b16 %v957
        %v997 = vunpack.c.l.b16 %v958
        %v998 = vunpack.c.l.b16 %v959
        %v999 = vunpack.c.l.b16 %v960
        %v1000 = vpack.c.b16 %v985, %v984
        %v1001 = vpack.c.b16 %v987, %v986
        %v1002 = vpack.c.b16 %v989, %v988
        %v1003 = vpack.c.b16 %v991, %v990
        %v1004 = vpack.c.b16 %v993, %v992
        %v1005 = vpack.c.b16 %v995, %v994
        %v1006 = vpack.c.b16 %v997, %v996
        %v1007 = vpack.c.b16 %v999, %v998
        %1016 = vmatprep.subr.bf16.mxu0 0
        %1017 = vmatpush1.bf16.msra.mxu0 %v1007
        %1018 = vmatprep.subr.bf16.mxu0 0
        %1019 = vmatpush1.bf16.msra.mxu0 %v1006
        %1020 = vmatprep.subr.bf16.mxu0 0
        %1021 = vmatpush1.bf16.msra.mxu0 %v1005
        %1022 = vmatprep.subr.bf16.mxu0 0
        %1023 = vmatpush1.bf16.msra.mxu0 %v1004
        %1024 = vmatprep.subr.bf16.mxu0 0
        %1025 = vmatpush1.bf16.msra.mxu0 %v1003
        %1026 = vmatprep.subr.bf16.mxu0 0
        %1027 = vmatpush1.bf16.msra.mxu0 %v1002
        %1028 = vmatprep.subr.bf16.mxu0 0
        %1029 = vmatpush1.bf16.msra.mxu0 %v1001
        %1030 = vmatprep.subr.bf16.mxu0 0
        %1031 = vmatpush1.bf16.msra.mxu0 %v1000
        %1032 = vmatprep.subr.bf16.mxu0 0
        %1033 = vmatpush2.bf16.msra.mxu0 0
        %1034 = vmatprep.subr.bf16.mxu0 0
        %1035 = vmatpush2.bf16.msra.mxu0 0
        %1036 = vmatprep.subr.bf16.mxu0 0
        %1037 = vmatpush2.bf16.msra.mxu0 0
        %1038 = vmatprep.subr.bf16.mxu0 0
        %1039 = vmatpush2.bf16.msra.mxu0 0
        %1040 = vmatprep.subr.bf16.mxu0 0
        %1041 = vmatpush2.bf16.msra.mxu0 0
        %1042 = vmatprep.subr.bf16.mxu0 0
        %1043 = vmatpush2.bf16.msra.mxu0 0
        %1044 = vmatprep.subr.bf16.mxu0 0
        %1045 = vmatpush2.bf16.msra.mxu0 0
        %1046 = vmatprep.subr.bf16.mxu0 0
        %1047 = vmatpush2.bf16.msra.mxu0 0
        %1048 = vmatprep.mubr.bf16.mxu0 0
        %1049 = vmatmul.mubr.bf16.gmra.mxu0 %v941
        %v1050 = vpop.f32.mrf.mxu0
        %v1051 = vadd.f32 %v966, %v1050
        %v1052 = vpop.f32.mrf.mxu0
        %v1053 = vpop.f32.mrf.mxu0
        %v1054 = vadd.f32 %v966, %v1053
        %v1055 = vpop.f32.mrf.mxu0
        %1056 = vmatprep.mubr.bf16.mxu0 0
        %1057 = vmatmul.mubr.bf16.gmra.mxu0 %v942
        %v1058 = vpop.f32.mrf.mxu0
        %v1059 = vadd.f32 %v966, %v1058
        %v1060 = vpop.f32.mrf.mxu0
        %v1061 = vpop.f32.mrf.mxu0
        %v1062 = vadd.f32 %v966, %v1061
        %v1063 = vpop.f32.mrf.mxu0
        %1064 = vmatprep.mubr.bf16.mxu0 0
        %1065 = vmatmul.mubr.bf16.gmra.mxu0 %v943
        %v1066 = vpop.f32.mrf.mxu0
        %v1067 = vadd.f32 %v966, %v1066
        %v1068 = vpop.f32.mrf.mxu0
        %v1069 = vpop.f32.mrf.mxu0
        %v1070 = vadd.f32 %v966, %v1069
        %v1071 = vpop.f32.mrf.mxu0
        %1072 = vmatprep.mubr.bf16.mxu0 0
        %1073 = vmatmul.mubr.bf16.gmra.mxu0 %v944
        %v1074 = vpop.f32.mrf.mxu0
        %v1075 = vadd.f32 %v966, %v1074
        %v1076 = vpop.f32.mrf.mxu0
        %v1077 = vpop.f32.mrf.mxu0
        %v1078 = vadd.f32 %v966, %v1077
        %v1079 = vpop.f32.mrf.mxu0
        %1080 = vdwg.mxu0
        %v1081 = vmax.f32 %v1051, -4.0
        %v1082 = vmax.f32 %v1054, -4.0
        %v1083 = vmax.f32 %v1059, -4.0
        %v1084 = vmax.f32 %v1062, -4.0
        %v1085 = vmax.f32 %v1067, -4.0
        %v1086 = vmax.f32 %v1070, -4.0
        %v1087 = vmax.f32 %v1075, -4.0
        %v1088 = vmax.f32 %v1078, -4.0
        %v1089 = vmin.f32 %v1081, 15.0
        %v1090 = vmin.f32 %v1082, 15.0
        %v1091 = vmin.f32 %v1083, 15.0
        %v1092 = vmin.f32 %v1084, 15.0
        %v1093 = vmin.f32 %v1085, 15.0
        %v1094 = vmin.f32 %v1086, 15.0
        %v1095 = vmin.f32 %v1087, 15.0
        %v1096 = vmin.f32 %v1088, 15.0
        %v1097 = vmul.f32 %v1089, 1.442695
        %v1098 = vpow.pop %v1097
        %v1099 = vmul.f32 %v1090, 1.442695
        %v1100 = vpow.pop %v1099
        %v1101 = vmul.f32 %v1091, 1.442695
        %v1102 = vpow.pop %v1101
        %v1103 = vmul.f32 %v1092, 1.442695
        %v1104 = vpow.pop %v1103
        %v1105 = vmul.f32 %v1093, 1.442695
        %v1106 = vpow.pop %v1105
        %v1107 = vmul.f32 %v1094, 1.442695
        %v1108 = vpow.pop %v1107
        %v1109 = vmul.f32 %v1095, 1.442695
        %v1110 = vpow.pop %v1109
        %v1111 = vmul.f32 %v1096, 1.442695
        %v1112 = vpow.pop %v1111
        %v1113 = vld [vmem:[%s539] sm:$0xff]
        %v1114 = vld [vmem:[%s539 + $0x8] sm:$0xff]
        %v1115 = vld [vmem:[%s539 + $0x10] sm:$0xff]
        %v1116 = vld [vmem:[%s539 + $0x18] sm:$0xff]
        %v1117 = vld [vmem:[%s539 + $0x20] sm:$0xff]
        %v1118 = vld [vmem:[%s539 + $0x28] sm:$0xff]
        %v1119 = vld [vmem:[%s539 + $0x30] sm:$0xff]
        %v1120 = vld [vmem:[%s539 + $0x38] sm:$0xff]
        %v1121 = vmul.f32 %v1098, %v1113
        %v1122 = vmul.f32 %v1100, %v1114
        %v1123 = vmul.f32 %v1102, %v1115
        %v1124 = vmul.f32 %v1104, %v1116
        %v1125 = vmul.f32 %v1106, %v1117
        %v1126 = vmul.f32 %v1108, %v1118
        %v1127 = vmul.f32 %v1110, %v1119
        %v1128 = vmul.f32 %v1112, %v1120
        %1129 = vrot.lane.b32.xlu0 %v1121, 120
        %v1130 = vpop.permute.xlu0 %1129
        %1131 = vrot.lane.b32.xlu0 %v1122, 120
        %v1132 = vpop.permute.xlu0 %1131
        %1133 = vrot.lane.b32.xlu0 %v1123, 120
        %v1134 = vpop.permute.xlu0 %1133
        %1135 = vrot.lane.b32.xlu0 %v1124, 120
        %v1136 = vpop.permute.xlu0 %1135
        %1137 = vrot.lane.b32.xlu0 %v1125, 120
        %v1138 = vpop.permute.xlu0 %1137
        %1139 = vrot.lane.b32.xlu0 %v1126, 120
        %v1140 = vpop.permute.xlu0 %1139
        %1141 = vrot.lane.b32.xlu0 %v1127, 120
        %v1142 = vpop.permute.xlu0 %1141
        %1143 = vrot.lane.b32.xlu0 %v1128, 120
        %v1144 = vpop.permute.xlu0 %1143
        %1145 = vrot.lane.b32.xlu0 %v1121, 8
        %v1146 = vpop.permute.xlu0 %1145
        %1147 = vrot.lane.b32.xlu0 %v1122, 8
        %v1148 = vpop.permute.xlu0 %1147
        %1149 = vrot.lane.b32.xlu0 %v1123, 8
        %v1150 = vpop.permute.xlu0 %1149
        %1151 = vrot.lane.b32.xlu0 %v1124, 8
        %v1152 = vpop.permute.xlu0 %1151
        %1153 = vrot.lane.b32.xlu0 %v1125, 8
        %v1154 = vpop.permute.xlu0 %1153
        %1155 = vrot.lane.b32.xlu0 %v1126, 8
        %v1156 = vpop.permute.xlu0 %1155
        %1157 = vrot.lane.b32.xlu0 %v1127, 8
        %v1158 = vpop.permute.xlu0 %1157
        %1159 = vrot.lane.b32.xlu0 %v1128, 8
        %v1160 = vpop.permute.xlu0 %1159
        %v1161 = vadd.f32 %v1130, %v1146
        %v1162 = vadd.f32 %v1132, %v1148
        %v1163 = vadd.f32 %v1134, %v1150
        %v1164 = vadd.f32 %v1136, %v1152
        %v1165 = vadd.f32 %v1138, %v1154
        %v1166 = vadd.f32 %v1140, %v1156
        %v1167 = vadd.f32 %v1142, %v1158
        %v1168 = vadd.f32 %v1144, %v1160
        %v1169 = vadd.f32 %v1051, %v1161
        %v1170 = vadd.f32 %v1054, %v1162
        %v1171 = vadd.f32 %v1059, %v1163
        %v1172 = vadd.f32 %v1062, %v1164
        %v1173 = vadd.f32 %v1067, %v1165
        %v1174 = vadd.f32 %v1070, %v1166
        %v1175 = vadd.f32 %v1075, %v1167
        %v1176 = vadd.f32 %v1078, %v1168
        %v1177 = vpack.c.bf16 %v1170, %v1169
        %v1178 = vpack.c.bf16 %v1172, %v1171
        %v1179 = vpack.c.bf16 %v1174, %v1173
        %v1180 = vpack.c.bf16 %v1176, %v1175
        %v1185 = vunpack.c.l.b16 %v1177
        %v1186 = vunpack.c.h.b16 %v1177
        %v1187 = vunpack.c.l.b16 %v1178
        %v1188 = vunpack.c.h.b16 %v1178
        %v1189 = vunpack.c.l.b16 %v1179
        %v1190 = vunpack.c.h.b16 %v1179
        %v1191 = vunpack.c.l.b16 %v1180
        %v1192 = vunpack.c.h.b16 %v1180
        %v1193 = vpack.c.b16 %v1185, %v1185
        %v1194 = vpack.c.b16 %v1186, %v1186
        %v1195 = vpack.c.b16 %v1187, %v1187
        %v1196 = vpack.c.b16 %v1188, %v1188
        %v1197 = vpack.c.b16 %v1189, %v1189
        %v1198 = vpack.c.b16 %v1190, %v1190
        %v1199 = vpack.c.b16 %v1191, %v1191
        %v1200 = vpack.c.b16 %v1192, %v1192
        %v1209 = vadd.bf16 %v617, %v1193
        %v1210 = vadd.bf16 %v618, %v1194
        %v1211 = vadd.bf16 %v619, %v1195
        %v1212 = vadd.bf16 %v620, %v1196
        %v1213 = vadd.bf16 %v621, %v1197
        %v1214 = vadd.bf16 %v622, %v1198
        %v1215 = vadd.bf16 %v623, %v1199
        %v1216 = vadd.bf16 %v624, %v1200
        %v1217 = vld [vmem:[#allocation11] sm:$0xf]
        %v1218 = vld [vmem:[#allocation11 + $0x4] sm:$0xf]
        %v1219 = vld [vmem:[#allocation11 + $0x8] sm:$0xf]
        %v1220 = vld [vmem:[#allocation11 + $0xc] sm:$0xf]
        %v1221 = vld [vmem:[#allocation11 + $0x10] sm:$0xf]
        %v1222 = vld [vmem:[#allocation11 + $0x14] sm:$0xf]
        %v1223 = vld [vmem:[#allocation11 + $0x18] sm:$0xf]
        %v1224 = vld [vmem:[#allocation11 + $0x1c] sm:$0xf]
        %v1225 = vld [vmem:[#allocation11 + $0x20] sm:$0xf]
        %v1226 = vld [vmem:[#allocation11 + $0x24] sm:$0xf]
        %v1227 = vld [vmem:[#allocation11 + $0x28] sm:$0xf]
        %v1228 = vld [vmem:[#allocation11 + $0x2c] sm:$0xf]
        %v1229 = vld [vmem:[#allocation11 + $0x30] sm:$0xf]
        %v1230 = vld [vmem:[#allocation11 + $0x34] sm:$0xf]
        %v1231 = vld [vmem:[#allocation11 + $0x38] sm:$0xf]
        %v1232 = vld [vmem:[#allocation11 + $0x3c] sm:$0xf]
        %v1233 = vld [vmem:[%s9] sm:$0x1]
        %v1235 = vlaneseq
        %v1236 = vshrl.u32 %v1235, 7
        %v1237 = vsub.s32 0, %v1236
        %v1238 = vrot.slane %v1233, %v1237
        %v1248 = vunpack.c.l.b16 %v1209
        %v1249 = vunpack.c.l.b16 %v1210
        %v1250 = vunpack.c.l.b16 %v1211
        %v1251 = vunpack.c.l.b16 %v1212
        %v1252 = vunpack.c.l.b16 %v1213
        %v1253 = vunpack.c.l.b16 %v1214
        %v1254 = vunpack.c.l.b16 %v1215
        %v1255 = vunpack.c.l.b16 %v1216
        %v1256 = vpack.c.b16 %v1249, %v1248
        %v1257 = vpack.c.b16 %v1251, %v1250
        %v1258 = vpack.c.b16 %v1253, %v1252
        %v1259 = vpack.c.b16 %v1255, %v1254
        %v1280 = vunpack.c.l.b16 %v1217
        %v1281 = vunpack.c.l.b16 %v1218
        %v1282 = vunpack.c.l.b16 %v1219
        %v1283 = vunpack.c.l.b16 %v1220
        %v1284 = vunpack.c.l.b16 %v1221
        %v1285 = vunpack.c.l.b16 %v1222
        %v1286 = vunpack.c.l.b16 %v1223
        %v1287 = vunpack.c.l.b16 %v1224
        %v1288 = vunpack.c.l.b16 %v1225
        %v1289 = vunpack.c.l.b16 %v1226
        %v1290 = vunpack.c.l.b16 %v1227
        %v1291 = vunpack.c.l.b16 %v1228
        %v1292 = vunpack.c.l.b16 %v1229
        %v1293 = vunpack.c.l.b16 %v1230
        %v1294 = vunpack.c.l.b16 %v1231
        %v1295 = vunpack.c.l.b16 %v1232
        %v1296 = vpack.c.b16 %v1281, %v1280
        %v1297 = vpack.c.b16 %v1283, %v1282
        %v1298 = vpack.c.b16 %v1285, %v1284
        %v1299 = vpack.c.b16 %v1287, %v1286
        %v1300 = vpack.c.b16 %v1289, %v1288
        %v1301 = vpack.c.b16 %v1291, %v1290
        %v1302 = vpack.c.b16 %v1293, %v1292
        %v1303 = vpack.c.b16 %v1295, %v1294
        %1312 = vmatprep.subr.bf16.mxu0 0
        %1313 = vmatpush1.bf16.msra.mxu0 %v1303
        %1314 = vmatprep.subr.bf16.mxu0 0
        %1315 = vmatpush1.bf16.msra.mxu0 %v1302
        %1316 = vmatprep.subr.bf16.mxu0 0
        %1317 = vmatpush1.bf16.msra.mxu0 %v1301
        %1318 = vmatprep.subr.bf16.mxu0 0
        %1319 = vmatpush1.bf16.msra.mxu0 %v1300
        %1320 = vmatprep.subr.bf16.mxu0 0
        %1321 = vmatpush1.bf16.msra.mxu0 %v1299
        %1322 = vmatprep.subr.bf16.mxu0 0
        %1323 = vmatpush1.bf16.msra.mxu0 %v1298
        %1324 = vmatprep.subr.bf16.mxu0 0
        %1325 = vmatpush1.bf16.msra.mxu0 %v1297
        %1326 = vmatprep.subr.bf16.mxu0 0
        %1327 = vmatpush1.bf16.msra.mxu0 %v1296
        %1328 = vmatprep.subr.bf16.mxu0 0
        %1329 = vmatpush2.bf16.msra.mxu0 0
        %1330 = vmatprep.subr.bf16.mxu0 0
        %1331 = vmatpush2.bf16.msra.mxu0 0
        %1332 = vmatprep.subr.bf16.mxu0 0
        %1333 = vmatpush2.bf16.msra.mxu0 0
        %1334 = vmatprep.subr.bf16.mxu0 0
        %1335 = vmatpush2.bf16.msra.mxu0 0
        %1336 = vmatprep.subr.bf16.mxu0 0
        %1337 = vmatpush2.bf16.msra.mxu0 0
        %1338 = vmatprep.subr.bf16.mxu0 0
        %1339 = vmatpush2.bf16.msra.mxu0 0
        %1340 = vmatprep.subr.bf16.mxu0 0
        %1341 = vmatpush2.bf16.msra.mxu0 0
        %1342 = vmatprep.subr.bf16.mxu0 0
        %1343 = vmatpush2.bf16.msra.mxu0 0
        %1344 = vmatprep.mubr.bf16.mxu0 0
        %1345 = vmatmul.mubr.bf16.gmra.mxu0 %v1256
        %v1346 = vpop.f32.mrf.mxu0
        %v1347 = vadd.f32 %v1238, %v1346
        %v1348 = vpop.f32.mrf.mxu0
        %v1349 = vpop.f32.mrf.mxu0
        %v1350 = vadd.f32 %v1238, %v1349
        %v1351 = vpop.f32.mrf.mxu0
        %1352 = vmatprep.mubr.bf16.mxu0 0
        %1353 = vmatmul.mubr.bf16.gmra.mxu0 %v1257
        %v1354 = vpop.f32.mrf.mxu0
        %v1355 = vadd.f32 %v1238, %v1354
        %v1356 = vpop.f32.mrf.mxu0
        %v1357 = vpop.f32.mrf.mxu0
        %v1358 = vadd.f32 %v1238, %v1357
        %v1359 = vpop.f32.mrf.mxu0
        %1360 = vmatprep.mubr.bf16.mxu0 0
        %1361 = vmatmul.mubr.bf16.gmra.mxu0 %v1258
        %v1362 = vpop.f32.mrf.mxu0
        %v1363 = vadd.f32 %v1238, %v1362
        %v1364 = vpop.f32.mrf.mxu0
        %v1365 = vpop.f32.mrf.mxu0
        %v1366 = vadd.f32 %v1238, %v1365
        %v1367 = vpop.f32.mrf.mxu0
        %1368 = vmatprep.mubr.bf16.mxu0 0
        %1369 = vmatmul.mubr.bf16.gmra.mxu0 %v1259
        %v1370 = vpop.f32.mrf.mxu0
        %v1371 = vadd.f32 %v1238, %v1370
        %v1372 = vpop.f32.mrf.mxu0
        %v1373 = vpop.f32.mrf.mxu0
        %v1374 = vadd.f32 %v1238, %v1373
        %v1375 = vpop.f32.mrf.mxu0
        %1376 = vdwg.mxu0
        %v1377 = vmax.f32 %v1347, 0.0
        %v1378 = vmax.f32 %v1350, 0.0
        %v1379 = vmax.f32 %v1355, 0.0
        %v1380 = vmax.f32 %v1358, 0.0
        %v1381 = vmax.f32 %v1363, 0.0
        %v1382 = vmax.f32 %v1366, 0.0
        %v1383 = vmax.f32 %v1371, 0.0
        %v1384 = vmax.f32 %v1374, 0.0
        %v1385 = vpack.c.bf16 %v1378, %v1377
        %v1386 = vpack.c.bf16 %v1380, %v1379
        %v1387 = vpack.c.bf16 %v1382, %v1381
        %v1388 = vpack.c.bf16 %v1384, %v1383
        %v1389 = vld [vmem:[#allocation13] sm:$0xf]
        %v1390 = vld [vmem:[#allocation13 + $0x4] sm:$0xf]
        %v1391 = vld [vmem:[#allocation13 + $0x8] sm:$0xf]
        %v1392 = vld [vmem:[#allocation13 + $0xc] sm:$0xf]
        %v1393 = vld [vmem:[#allocation13 + $0x10] sm:$0xf]
        %v1394 = vld [vmem:[#allocation13 + $0x14] sm:$0xf]
        %v1395 = vld [vmem:[#allocation13 + $0x18] sm:$0xf]
        %v1396 = vld [vmem:[#allocation13 + $0x1c] sm:$0xf]
        %v1397 = vld [vmem:[#allocation13 + $0x20] sm:$0xf]
        %v1398 = vld [vmem:[#allocation13 + $0x24] sm:$0xf]
        %v1399 = vld [vmem:[#allocation13 + $0x28] sm:$0xf]
        %v1400 = vld [vmem:[#allocation13 + $0x2c] sm:$0xf]
        %v1401 = vld [vmem:[#allocation13 + $0x30] sm:$0xf]
        %v1402 = vld [vmem:[#allocation13 + $0x34] sm:$0xf]
        %v1403 = vld [vmem:[#allocation13 + $0x38] sm:$0xf]
        %v1404 = vld [vmem:[#allocation13 + $0x3c] sm:$0xf]
        %v1405 = vld [vmem:[%s11] sm:$0x1]
        %v1407 = vlaneseq
        %v1408 = vshrl.u32 %v1407, 7
        %v1409 = vsub.s32 0, %v1408
        %v1410 = vrot.slane %v1405, %v1409
        %v1428 = vunpack.c.l.b16 %v1389
        %v1429 = vunpack.c.l.b16 %v1390
        %v1430 = vunpack.c.l.b16 %v1391
        %v1431 = vunpack.c.l.b16 %v1392
        %v1432 = vunpack.c.l.b16 %v1393
        %v1433 = vunpack.c.l.b16 %v1394
        %v1434 = vunpack.c.l.b16 %v1395
        %v1435 = vunpack.c.l.b16 %v1396
        %v1436 = vunpack.c.l.b16 %v1397
        %v1437 = vunpack.c.l.b16 %v1398
        %v1438 = vunpack.c.l.b16 %v1399
        %v1439 = vunpack.c.l.b16 %v1400
        %v1440 = vunpack.c.l.b16 %v1401
        %v1441 = vunpack.c.l.b16 %v1402
        %v1442 = vunpack.c.l.b16 %v1403
        %v1443 = vunpack.c.l.b16 %v1404
        %v1444 = vpack.c.b16 %v1429, %v1428
        %v1445 = vpack.c.b16 %v1431, %v1430
        %v1446 = vpack.c.b16 %v1433, %v1432
        %v1447 = vpack.c.b16 %v1435, %v1434
        %v1448 = vpack.c.b16 %v1437, %v1436
        %v1449 = vpack.c.b16 %v1439, %v1438
        %v1450 = vpack.c.b16 %v1441, %v1440
        %v1451 = vpack.c.b16 %v1443, %v1442
        %1460 = vmatprep.subr.bf16.mxu0 0
        %1461 = vmatpush1.bf16.msra.mxu0 %v1451
        %1462 = vmatprep.subr.bf16.mxu0 0
        %1463 = vmatpush1.bf16.msra.mxu0 %v1450
        %1464 = vmatprep.subr.bf16.mxu0 0
        %1465 = vmatpush1.bf16.msra.mxu0 %v1449
        %1466 = vmatprep.subr.bf16.mxu0 0
        %1467 = vmatpush1.bf16.msra.mxu0 %v1448
        %1468 = vmatprep.subr.bf16.mxu0 0
        %1469 = vmatpush1.bf16.msra.mxu0 %v1447
        %1470 = vmatprep.subr.bf16.mxu0 0
        %1471 = vmatpush1.bf16.msra.mxu0 %v1446
        %1472 = vmatprep.subr.bf16.mxu0 0
        %1473 = vmatpush1.bf16.msra.mxu0 %v1445
        %1474 = vmatprep.subr.bf16.mxu0 0
        %1475 = vmatpush1.bf16.msra.mxu0 %v1444
        %1476 = vmatprep.subr.bf16.mxu0 0
        %1477 = vmatpush2.bf16.msra.mxu0 0
        %1478 = vmatprep.subr.bf16.mxu0 0
        %1479 = vmatpush2.bf16.msra.mxu0 0
        %1480 = vmatprep.subr.bf16.mxu0 0
        %1481 = vmatpush2.bf16.msra.mxu0 0
        %1482 = vmatprep.subr.bf16.mxu0 0
        %1483 = vmatpush2.bf16.msra.mxu0 0
        %1484 = vmatprep.subr.bf16.mxu0 0
        %1485 = vmatpush2.bf16.msra.mxu0 0
        %1486 = vmatprep.subr.bf16.mxu0 0
        %1487 = vmatpush2.bf16.msra.mxu0 0
        %1488 = vmatprep.subr.bf16.mxu0 0
        %1489 = vmatpush2.bf16.msra.mxu0 0
        %1490 = vmatprep.subr.bf16.mxu0 0
        %1491 = vmatpush2.bf16.msra.mxu0 0
        %1492 = vmatprep.mubr.bf16.mxu0 0
        %1493 = vmatmul.mubr.bf16.gmra.mxu0 %v1385
        %v1494 = vpop.f32.mrf.mxu0
        %v1495 = vadd.f32 %v1410, %v1494
        %v1496 = vpop.f32.mrf.mxu0
        %v1497 = vpop.f32.mrf.mxu0
        %v1498 = vadd.f32 %v1410, %v1497
        %v1499 = vpop.f32.mrf.mxu0
        %1500 = vmatprep.mubr.bf16.mxu0 0
        %1501 = vmatmul.mubr.bf16.gmra.mxu0 %v1386
        %v1502 = vpop.f32.mrf.mxu0
        %v1503 = vadd.f32 %v1410, %v1502
        %v1504 = vpop.f32.mrf.mxu0
        %v1505 = vpop.f32.mrf.mxu0
        %v1506 = vadd.f32 %v1410, %v1505
        %v1507 = vpop.f32.mrf.mxu0
        %1508 = vmatprep.mubr.bf16.mxu0 0
        %1509 = vmatmul.mubr.bf16.gmra.mxu0 %v1387
        %v1510 = vpop.f32.mrf.mxu0
        %v1511 = vadd.f32 %v1410, %v1510
        %v1512 = vpop.f32.mrf.mxu0
        %v1513 = vpop.f32.mrf.mxu0
        %v1514 = vadd.f32 %v1410, %v1513
        %v1515 = vpop.f32.mrf.mxu0
        %1516 = vmatprep.mubr.bf16.mxu0 0
        %1517 = vmatmul.mubr.bf16.gmra.mxu0 %v1388
        %v1518 = vpop.f32.mrf.mxu0
        %v1519 = vadd.f32 %v1410, %v1518
        %v1520 = vpop.f32.mrf.mxu0
        %v1521 = vpop.f32.mrf.mxu0
        %v1522 = vadd.f32 %v1410, %v1521
        %v1523 = vpop.f32.mrf.mxu0
        %1524 = vdwg.mxu0
        %v1525 = vmax.f32 %v1495, 0.0
        %v1526 = vmax.f32 %v1498, 0.0
        %v1527 = vmax.f32 %v1503, 0.0
        %v1528 = vmax.f32 %v1506, 0.0
        %v1529 = vmax.f32 %v1511, 0.0
        %v1530 = vmax.f32 %v1514, 0.0
        %v1531 = vmax.f32 %v1519, 0.0
        %v1532 = vmax.f32 %v1522, 0.0
        %v1533 = vpack.c.bf16 %v1526, %v1525
        %v1534 = vpack.c.bf16 %v1528, %v1527
        %v1535 = vpack.c.bf16 %v1530, %v1529
        %v1536 = vpack.c.bf16 %v1532, %v1531
        %v1537 = vld [vmem:[#allocation14] sm:$0xf]
        %v1538 = vld [vmem:[#allocation14 + $0x4] sm:$0xf]
        %v1539 = vld [vmem:[#allocation14 + $0x8] sm:$0xf]
        %v1540 = vld [vmem:[#allocation14 + $0xc] sm:$0xf]
        %v1541 = vld [vmem:[#allocation14 + $0x10] sm:$0xf]
        %v1542 = vld [vmem:[#allocation14 + $0x14] sm:$0xf]
        %v1543 = vld [vmem:[#allocation14 + $0x18] sm:$0xf]
        %v1544 = vld [vmem:[#allocation14 + $0x1c] sm:$0xf]
        %v1545 = vld [vmem:[#allocation14 + $0x20] sm:$0xf]
        %v1546 = vld [vmem:[#allocation14 + $0x24] sm:$0xf]
        %v1547 = vld [vmem:[#allocation14 + $0x28] sm:$0xf]
        %v1548 = vld [vmem:[#allocation14 + $0x2c] sm:$0xf]
        %v1549 = vld [vmem:[#allocation14 + $0x30] sm:$0xf]
        %v1550 = vld [vmem:[#allocation14 + $0x34] sm:$0xf]
        %v1551 = vld [vmem:[#allocation14 + $0x38] sm:$0xf]
        %v1552 = vld [vmem:[#allocation14 + $0x3c] sm:$0xf]
        %v1553 = vld [vmem:[%s13] sm:$0x1]
        %v1555 = vlaneseq
        %v1556 = vshrl.u32 %v1555, 7
        %v1557 = vsub.s32 0, %v1556
        %v1558 = vrot.slane %v1553, %v1557
        %v1576 = vunpack.c.l.b16 %v1537
        %v1577 = vunpack.c.l.b16 %v1538
        %v1578 = vunpack.c.l.b16 %v1539
        %v1579 = vunpack.c.l.b16 %v1540
        %v1580 = vunpack.c.l.b16 %v1541
        %v1581 = vunpack.c.l.b16 %v1542
        %v1582 = vunpack.c.l.b16 %v1543
        %v1583 = vunpack.c.l.b16 %v1544
        %v1584 = vunpack.c.l.b16 %v1545
        %v1585 = vunpack.c.l.b16 %v1546
        %v1586 = vunpack.c.l.b16 %v1547
        %v1587 = vunpack.c.l.b16 %v1548
        %v1588 = vunpack.c.l.b16 %v1549
        %v1589 = vunpack.c.l.b16 %v1550
        %v1590 = vunpack.c.l.b16 %v1551
        %v1591 = vunpack.c.l.b16 %v1552
        %v1592 = vpack.c.b16 %v1577, %v1576
        %v1593 = vpack.c.b16 %v1579, %v1578
        %v1594 = vpack.c.b16 %v1581, %v1580
        %v1595 = vpack.c.b16 %v1583, %v1582
        %v1596 = vpack.c.b16 %v1585, %v1584
        %v1597 = vpack.c.b16 %v1587, %v1586
        %v1598 = vpack.c.b16 %v1589, %v1588
        %v1599 = vpack.c.b16 %v1591, %v1590
        %1608 = vmatprep.subr.bf16.mxu0 0
        %1609 = vmatpush1.bf16.msra.mxu0 %v1599
        %1610 = vmatprep.subr.bf16.mxu0 0
        %1611 = vmatpush1.bf16.msra.mxu0 %v1598
        %1612 = vmatprep.subr.bf16.mxu0 0
        %1613 = vmatpush1.bf16.msra.mxu0 %v1597
        %1614 = vmatprep.subr.bf16.mxu0 0
        %1615 = vmatpush1.bf16.msra.mxu0 %v1596
        %1616 = vmatprep.subr.bf16.mxu0 0
        %1617 = vmatpush1.bf16.msra.mxu0 %v1595
        %1618 = vmatprep.subr.bf16.mxu0 0
        %1619 = vmatpush1.bf16.msra.mxu0 %v1594
        %1620 = vmatprep.subr.bf16.mxu0 0
        %1621 = vmatpush1.bf16.msra.mxu0 %v1593
        %1622 = vmatprep.subr.bf16.mxu0 0
        %1623 = vmatpush1.bf16.msra.mxu0 %v1592
        %1624 = vmatprep.subr.bf16.mxu0 0
        %1625 = vmatpush2.bf16.msra.mxu0 0
        %1626 = vmatprep.subr.bf16.mxu0 0
        %1627 = vmatpush2.bf16.msra.mxu0 0
        %1628 = vmatprep.subr.bf16.mxu0 0
        %1629 = vmatpush2.bf16.msra.mxu0 0
        %1630 = vmatprep.subr.bf16.mxu0 0
        %1631 = vmatpush2.bf16.msra.mxu0 0
        %1632 = vmatprep.subr.bf16.mxu0 0
        %1633 = vmatpush2.bf16.msra.mxu0 0
        %1634 = vmatprep.subr.bf16.mxu0 0
        %1635 = vmatpush2.bf16.msra.mxu0 0
        %1636 = vmatprep.subr.bf16.mxu0 0
        %1637 = vmatpush2.bf16.msra.mxu0 0
        %1638 = vmatprep.subr.bf16.mxu0 0
        %1639 = vmatpush2.bf16.msra.mxu0 0
        %1640 = vmatprep.mubr.bf16.mxu0 0
        %1641 = vmatmul.mubr.bf16.gmra.mxu0 %v1533
        %v1642 = vpop.f32.mrf.mxu0
        %v1643 = vadd.f32 %v1558, %v1642
        %v1644 = vpop.f32.mrf.mxu0
        %v1645 = vpop.f32.mrf.mxu0
        %v1646 = vadd.f32 %v1558, %v1645
        %v1647 = vpop.f32.mrf.mxu0
        %1648 = vmatprep.mubr.bf16.mxu0 0
        %1649 = vmatmul.mubr.bf16.gmra.mxu0 %v1534
        %v1650 = vpop.f32.mrf.mxu0
        %v1651 = vadd.f32 %v1558, %v1650
        %v1652 = vpop.f32.mrf.mxu0
        %v1653 = vpop.f32.mrf.mxu0
        %v1654 = vadd.f32 %v1558, %v1653
        %v1655 = vpop.f32.mrf.mxu0
        %1656 = vmatprep.mubr.bf16.mxu0 0
        %1657 = vmatmul.mubr.bf16.gmra.mxu0 %v1535
        %v1658 = vpop.f32.mrf.mxu0
        %v1659 = vadd.f32 %v1558, %v1658
        %v1660 = vpop.f32.mrf.mxu0
        %v1661 = vpop.f32.mrf.mxu0
        %v1662 = vadd.f32 %v1558, %v1661
        %v1663 = vpop.f32.mrf.mxu0
        %1664 = vmatprep.mubr.bf16.mxu0 0
        %1665 = vmatmul.mubr.bf16.gmra.mxu0 %v1536
        %v1666 = vpop.f32.mrf.mxu0
        %v1667 = vadd.f32 %v1558, %v1666
        %v1668 = vpop.f32.mrf.mxu0
        %v1669 = vpop.f32.mrf.mxu0
        %v1670 = vadd.f32 %v1558, %v1669
        %v1671 = vpop.f32.mrf.mxu0
        %1672 = vdwg.mxu0
        %v1673 = vtanh.pop %v1643
        %v1674 = vtanh.pop %v1646
        %v1675 = vtanh.pop %v1651
        %v1676 = vtanh.pop %v1654
        %v1677 = vtanh.pop %v1659
        %v1678 = vtanh.pop %v1662
        %v1679 = vtanh.pop %v1667
        %v1680 = vtanh.pop %v1670
        %v1681 = vlaneseq
        %v1682 = vand.u32 %v1681, 127
        %vm1683 = vcmp.ge.s32.totalorder %v1682, 32
        %vm1684 = vcmp.lt.s32.totalorder %v1682, 40
        %vm1685 = vmand %vm1683, %vm1684
        %v1686 = vsel %vm1685, %v1098, %v1051
        %v1687 = vsel %vm1685, %v1100, %v1054
        %v1688 = vsel %vm1685, %v1102, %v1059
        %v1689 = vsel %vm1685, %v1104, %v1062
        %v1690 = vsel %vm1685, %v1106, %v1067
        %v1691 = vsel %vm1685, %v1108, %v1070
        %v1692 = vsel %vm1685, %v1110, %v1075
        %v1693 = vsel %vm1685, %v1112, %v1078
        %v1694 = vadd.f32 %v1673, %v1686
        %v1695 = vadd.f32 %v1674, %v1687
        %v1696 = vadd.f32 %v1675, %v1688
        %v1697 = vadd.f32 %v1676, %v1689
        %v1698 = vadd.f32 %v1677, %v1690
        %v1699 = vadd.f32 %v1678, %v1691
        %v1700 = vadd.f32 %v1679, %v1692
        %v1701 = vadd.f32 %v1680, %v1693
        %1702 = vst [vmem:[%s612] sm:$0xff] %v1694
        %1703 = vst [vmem:[%s612 + $0x8] sm:$0xff] %v1695
        %1704 = vst [vmem:[%s612 + $0x10] sm:$0xff] %v1696
        %1705 = vst [vmem:[%s612 + $0x18] sm:$0xff] %v1697
        %1706 = vst [vmem:[%s612 + $0x20] sm:$0xff] %v1698
        %1707 = vst [vmem:[%s612 + $0x28] sm:$0xff] %v1699
        %1708 = vst [vmem:[%s612 + $0x30] sm:$0xff] %v1700
        %1709 = vst [vmem:[%s612 + $0x38] sm:$0xff] %v1701
        %s1710 = sand.u32 %s349, 1
        %s1711 = scalar_lea.sflag [#allocation4], %s1710
        %s1712 = sand.u32 %s349, 1
        %s1713 = smul.addr %s1712, 64
        %s1714 = scalar_lea.vmem [#allocation16], %s1713
        // Predicated region
        $region109: #{tpu_custom_call.1} parent=75 // pred_check
          %p1715 = pneg %p359
        $region110: #{tpu_custom_call.1} parent=75 // pred_check_branch
          %1717 = sbr.rel (%p1715) target = $region112
        $region111: #{tpu_custom_call.1} parent=75 // pred_region
          %s1718 = smul.u32 8, %s37
          %s1720 = ssub.s32 1024, 1024
          %1721 = vsyncadd %s1711, %s1720
          %s1722 = smul.addr %s1718, 128
          %s1723 = scalar_lea.hbm %s14, %s1722
          %s1724 = sshll.u32 %s1714, 4
          %s1725 = int_to_ptr.vmem [resolvable:$true] %s1724
          %1730 = dma.vmem_to_hbm [thread:$0]  %s1725, 1024, %s1723, %s1711, 128, 128, 8
        $region112: #{tpu_custom_call.1} parent=75 // pred_fallthru
          _
      $region76: #{tpu_custom_call.1} parent=5 // pred_fallthru
        _
      %p1731 = scmp.le.s32.totalorder 2, %s32
      // Predicated region
      $region113: #{tpu_custom_call.1} parent=5 // pred_check
        %p1732 = pneg %p1731
      $region114: #{tpu_custom_call.1} parent=5 // pred_check_branch
        %1734 = sbr.rel (%p1732) target = $region116
      $region115: #{tpu_custom_call.1} parent=5 // pred_region
        %s1735 = ssub.s32 %s32, 2
        // Predicated region
        $region117: #{tpu_custom_call.1} parent=115 // pred_check
          %p1736 = pneg %p365
        $region118: #{tpu_custom_call.1} parent=115 // pred_check_branch
          %1738 = sbr.rel (%p1736) target = $region120
        $region119: #{tpu_custom_call.1} parent=115 // pred_region
          %s1739 = sand.u32 %s350, 1
          %s1740 = scalar_lea.sflag [#allocation4], %s1739
          %s1741 = sand.u32 %s350, 1
          %s1742 = smul.addr %s1741, 64
          %s1743 = scalar_lea.vmem [#allocation16], %s1742
          %1744 = dma.done %s1740, 1024
        $region120: #{tpu_custom_call.1} parent=115 // pred_fallthru
          _
      $region116: #{tpu_custom_call.1} parent=5 // pred_fallthru
        _
    $region6: #{tpu_custom_call.1} parent=1 // loop_footer
      %s36 = sadd.s32 1, %s32
    $region7: #{tpu_custom_call.1} parent=1 // loop_footer_branch
      %31 = sbr.rel target = $region3
    $region8: #{tpu_custom_call.1} parent=1 // loop_exit
      _
    %1745 = vsyncpa [#allocation3], 1
    %s1746 = scalar_lea.sflag [#allocation3], 1
    %1747 = vsyncpa %s1746, 1
    %1748 = vsyncpa [#allocation6], 1
    %s1749 = scalar_lea.sflag [#allocation6], 1
    %1750 = vsyncpa %s1749, 1
    %1751 = vsyncpa [#allocation9], 1
    %1752 = vsyncpa [#allocation12], 1
    %1753 = vsyncpa [#allocation15], 1
    %1754 = vsyncpa [#allocation4], 1
    %s1755 = scalar_lea.sflag [#allocation4], 1
    %1756 = vsyncpa %s1755, 1

</llo_original>
